<compile_context>
chip_gen: v7x
topology: tpu7x:2x2x1
jax: 0.10.0
libtpu: 0.0.40
codegen_flags: <defaults>
</compile_context>

<pallas_src>
import math
from functools import partial

import jax
import jax.numpy as jnp
import numpy as np
from jax.experimental import pallas as pl
from jax.experimental.pallas import tpu as pltpu


def _layer_norm(x, g, b, eps=1e-5):
    mu = jnp.mean(x, axis=-1, keepdims=True)
    xc = x - mu
    var = jnp.mean(xc * xc, axis=-1, keepdims=True)
    return xc * jax.lax.rsqrt(var + eps) * g + b


def _encoder_kernel(num_layers, num_heads,
                    x_ref,
                    wqkv_ref, bqkv_ref, wo_ref, bo_ref,
                    ln1g_ref, ln1b_ref, ln2g_ref, ln2b_ref,
                    w1_ref, b1_ref, w2_ref, b2_ref,
                    fcw_ref, fcb_ref,
                    logits_ref):
    B, S, E = x_ref.shape
    H = num_heads
    Dh = E // H
    scale = 1.0 / math.sqrt(Dh)
    bf16 = jnp.bfloat16
    f32 = jnp.float32

    x = x_ref[...].reshape(B * S, E)                      # f32 residual stream

    def to_heads(t):                                      # (B*S, E) -> (B*H, S, Dh)
        return (t.reshape(B, S, H, Dh)
                 .transpose(0, 2, 1, 3)
                 .reshape(B * H, S, Dh))

    for l in range(num_layers):                           # static: weights fully resident
        xb = x.astype(bf16)

        # ---- multi-head self attention (post-norm TransformerEncoderLayer) ----
        # One fused QKV matmul per layer (96 output lanes in a single MXU pass).
        qkv = jnp.dot(xb, wqkv_ref[l], preferred_element_type=f32) + bqkv_ref[l]
        q = to_heads(qkv[:, :E]).astype(bf16)
        k = to_heads(qkv[:, E:2 * E]).astype(bf16)
        v = to_heads(qkv[:, 2 * E:]).astype(bf16)

        # Score/context einsums batched over all (batch, head) pairs at once.
        s = jnp.einsum("bqd,bkd->bqk", q, k, preferred_element_type=f32) * scale
        s = s - jnp.max(s, axis=-1, keepdims=True)
        p = jnp.exp(s)
        p = p * pl.reciprocal(jnp.sum(p, axis=-1, keepdims=True), approx=True)
        ctx = jnp.einsum("bqk,bkd->bqd", p.astype(bf16), v,
                         preferred_element_type=f32)      # (B*H, S, Dh)
        ctx = (ctx.reshape(B, H, S, Dh)
                  .transpose(0, 2, 1, 3)
                  .reshape(B * S, E))

        # Single out-projection over the concatenated heads.
        attn = jnp.dot(ctx.astype(bf16), wo_ref[l],
                       preferred_element_type=f32) + bo_ref[l]
        x1 = _layer_norm(x + attn, ln1g_ref[l], ln1b_ref[l])

        # ---- feed forward (relu) ----
        h1 = jnp.dot(x1.astype(bf16), w1_ref[l], preferred_element_type=f32) + b1_ref[l]
        h1 = jnp.maximum(h1, 0.0)
        h2 = jnp.dot(h1.astype(bf16), w2_ref[l], preferred_element_type=f32) + b2_ref[l]
        x = _layer_norm(x1 + h2, ln2g_ref[l], ln2b_ref[l])

    # ---- mean-pool over sequence + classifier head (lane-padded output) ----
    pooled = jnp.mean(x.reshape(B, S, E), axis=1)          # (B, E)
    logits_ref[...] = (jnp.dot(pooled.astype(bf16), fcw_ref[...],
                               preferred_element_type=f32) + fcb_ref[...])


def prepare_params(params, num_heads):
    """Host-side weight prep (run ONCE): fuse QKV, pre-transpose, cast to bf16, pad fc."""
    E = params["embedding"].shape[1]
    L = params["w_in"].shape[0]
    C = params["fc_w"].shape[0]
    C_pad = ((C + 127) // 128) * 128
    bf16 = jnp.bfloat16

    # Fused QKV: w_in is (L, 3E, E) with rows [q; k; v]; pre-transpose -> (L, E, 3E).
    wqkv = jnp.transpose(params["w_in"], (0, 2, 1)).astype(bf16)      # (L, E, 3E)
    bqkv = params["b_in"].reshape(L, 1, 3 * E)                         # (L, 1, 3E) f32

    # out_proj: attn = ctx @ w_out.T  -> store w_out[l].T as (L, E, E).
    wo = jnp.transpose(params["w_out"], (0, 2, 1)).astype(bf16)

    w1t = jnp.transpose(params["w1"], (0, 2, 1)).astype(bf16)         # (L, E, F)
    w2t = jnp.transpose(params["w2"], (0, 2, 1)).astype(bf16)         # (L, F, E)

    fcw = jnp.zeros((E, C_pad), jnp.float32).at[:, :C].set(params["fc_w"].T).astype(bf16)
    fcb = jnp.zeros((1, C_pad), jnp.float32).at[:, :C].set(params["fc_b"])

    return dict(
        embedding=params["embedding"], pos=params["pos"],
        wqkv=wqkv, bqkv=bqkv, wo=wo,
        bo=params["b_out"], ln1g=params["ln1_g"], ln1b=params["ln1_b"],
        ln2g=params["ln2_g"], ln2b=params["ln2_b"],
        w1=w1t, b1=params["b1"], w2=w2t, b2=params["b2"],
        fcw=fcw, fcb=fcb,
        num_layers=L, num_heads=num_heads, num_classes=C, c_pad=C_pad,
        dim_ffd=params["w1"].shape[1], embed=E)


def make_encoder_forward(params, num_heads):
    """Build a jitted forward; weight prep happens once here, not per call."""
    prep = prepare_params(params, num_heads)
    L = prep["num_layers"]
    H = prep["num_heads"]
    E = prep["embed"]
    F = prep["dim_ffd"]
    C = prep["num_classes"]
    C_pad = prep["c_pad"]

    m3 = lambda i: (0, 0, 0)
    m2 = lambda i: (0, 0)
    kernel = partial(_encoder_kernel, L, H)

    @jax.jit
    def forward(tokens):
        # Glue in plain JAX: embedding gather + positional add (data-dependent gather).
        emb = prep["embedding"][tokens]                    # (B, S, E)
        B, S = tokens.shape
        x0 = (emb + prep["pos"][None, :S, :]).astype(jnp.float32)

        logits_pad = pl.pallas_call(
            kernel,
            out_shape=jax.ShapeDtypeStruct((B, C_pad), jnp.float32),
            grid=(1,),
            in_specs=[
                pl.BlockSpec((B, S, E), m3),               # x0
                pl.BlockSpec((L, E, 3 * E), m3),           # fused QKV weight (pre-T, bf16)
                pl.BlockSpec((L, 1, 3 * E), m3),           # fused QKV bias
                pl.BlockSpec((L, E, E), m3),               # out-proj weight (pre-T, bf16)
                pl.BlockSpec((L, 1, E), m3),               # out-proj bias
                pl.BlockSpec((L, 1, E), m3),               # ln1 gamma
                pl.BlockSpec((L, 1, E), m3),               # ln1 beta
                pl.BlockSpec((L, 1, E), m3),               # ln2 gamma
                pl.BlockSpec((L, 1, E), m3),               # ln2 beta
                pl.BlockSpec((L, E, F), m3),               # linear1 weight (pre-T, bf16)
                pl.BlockSpec((L, 1, F), m3),               # linear1 bias
                pl.BlockSpec((L, F, E), m3),               # linear2 weight (pre-T, bf16)
                pl.BlockSpec((L, 1, E), m3),               # linear2 bias
                pl.BlockSpec((E, C_pad), m2),              # fc weight (pre-T, lane-padded)
                pl.BlockSpec((1, C_pad), m2),              # fc bias (lane-padded)
            ],
            out_specs=pl.BlockSpec((B, C_pad), m2),
            compiler_params=pltpu.CompilerParams(
                dimension_semantics=("arbitrary",),
                vmem_limit_bytes=8 * 1024 * 1024),
        )(x0, prep["wqkv"], prep["bqkv"], prep["wo"], prep["bo"],
          prep["ln1g"], prep["ln1b"], prep["ln2g"], prep["ln2b"],
          prep["w1"], prep["b1"], prep["w2"], prep["b2"],
          prep["fcw"], prep["fcb"])

        return logits_pad[:, :C]

    return forward


def reference_forward(tokens, params, num_heads):
    """Pure-JAX f32 reference mirroring the PyTorch forward (eval mode)."""
    emb = params["embedding"][tokens]
    B, S, E = emb.shape
    x = emb + params["pos"][None, :S, :]
    L = params["w_in"].shape[0]
    H = num_heads
    Dh = E // H
    scale = 1.0 / math.sqrt(Dh)
    for l in range(L):
        xf = x.reshape(B * S, E)
        qkv = xf @ params["w_in"][l].T + params["b_in"][l]
        q = qkv[:, :E].reshape(B, S, H, Dh)
        k = qkv[:, E:2 * E].reshape(B, S, H, Dh)
        v = qkv[:, 2 * E:].reshape(B, S, H, Dh)
        s = jnp.einsum("bshd,bthd->bhst", q, k) * scale
        p = jax.nn.softmax(s, axis=-1)
        ctx = jnp.einsum("bhst,bthd->bshd", p, v).reshape(B * S, E)
        attn = ctx @ params["w_out"][l].T + params["b_out"][l]
        x1 = _layer_norm(xf + attn, params["ln1_g"][l], params["ln1_b"][l])
        h = jax.nn.relu(x1 @ params["w1"][l].T + params["b1"][l])
        h = h @ params["w2"][l].T + params["b2"][l]
        x = _layer_norm(x1 + h, params["ln2_g"][l],
                        params["ln2_b"][l]).reshape(B, S, E)
    pooled = x.mean(axis=1)
    return pooled @ params["fc_w"].T + params["fc_b"]


def init_params(key, vocab, E, H, L, F, C, max_len=64):
    def nrm(k, shape, scale=0.1):
        return (scale * jax.random.normal(k, shape)).astype(jnp.float32)

    keys = jax.random.split(key, 5)
    params = {
        "embedding": nrm(keys[0], (vocab, E), 0.5),
        # PositionalEmbedding(max_len, E) with trunc_normal_(std=0.2) init
        "pos": nrm(keys[1], (max_len, E), 0.2),
        "fc_w": nrm(keys[2], (C, E)),
        "fc_b": nrm(keys[3], (1, C), 0.02),
    }

    w_in, b_in, w_out, b_out = [], [], [], []
    w1, b1, w2, b2 = [], [], [], []
    ln1g, ln1b, ln2g, ln2b = [], [], [], []
    kl = keys[4]
    for _ in range(L):
        kl, *sub = jax.random.split(kl, 9)
        w_in.append(nrm(sub[0], (3 * E, E)))
        b_in.append(nrm(sub[1], (1, 3 * E), 0.02))
        w_out.append(nrm(sub[2], (E, E)))
        b_out.append(nrm(sub[3], (1, E), 0.02))
        w1.append(nrm(sub[4], (F, E)))
        b1.append(nrm(sub[5], (1, F), 0.02))
        w2.append(nrm(sub[6], (E, F)))
        b2.append(nrm(sub[7], (1, E), 0.02))
        ln1g.append(jnp.ones((1, E), jnp.float32))
        ln1b.append(jnp.zeros((1, E), jnp.float32))
        ln2g.append(jnp.ones((1, E), jnp.float32))
        ln2b.append(jnp.zeros((1, E), jnp.float32))

    params.update(
        w_in=jnp.stack(w_in), b_in=jnp.stack(b_in),
        w_out=jnp.stack(w_out), b_out=jnp.stack(b_out),
        ln1_g=jnp.stack(ln1g), ln1_b=jnp.stack(ln1b),
        ln2_g=jnp.stack(ln2g), ln2_b=jnp.stack(ln2b),
        w1=jnp.stack(w1), b1=jnp.stack(b1),
        w2=jnp.stack(w2), b2=jnp.stack(b2),
    )
    return params


if __name__ == "__main__":
    VOCAB, EMBED, HEADS, LAYERS, DIM_FFD, CLASSES = 50, 32, 4, 2, 64, 5
    BATCH, SEQ = 2, 8

    key = jax.random.PRNGKey(0)
    kparam, ktok = jax.random.split(key)
    params = init_params(kparam, VOCAB, EMBED, HEADS, LAYERS, DIM_FFD, CLASSES)
    tokens = jax.random.randint(ktok, (BATCH, SEQ), 0, VOCAB, dtype=jnp.int32)

    forward = make_encoder_forward(params, HEADS)   # weight prep happens once here
    logits = jax.block_until_ready(forward(tokens))

    ref = jax.block_until_ready(reference_forward(tokens, params, HEADS))
    # bf16 matmul inputs (f32 accumulation) + approx softmax reciprocal => intentionally
    # looser tolerance than pure f32 (inference-mode trade-off).
    np.testing.assert_allclose(np.asarray(logits), np.asarray(ref),
                               rtol=3e-2, atol=3e-2)

    print("KERNEL_OK")
</pallas_src>

<mosaic_0001>
module attributes {stable_mosaic.version = 11 : i64} {
  func.func @_encoder_kernel(%arg0: i32, %arg1: memref<2x8x32xf32, #tpu.memory_space<vmem>>, %arg2: memref<2x32x96xbf16, #tpu.memory_space<vmem>>, %arg3: memref<2x1x96xf32, #tpu.memory_space<vmem>>, %arg4: memref<2x32x32xbf16, #tpu.memory_space<vmem>>, %arg5: memref<2x1x32xf32, #tpu.memory_space<vmem>>, %arg6: memref<2x1x32xf32, #tpu.memory_space<vmem>>, %arg7: memref<2x1x32xf32, #tpu.memory_space<vmem>>, %arg8: memref<2x1x32xf32, #tpu.memory_space<vmem>>, %arg9: memref<2x1x32xf32, #tpu.memory_space<vmem>>, %arg10: memref<2x32x64xbf16, #tpu.memory_space<vmem>>, %arg11: memref<2x1x64xf32, #tpu.memory_space<vmem>>, %arg12: memref<2x64x32xbf16, #tpu.memory_space<vmem>>, %arg13: memref<2x1x32xf32, #tpu.memory_space<vmem>>, %arg14: memref<32x128xbf16, #tpu.memory_space<vmem>>, %arg15: memref<1x128xf32, #tpu.memory_space<vmem>>, %arg16: memref<2x128xf32, #tpu.memory_space<vmem>>) attributes {dimension_semantics = [#tpu.dimension_semantics<arbitrary>], iteration_bounds = array<i64: 1>, scalar_prefetch = 0 : i64, scratch_operands = 0 : i64, tpu.core_type = #tpu.core_type<tc>, window_params = [{pipeline_mode = #tpu.pipeline_mode<synchronous>, transform_indices = @transform_0, window_bounds = array<i64: 2, 8, 32>}, {pipeline_mode = #tpu.pipeline_mode<synchronous>, transform_indices = @transform_1, window_bounds = array<i64: 2, 32, 96>}, {pipeline_mode = #tpu.pipeline_mode<synchronous>, transform_indices = @transform_2, window_bounds = array<i64: 2, 1, 96>}, {pipeline_mode = #tpu.pipeline_mode<synchronous>, transform_indices = @transform_3, window_bounds = array<i64: 2, 32, 32>}, {pipeline_mode = #tpu.pipeline_mode<synchronous>, transform_indices = @transform_4, window_bounds = array<i64: 2, 1, 32>}, {pipeline_mode = #tpu.pipeline_mode<synchronous>, transform_indices = @transform_5, window_bounds = array<i64: 2, 1, 32>}, {pipeline_mode = #tpu.pipeline_mode<synchronous>, transform_indices = @transform_6, window_bounds = array<i64: 2, 1, 32>}, {pipeline_mode = #tpu.pipeline_mode<synchronous>, transform_indices = @transform_7, window_bounds = array<i64: 2, 1, 32>}, {pipeline_mode = #tpu.pipeline_mode<synchronous>, transform_indices = @transform_8, window_bounds = array<i64: 2, 1, 32>}, {pipeline_mode = #tpu.pipeline_mode<synchronous>, transform_indices = @transform_9, window_bounds = array<i64: 2, 32, 64>}, {pipeline_mode = #tpu.pipeline_mode<synchronous>, transform_indices = @transform_10, window_bounds = array<i64: 2, 1, 64>}, {pipeline_mode = #tpu.pipeline_mode<synchronous>, transform_indices = @transform_11, window_bounds = array<i64: 2, 64, 32>}, {pipeline_mode = #tpu.pipeline_mode<synchronous>, transform_indices = @transform_12, window_bounds = array<i64: 2, 1, 32>}, {pipeline_mode = #tpu.pipeline_mode<synchronous>, transform_indices = @transform_13, window_bounds = array<i64: 32, 128>}, {pipeline_mode = #tpu.pipeline_mode<synchronous>, transform_indices = @transform_14, window_bounds = array<i64: 1, 128>}, {pipeline_mode = #tpu.pipeline_mode<synchronous>, transform_indices = @transform_15, window_bounds = array<i64: 2, 128>}]} {
    %c0 = arith.constant 0 : index
    %c0_0 = arith.constant 0 : index
    %c0_1 = arith.constant 0 : index
    %0 = vector.load %arg1[%c0, %c0_0, %c0_1] : memref<2x8x32xf32, #tpu.memory_space<vmem>>, vector<2x8x32xf32>
    %1 = vector.shape_cast %0 : vector<2x8x32xf32> to vector<16x32xf32>
    %2 = arith.truncf %1 : vector<16x32xf32> to vector<16x32xbf16>
    %c0_2 = arith.constant 0 : index
    %c0_3 = arith.constant 0 : index
    %c0_4 = arith.constant 0 : index
    %3 = vector.load %arg2[%c0_2, %c0_3, %c0_4] : memref<2x32x96xbf16, #tpu.memory_space<vmem>>, vector<1x32x96xbf16>
    %4 = vector.shape_cast %3 : vector<1x32x96xbf16> to vector<32x96xbf16>
    %cst = arith.constant dense<0.000000e+00> : vector<16x96xf32>
    %5 = tpu.matmul %2, %4, %cst {dimension_numbers = #tpu.dot_dimension_numbers<[1], [0], [0], [1], [0, 0, 1, 1], [], []>} : vector<16x32xbf16>, vector<32x96xbf16>, vector<16x96xf32> -> vector<16x96xf32>
    %c0_5 = arith.constant 0 : index
    %c0_6 = arith.constant 0 : index
    %c0_7 = arith.constant 0 : index
    %6 = vector.load %arg3[%c0_5, %c0_6, %c0_7] : memref<2x1x96xf32, #tpu.memory_space<vmem>>, vector<1x1x96xf32>
    %7 = vector.shape_cast %6 : vector<1x1x96xf32> to vector<1x96xf32>
    %8 = vector.broadcast %7 : vector<1x96xf32> to vector<16x96xf32>
    %9 = arith.addf %5, %8 : vector<16x96xf32>
    %10 = vector.extract_strided_slice %9 {offsets = [0, 0], sizes = [16, 32], strides = [1, 1]} : vector<16x96xf32> to vector<16x32xf32>
    %11 = vector.shape_cast %10 : vector<16x32xf32> to vector<2x8x4x8xf32>
    %12 = tpu.transpose %11, [0, 2, 1, 3] : vector<2x8x4x8xf32> -> vector<2x4x8x8xf32>
    %13 = vector.shape_cast %12 : vector<2x4x8x8xf32> to vector<8x8x8xf32>
    %14 = arith.truncf %13 : vector<8x8x8xf32> to vector<8x8x8xbf16>
    %15 = vector.extract_strided_slice %9 {offsets = [0, 32], sizes = [16, 32], strides = [1, 1]} : vector<16x96xf32> to vector<16x32xf32>
    %16 = vector.shape_cast %15 : vector<16x32xf32> to vector<2x8x4x8xf32>
    %17 = tpu.transpose %16, [0, 2, 1, 3] : vector<2x8x4x8xf32> -> vector<2x4x8x8xf32>
    %18 = vector.shape_cast %17 : vector<2x4x8x8xf32> to vector<8x8x8xf32>
    %19 = arith.truncf %18 : vector<8x8x8xf32> to vector<8x8x8xbf16>
    %20 = vector.extract_strided_slice %9 {offsets = [0, 64], sizes = [16, 32], strides = [1, 1]} : vector<16x96xf32> to vector<16x32xf32>
    %21 = vector.shape_cast %20 : vector<16x32xf32> to vector<2x8x4x8xf32>
    %22 = tpu.transpose %21, [0, 2, 1, 3] : vector<2x8x4x8xf32> -> vector<2x4x8x8xf32>
    %23 = vector.shape_cast %22 : vector<2x4x8x8xf32> to vector<8x8x8xf32>
    %24 = arith.truncf %23 : vector<8x8x8xf32> to vector<8x8x8xbf16>
    "tpu.trace_start"() <{level = 10 : i32, message = "bqd,bkd->bqk"}> : () -> ()
    %cst_8 = arith.constant dense<0.000000e+00> : vector<8x8x8xf32>
    %25 = tpu.matmul %14, %19, %cst_8 {dimension_numbers = #tpu.dot_dimension_numbers<[2], [2], [1], [1], [0, 0, 0, 1, 1, 1], [0], [0]>} : vector<8x8x8xbf16>, vector<8x8x8xbf16>, vector<8x8x8xf32> -> vector<8x8x8xf32>
    "tpu.trace_stop"() : () -> ()
    %cst_9 = arith.constant 0.353553385 : f32
    %26 = vector.broadcast %cst_9 : f32 to vector<8x8x8xf32>
    %27 = arith.mulf %25, %26 : vector<8x8x8xf32>
    %cst_10 = arith.constant dense<0xFF800000> : vector<8x8xf32>
    %28 = vector.multi_reduction <maximumf>, %27, %cst_10 [2] : vector<8x8x8xf32> to vector<8x8xf32>
    %29 = vector.shape_cast %28 : vector<8x8xf32> to vector<8x8x1xf32>
    %30 = vector.broadcast %29 : vector<8x8x1xf32> to vector<8x8x8xf32>
    %31 = arith.subf %27, %30 : vector<8x8x8xf32>
    %32 = math.exp %31 : vector<8x8x8xf32>
    %cst_11 = arith.constant dense<0.000000e+00> : vector<8x8xf32>
    %33 = vector.multi_reduction <add>, %32, %cst_11 [2] : vector<8x8x8xf32> to vector<8x8xf32>
    %34 = vector.shape_cast %33 : vector<8x8xf32> to vector<8x8x1xf32>
    %35 = tpu.reciprocal %34 {approx = true} : vector<8x8x1xf32> -> vector<8x8x1xf32>
    %36 = vector.broadcast %35 : vector<8x8x1xf32> to vector<8x8x8xf32>
    %37 = arith.mulf %32, %36 : vector<8x8x8xf32>
    %38 = arith.truncf %37 : vector<8x8x8xf32> to vector<8x8x8xbf16>
    "tpu.trace_start"() <{level = 10 : i32, message = "bqk,bkd->bqd"}> : () -> ()
    %cst_12 = arith.constant dense<0.000000e+00> : vector<8x8x8xf32>
    %39 = tpu.matmul %38, %24, %cst_12 {dimension_numbers = #tpu.dot_dimension_numbers<[2], [1], [1], [2], [0, 0, 0, 1, 1, 2], [0], [0]>} : vector<8x8x8xbf16>, vector<8x8x8xbf16>, vector<8x8x8xf32> -> vector<8x8x8xf32>
    "tpu.trace_stop"() : () -> ()
    %40 = vector.shape_cast %39 : vector<8x8x8xf32> to vector<2x4x8x8xf32>
    %41 = tpu.transpose %40, [0, 2, 1, 3] : vector<2x4x8x8xf32> -> vector<2x8x4x8xf32>
    %42 = vector.shape_cast %41 : vector<2x8x4x8xf32> to vector<16x32xf32>
    %43 = arith.truncf %42 : vector<16x32xf32> to vector<16x32xbf16>
    %c0_13 = arith.constant 0 : index
    %c0_14 = arith.constant 0 : index
    %c0_15 = arith.constant 0 : index
    %44 = vector.load %arg4[%c0_13, %c0_14, %c0_15] : memref<2x32x32xbf16, #tpu.memory_space<vmem>>, vector<1x32x32xbf16>
    %45 = vector.shape_cast %44 : vector<1x32x32xbf16> to vector<32x32xbf16>
    %cst_16 = arith.constant dense<0.000000e+00> : vector<16x32xf32>
    %46 = tpu.matmul %43, %45, %cst_16 {dimension_numbers = #tpu.dot_dimension_numbers<[1], [0], [0], [1], [0, 0, 1, 1], [], []>} : vector<16x32xbf16>, vector<32x32xbf16>, vector<16x32xf32> -> vector<16x32xf32>
    %c0_17 = arith.constant 0 : index
    %c0_18 = arith.constant 0 : index
    %c0_19 = arith.constant 0 : index
    %47 = vector.load %arg5[%c0_17, %c0_18, %c0_19] : memref<2x1x32xf32, #tpu.memory_space<vmem>>, vector<1x1x32xf32>
    %48 = vector.shape_cast %47 : vector<1x1x32xf32> to vector<1x32xf32>
    %49 = vector.broadcast %48 : vector<1x32xf32> to vector<16x32xf32>
    %50 = arith.addf %46, %49 : vector<16x32xf32>
    %51 = arith.addf %1, %50 : vector<16x32xf32>
    %c0_20 = arith.constant 0 : index
    %c0_21 = arith.constant 0 : index
    %c0_22 = arith.constant 0 : index
    %52 = vector.load %arg6[%c0_20, %c0_21, %c0_22] : memref<2x1x32xf32, #tpu.memory_space<vmem>>, vector<1x1x32xf32>
    %53 = vector.shape_cast %52 : vector<1x1x32xf32> to vector<1x32xf32>
    %c0_23 = arith.constant 0 : index
    %c0_24 = arith.constant 0 : index
    %c0_25 = arith.constant 0 : index
    %54 = vector.load %arg7[%c0_23, %c0_24, %c0_25] : memref<2x1x32xf32, #tpu.memory_space<vmem>>, vector<1x1x32xf32>
    %55 = vector.shape_cast %54 : vector<1x1x32xf32> to vector<1x32xf32>
    %cst_26 = arith.constant dense<0.000000e+00> : vector<16xf32>
    %56 = vector.multi_reduction <add>, %51, %cst_26 [1] : vector<16x32xf32> to vector<16xf32>
    %57 = vector.shape_cast %56 : vector<16xf32> to vector<16x1xf32>
    %cst_27 = arith.constant 3.200000e+01 : f32
    %58 = vector.broadcast %cst_27 : f32 to vector<16x1xf32>
    %59 = arith.divf %57, %58 : vector<16x1xf32>
    %60 = vector.broadcast %59 : vector<16x1xf32> to vector<16x32xf32>
    %61 = arith.subf %51, %60 : vector<16x32xf32>
    %62 = arith.mulf %61, %61 : vector<16x32xf32>
    %cst_28 = arith.constant dense<0.000000e+00> : vector<16xf32>
    %63 = vector.multi_reduction <add>, %62, %cst_28 [1] : vector<16x32xf32> to vector<16xf32>
    %64 = vector.shape_cast %63 : vector<16xf32> to vector<16x1xf32>
    %cst_29 = arith.constant 3.200000e+01 : f32
    %65 = vector.broadcast %cst_29 : f32 to vector<16x1xf32>
    %66 = arith.divf %64, %65 : vector<16x1xf32>
    %cst_30 = arith.constant 9.99999974E-6 : f32
    %67 = vector.broadcast %cst_30 : f32 to vector<16x1xf32>
    %68 = arith.addf %66, %67 : vector<16x1xf32>
    %69 = math.rsqrt %68 : vector<16x1xf32>
    %70 = vector.broadcast %69 : vector<16x1xf32> to vector<16x32xf32>
    %71 = arith.mulf %61, %70 : vector<16x32xf32>
    %72 = vector.broadcast %53 : vector<1x32xf32> to vector<16x32xf32>
    %73 = arith.mulf %71, %72 : vector<16x32xf32>
    %74 = vector.broadcast %55 : vector<1x32xf32> to vector<16x32xf32>
    %75 = arith.addf %73, %74 : vector<16x32xf32>
    %76 = arith.truncf %75 : vector<16x32xf32> to vector<16x32xbf16>
    %c0_31 = arith.constant 0 : index
    %c0_32 = arith.constant 0 : index
    %c0_33 = arith.constant 0 : index
    %77 = vector.load %arg10[%c0_31, %c0_32, %c0_33] : memref<2x32x64xbf16, #tpu.memory_space<vmem>>, vector<1x32x64xbf16>
    %78 = vector.shape_cast %77 : vector<1x32x64xbf16> to vector<32x64xbf16>
    %cst_34 = arith.constant dense<0.000000e+00> : vector<16x64xf32>
    %79 = tpu.matmul %76, %78, %cst_34 {dimension_numbers = #tpu.dot_dimension_numbers<[1], [0], [0], [1], [0, 0, 1, 1], [], []>} : vector<16x32xbf16>, vector<32x64xbf16>, vector<16x64xf32> -> vector<16x64xf32>
    %c0_35 = arith.constant 0 : index
    %c0_36 = arith.constant 0 : index
    %c0_37 = arith.constant 0 : index
    %80 = vector.load %arg11[%c0_35, %c0_36, %c0_37] : memref<2x1x64xf32, #tpu.memory_space<vmem>>, vector<1x1x64xf32>
    %81 = vector.shape_cast %80 : vector<1x1x64xf32> to vector<1x64xf32>
    %82 = vector.broadcast %81 : vector<1x64xf32> to vector<16x64xf32>
    %83 = arith.addf %79, %82 : vector<16x64xf32>
    %cst_38 = arith.constant 0.000000e+00 : f32
    %84 = vector.broadcast %cst_38 : f32 to vector<16x64xf32>
    %85 = arith.maximumf %83, %84 : vector<16x64xf32>
    %86 = arith.truncf %85 : vector<16x64xf32> to vector<16x64xbf16>
    %c0_39 = arith.constant 0 : index
    %c0_40 = arith.constant 0 : index
    %c0_41 = arith.constant 0 : index
    %87 = vector.load %arg12[%c0_39, %c0_40, %c0_41] : memref<2x64x32xbf16, #tpu.memory_space<vmem>>, vector<1x64x32xbf16>
    %88 = vector.shape_cast %87 : vector<1x64x32xbf16> to vector<64x32xbf16>
    %cst_42 = arith.constant dense<0.000000e+00> : vector<16x32xf32>
    %89 = tpu.matmul %86, %88, %cst_42 {dimension_numbers = #tpu.dot_dimension_numbers<[1], [0], [0], [1], [0, 0, 1, 1], [], []>} : vector<16x64xbf16>, vector<64x32xbf16>, vector<16x32xf32> -> vector<16x32xf32>
    %c0_43 = arith.constant 0 : index
    %c0_44 = arith.constant 0 : index
    %c0_45 = arith.constant 0 : index
    %90 = vector.load %arg13[%c0_43, %c0_44, %c0_45] : memref<2x1x32xf32, #tpu.memory_space<vmem>>, vector<1x1x32xf32>
    %91 = vector.shape_cast %90 : vector<1x1x32xf32> to vector<1x32xf32>
    %92 = vector.broadcast %91 : vector<1x32xf32> to vector<16x32xf32>
    %93 = arith.addf %89, %92 : vector<16x32xf32>
    %94 = arith.addf %75, %93 : vector<16x32xf32>
    %c0_46 = arith.constant 0 : index
    %c0_47 = arith.constant 0 : index
    %c0_48 = arith.constant 0 : index
    %95 = vector.load %arg8[%c0_46, %c0_47, %c0_48] : memref<2x1x32xf32, #tpu.memory_space<vmem>>, vector<1x1x32xf32>
    %96 = vector.shape_cast %95 : vector<1x1x32xf32> to vector<1x32xf32>
    %c0_49 = arith.constant 0 : index
    %c0_50 = arith.constant 0 : index
    %c0_51 = arith.constant 0 : index
    %97 = vector.load %arg9[%c0_49, %c0_50, %c0_51] : memref<2x1x32xf32, #tpu.memory_space<vmem>>, vector<1x1x32xf32>
    %98 = vector.shape_cast %97 : vector<1x1x32xf32> to vector<1x32xf32>
    %cst_52 = arith.constant dense<0.000000e+00> : vector<16xf32>
    %99 = vector.multi_reduction <add>, %94, %cst_52 [1] : vector<16x32xf32> to vector<16xf32>
    %100 = vector.shape_cast %99 : vector<16xf32> to vector<16x1xf32>
    %cst_53 = arith.constant 3.200000e+01 : f32
    %101 = vector.broadcast %cst_53 : f32 to vector<16x1xf32>
    %102 = arith.divf %100, %101 : vector<16x1xf32>
    %103 = vector.broadcast %102 : vector<16x1xf32> to vector<16x32xf32>
    %104 = arith.subf %94, %103 : vector<16x32xf32>
    %105 = arith.mulf %104, %104 : vector<16x32xf32>
    %cst_54 = arith.constant dense<0.000000e+00> : vector<16xf32>
    %106 = vector.multi_reduction <add>, %105, %cst_54 [1] : vector<16x32xf32> to vector<16xf32>
    %107 = vector.shape_cast %106 : vector<16xf32> to vector<16x1xf32>
    %cst_55 = arith.constant 3.200000e+01 : f32
    %108 = vector.broadcast %cst_55 : f32 to vector<16x1xf32>
    %109 = arith.divf %107, %108 : vector<16x1xf32>
    %cst_56 = arith.constant 9.99999974E-6 : f32
    %110 = vector.broadcast %cst_56 : f32 to vector<16x1xf32>
    %111 = arith.addf %109, %110 : vector<16x1xf32>
    %112 = math.rsqrt %111 : vector<16x1xf32>
    %113 = vector.broadcast %112 : vector<16x1xf32> to vector<16x32xf32>
    %114 = arith.mulf %104, %113 : vector<16x32xf32>
    %115 = vector.broadcast %96 : vector<1x32xf32> to vector<16x32xf32>
    %116 = arith.mulf %114, %115 : vector<16x32xf32>
    %117 = vector.broadcast %98 : vector<1x32xf32> to vector<16x32xf32>
    %118 = arith.addf %116, %117 : vector<16x32xf32>
    %119 = arith.truncf %118 : vector<16x32xf32> to vector<16x32xbf16>
    %c1 = arith.constant 1 : index
    %c0_57 = arith.constant 0 : index
    %c0_58 = arith.constant 0 : index
    %120 = vector.load %arg2[%c1, %c0_57, %c0_58] : memref<2x32x96xbf16, #tpu.memory_space<vmem>>, vector<1x32x96xbf16>
    %121 = vector.shape_cast %120 : vector<1x32x96xbf16> to vector<32x96xbf16>
    %cst_59 = arith.constant dense<0.000000e+00> : vector<16x96xf32>
    %122 = tpu.matmul %119, %121, %cst_59 {dimension_numbers = #tpu.dot_dimension_numbers<[1], [0], [0], [1], [0, 0, 1, 1], [], []>} : vector<16x32xbf16>, vector<32x96xbf16>, vector<16x96xf32> -> vector<16x96xf32>
    %c1_60 = arith.constant 1 : index
    %c0_61 = arith.constant 0 : index
    %c0_62 = arith.constant 0 : index
    %123 = vector.load %arg3[%c1_60, %c0_61, %c0_62] : memref<2x1x96xf32, #tpu.memory_space<vmem>>, vector<1x1x96xf32>
    %124 = vector.shape_cast %123 : vector<1x1x96xf32> to vector<1x96xf32>
    %125 = vector.broadcast %124 : vector<1x96xf32> to vector<16x96xf32>
    %126 = arith.addf %122, %125 : vector<16x96xf32>
    %127 = vector.extract_strided_slice %126 {offsets = [0, 0], sizes = [16, 32], strides = [1, 1]} : vector<16x96xf32> to vector<16x32xf32>
    %128 = vector.shape_cast %127 : vector<16x32xf32> to vector<2x8x4x8xf32>
    %129 = tpu.transpose %128, [0, 2, 1, 3] : vector<2x8x4x8xf32> -> vector<2x4x8x8xf32>
    %130 = vector.shape_cast %129 : vector<2x4x8x8xf32> to vector<8x8x8xf32>
    %131 = arith.truncf %130 : vector<8x8x8xf32> to vector<8x8x8xbf16>
    %132 = vector.extract_strided_slice %126 {offsets = [0, 32], sizes = [16, 32], strides = [1, 1]} : vector<16x96xf32> to vector<16x32xf32>
    %133 = vector.shape_cast %132 : vector<16x32xf32> to vector<2x8x4x8xf32>
    %134 = tpu.transpose %133, [0, 2, 1, 3] : vector<2x8x4x8xf32> -> vector<2x4x8x8xf32>
    %135 = vector.shape_cast %134 : vector<2x4x8x8xf32> to vector<8x8x8xf32>
    %136 = arith.truncf %135 : vector<8x8x8xf32> to vector<8x8x8xbf16>
    %137 = vector.extract_strided_slice %126 {offsets = [0, 64], sizes = [16, 32], strides = [1, 1]} : vector<16x96xf32> to vector<16x32xf32>
    %138 = vector.shape_cast %137 : vector<16x32xf32> to vector<2x8x4x8xf32>
    %139 = tpu.transpose %138, [0, 2, 1, 3] : vector<2x8x4x8xf32> -> vector<2x4x8x8xf32>
    %140 = vector.shape_cast %139 : vector<2x4x8x8xf32> to vector<8x8x8xf32>
    %141 = arith.truncf %140 : vector<8x8x8xf32> to vector<8x8x8xbf16>
    "tpu.trace_start"() <{level = 10 : i32, message = "bqd,bkd->bqk"}> : () -> ()
    %cst_63 = arith.constant dense<0.000000e+00> : vector<8x8x8xf32>
    %142 = tpu.matmul %131, %136, %cst_63 {dimension_numbers = #tpu.dot_dimension_numbers<[2], [2], [1], [1], [0, 0, 0, 1, 1, 1], [0], [0]>} : vector<8x8x8xbf16>, vector<8x8x8xbf16>, vector<8x8x8xf32> -> vector<8x8x8xf32>
    "tpu.trace_stop"() : () -> ()
    %cst_64 = arith.constant 0.353553385 : f32
    %143 = vector.broadcast %cst_64 : f32 to vector<8x8x8xf32>
    %144 = arith.mulf %142, %143 : vector<8x8x8xf32>
    %cst_65 = arith.constant dense<0xFF800000> : vector<8x8xf32>
    %145 = vector.multi_reduction <maximumf>, %144, %cst_65 [2] : vector<8x8x8xf32> to vector<8x8xf32>
    %146 = vector.shape_cast %145 : vector<8x8xf32> to vector<8x8x1xf32>
    %147 = vector.broadcast %146 : vector<8x8x1xf32> to vector<8x8x8xf32>
    %148 = arith.subf %144, %147 : vector<8x8x8xf32>
    %149 = math.exp %148 : vector<8x8x8xf32>
    %cst_66 = arith.constant dense<0.000000e+00> : vector<8x8xf32>
    %150 = vector.multi_reduction <add>, %149, %cst_66 [2] : vector<8x8x8xf32> to vector<8x8xf32>
    %151 = vector.shape_cast %150 : vector<8x8xf32> to vector<8x8x1xf32>
    %152 = tpu.reciprocal %151 {approx = true} : vector<8x8x1xf32> -> vector<8x8x1xf32>
    %153 = vector.broadcast %152 : vector<8x8x1xf32> to vector<8x8x8xf32>
    %154 = arith.mulf %149, %153 : vector<8x8x8xf32>
    %155 = arith.truncf %154 : vector<8x8x8xf32> to vector<8x8x8xbf16>
    "tpu.trace_start"() <{level = 10 : i32, message = "bqk,bkd->bqd"}> : () -> ()
    %cst_67 = arith.constant dense<0.000000e+00> : vector<8x8x8xf32>
    %156 = tpu.matmul %155, %141, %cst_67 {dimension_numbers = #tpu.dot_dimension_numbers<[2], [1], [1], [2], [0, 0, 0, 1, 1, 2], [0], [0]>} : vector<8x8x8xbf16>, vector<8x8x8xbf16>, vector<8x8x8xf32> -> vector<8x8x8xf32>
    "tpu.trace_stop"() : () -> ()
    %157 = vector.shape_cast %156 : vector<8x8x8xf32> to vector<2x4x8x8xf32>
    %158 = tpu.transpose %157, [0, 2, 1, 3] : vector<2x4x8x8xf32> -> vector<2x8x4x8xf32>
    %159 = vector.shape_cast %158 : vector<2x8x4x8xf32> to vector<16x32xf32>
    %160 = arith.truncf %159 : vector<16x32xf32> to vector<16x32xbf16>
    %c1_68 = arith.constant 1 : index
    %c0_69 = arith.constant 0 : index
    %c0_70 = arith.constant 0 : index
    %161 = vector.load %arg4[%c1_68, %c0_69, %c0_70] : memref<2x32x32xbf16, #tpu.memory_space<vmem>>, vector<1x32x32xbf16>
    %162 = vector.shape_cast %161 : vector<1x32x32xbf16> to vector<32x32xbf16>
    %cst_71 = arith.constant dense<0.000000e+00> : vector<16x32xf32>
    %163 = tpu.matmul %160, %162, %cst_71 {dimension_numbers = #tpu.dot_dimension_numbers<[1], [0], [0], [1], [0, 0, 1, 1], [], []>} : vector<16x32xbf16>, vector<32x32xbf16>, vector<16x32xf32> -> vector<16x32xf32>
    %c1_72 = arith.constant 1 : index
    %c0_73 = arith.constant 0 : index
    %c0_74 = arith.constant 0 : index
    %164 = vector.load %arg5[%c1_72, %c0_73, %c0_74] : memref<2x1x32xf32, #tpu.memory_space<vmem>>, vector<1x1x32xf32>
    %165 = vector.shape_cast %164 : vector<1x1x32xf32> to vector<1x32xf32>
    %166 = vector.broadcast %165 : vector<1x32xf32> to vector<16x32xf32>
    %167 = arith.addf %163, %166 : vector<16x32xf32>
    %168 = arith.addf %118, %167 : vector<16x32xf32>
    %c1_75 = arith.constant 1 : index
    %c0_76 = arith.constant 0 : index
    %c0_77 = arith.constant 0 : index
    %169 = vector.load %arg6[%c1_75, %c0_76, %c0_77] : memref<2x1x32xf32, #tpu.memory_space<vmem>>, vector<1x1x32xf32>
    %170 = vector.shape_cast %169 : vector<1x1x32xf32> to vector<1x32xf32>
    %c1_78 = arith.constant 1 : index
    %c0_79 = arith.constant 0 : index
    %c0_80 = arith.constant 0 : index
    %171 = vector.load %arg7[%c1_78, %c0_79, %c0_80] : memref<2x1x32xf32, #tpu.memory_space<vmem>>, vector<1x1x32xf32>
    %172 = vector.shape_cast %171 : vector<1x1x32xf32> to vector<1x32xf32>
    %cst_81 = arith.constant dense<0.000000e+00> : vector<16xf32>
    %173 = vector.multi_reduction <add>, %168, %cst_81 [1] : vector<16x32xf32> to vector<16xf32>
    %174 = vector.shape_cast %173 : vector<16xf32> to vector<16x1xf32>
    %cst_82 = arith.constant 3.200000e+01 : f32
    %175 = vector.broadcast %cst_82 : f32 to vector<16x1xf32>
    %176 = arith.divf %174, %175 : vector<16x1xf32>
    %177 = vector.broadcast %176 : vector<16x1xf32> to vector<16x32xf32>
    %178 = arith.subf %168, %177 : vector<16x32xf32>
    %179 = arith.mulf %178, %178 : vector<16x32xf32>
    %cst_83 = arith.constant dense<0.000000e+00> : vector<16xf32>
    %180 = vector.multi_reduction <add>, %179, %cst_83 [1] : vector<16x32xf32> to vector<16xf32>
    %181 = vector.shape_cast %180 : vector<16xf32> to vector<16x1xf32>
    %cst_84 = arith.constant 3.200000e+01 : f32
    %182 = vector.broadcast %cst_84 : f32 to vector<16x1xf32>
    %183 = arith.divf %181, %182 : vector<16x1xf32>
    %cst_85 = arith.constant 9.99999974E-6 : f32
    %184 = vector.broadcast %cst_85 : f32 to vector<16x1xf32>
    %185 = arith.addf %183, %184 : vector<16x1xf32>
    %186 = math.rsqrt %185 : vector<16x1xf32>
    %187 = vector.broadcast %186 : vector<16x1xf32> to vector<16x32xf32>
    %188 = arith.mulf %178, %187 : vector<16x32xf32>
    %189 = vector.broadcast %170 : vector<1x32xf32> to vector<16x32xf32>
    %190 = arith.mulf %188, %189 : vector<16x32xf32>
    %191 = vector.broadcast %172 : vector<1x32xf32> to vector<16x32xf32>
    %192 = arith.addf %190, %191 : vector<16x32xf32>
    %193 = arith.truncf %192 : vector<16x32xf32> to vector<16x32xbf16>
    %c1_86 = arith.constant 1 : index
    %c0_87 = arith.constant 0 : index
    %c0_88 = arith.constant 0 : index
    %194 = vector.load %arg10[%c1_86, %c0_87, %c0_88] : memref<2x32x64xbf16, #tpu.memory_space<vmem>>, vector<1x32x64xbf16>
    %195 = vector.shape_cast %194 : vector<1x32x64xbf16> to vector<32x64xbf16>
    %cst_89 = arith.constant dense<0.000000e+00> : vector<16x64xf32>
    %196 = tpu.matmul %193, %195, %cst_89 {dimension_numbers = #tpu.dot_dimension_numbers<[1], [0], [0], [1], [0, 0, 1, 1], [], []>} : vector<16x32xbf16>, vector<32x64xbf16>, vector<16x64xf32> -> vector<16x64xf32>
    %c1_90 = arith.constant 1 : index
    %c0_91 = arith.constant 0 : index
    %c0_92 = arith.constant 0 : index
    %197 = vector.load %arg11[%c1_90, %c0_91, %c0_92] : memref<2x1x64xf32, #tpu.memory_space<vmem>>, vector<1x1x64xf32>
    %198 = vector.shape_cast %197 : vector<1x1x64xf32> to vector<1x64xf32>
    %199 = vector.broadcast %198 : vector<1x64xf32> to vector<16x64xf32>
    %200 = arith.addf %196, %199 : vector<16x64xf32>
    %cst_93 = arith.constant 0.000000e+00 : f32
    %201 = vector.broadcast %cst_93 : f32 to vector<16x64xf32>
    %202 = arith.maximumf %200, %201 : vector<16x64xf32>
    %203 = arith.truncf %202 : vector<16x64xf32> to vector<16x64xbf16>
    %c1_94 = arith.constant 1 : index
    %c0_95 = arith.constant 0 : index
    %c0_96 = arith.constant 0 : index
    %204 = vector.load %arg12[%c1_94, %c0_95, %c0_96] : memref<2x64x32xbf16, #tpu.memory_space<vmem>>, vector<1x64x32xbf16>
    %205 = vector.shape_cast %204 : vector<1x64x32xbf16> to vector<64x32xbf16>
    %cst_97 = arith.constant dense<0.000000e+00> : vector<16x32xf32>
    %206 = tpu.matmul %203, %205, %cst_97 {dimension_numbers = #tpu.dot_dimension_numbers<[1], [0], [0], [1], [0, 0, 1, 1], [], []>} : vector<16x64xbf16>, vector<64x32xbf16>, vector<16x32xf32> -> vector<16x32xf32>
    %c1_98 = arith.constant 1 : index
    %c0_99 = arith.constant 0 : index
    %c0_100 = arith.constant 0 : index
    %207 = vector.load %arg13[%c1_98, %c0_99, %c0_100] : memref<2x1x32xf32, #tpu.memory_space<vmem>>, vector<1x1x32xf32>
    %208 = vector.shape_cast %207 : vector<1x1x32xf32> to vector<1x32xf32>
    %209 = vector.broadcast %208 : vector<1x32xf32> to vector<16x32xf32>
    %210 = arith.addf %206, %209 : vector<16x32xf32>
    %211 = arith.addf %192, %210 : vector<16x32xf32>
    %c1_101 = arith.constant 1 : index
    %c0_102 = arith.constant 0 : index
    %c0_103 = arith.constant 0 : index
    %212 = vector.load %arg8[%c1_101, %c0_102, %c0_103] : memref<2x1x32xf32, #tpu.memory_space<vmem>>, vector<1x1x32xf32>
    %213 = vector.shape_cast %212 : vector<1x1x32xf32> to vector<1x32xf32>
    %c1_104 = arith.constant 1 : index
    %c0_105 = arith.constant 0 : index
    %c0_106 = arith.constant 0 : index
    %214 = vector.load %arg9[%c1_104, %c0_105, %c0_106] : memref<2x1x32xf32, #tpu.memory_space<vmem>>, vector<1x1x32xf32>
    %215 = vector.shape_cast %214 : vector<1x1x32xf32> to vector<1x32xf32>
    %cst_107 = arith.constant dense<0.000000e+00> : vector<16xf32>
    %216 = vector.multi_reduction <add>, %211, %cst_107 [1] : vector<16x32xf32> to vector<16xf32>
    %217 = vector.shape_cast %216 : vector<16xf32> to vector<16x1xf32>
    %cst_108 = arith.constant 3.200000e+01 : f32
    %218 = vector.broadcast %cst_108 : f32 to vector<16x1xf32>
    %219 = arith.divf %217, %218 : vector<16x1xf32>
    %220 = vector.broadcast %219 : vector<16x1xf32> to vector<16x32xf32>
    %221 = arith.subf %211, %220 : vector<16x32xf32>
    %222 = arith.mulf %221, %221 : vector<16x32xf32>
    %cst_109 = arith.constant dense<0.000000e+00> : vector<16xf32>
    %223 = vector.multi_reduction <add>, %222, %cst_109 [1] : vector<16x32xf32> to vector<16xf32>
    %224 = vector.shape_cast %223 : vector<16xf32> to vector<16x1xf32>
    %cst_110 = arith.constant 3.200000e+01 : f32
    %225 = vector.broadcast %cst_110 : f32 to vector<16x1xf32>
    %226 = arith.divf %224, %225 : vector<16x1xf32>
    %cst_111 = arith.constant 9.99999974E-6 : f32
    %227 = vector.broadcast %cst_111 : f32 to vector<16x1xf32>
    %228 = arith.addf %226, %227 : vector<16x1xf32>
    %229 = math.rsqrt %228 : vector<16x1xf32>
    %230 = vector.broadcast %229 : vector<16x1xf32> to vector<16x32xf32>
    %231 = arith.mulf %221, %230 : vector<16x32xf32>
    %232 = vector.broadcast %213 : vector<1x32xf32> to vector<16x32xf32>
    %233 = arith.mulf %231, %232 : vector<16x32xf32>
    %234 = vector.broadcast %215 : vector<1x32xf32> to vector<16x32xf32>
    %235 = arith.addf %233, %234 : vector<16x32xf32>
    %236 = vector.shape_cast %235 : vector<16x32xf32> to vector<2x8x32xf32>
    %cst_112 = arith.constant dense<0.000000e+00> : vector<2x32xf32>
    %237 = vector.multi_reduction <add>, %236, %cst_112 [1] : vector<2x8x32xf32> to vector<2x32xf32>
    %cst_113 = arith.constant 8.000000e+00 : f32
    %238 = vector.broadcast %cst_113 : f32 to vector<2x32xf32>
    %239 = arith.divf %237, %238 : vector<2x32xf32>
    %240 = arith.truncf %239 : vector<2x32xf32> to vector<2x32xbf16>
    %c0_114 = arith.constant 0 : index
    %c0_115 = arith.constant 0 : index
    %241 = vector.load %arg14[%c0_114, %c0_115] : memref<32x128xbf16, #tpu.memory_space<vmem>>, vector<32x128xbf16>
    %cst_116 = arith.constant dense<0.000000e+00> : vector<2x128xf32>
    %242 = tpu.matmul %240, %241, %cst_116 {dimension_numbers = #tpu.dot_dimension_numbers<[1], [0], [0], [1], [0, 0, 1, 1], [], []>} : vector<2x32xbf16>, vector<32x128xbf16>, vector<2x128xf32> -> vector<2x128xf32>
    %c0_117 = arith.constant 0 : index
    %c0_118 = arith.constant 0 : index
    %243 = vector.load %arg15[%c0_117, %c0_118] : memref<1x128xf32, #tpu.memory_space<vmem>>, vector<1x128xf32>
    %244 = vector.broadcast %243 : vector<1x128xf32> to vector<2x128xf32>
    %245 = arith.addf %242, %244 : vector<2x128xf32>
    %c0_119 = arith.constant 0 : index
    %c0_120 = arith.constant 0 : index
    %246 = vector.load %arg16[%c0_119, %c0_120] : memref<2x128xf32, #tpu.memory_space<vmem>>, vector<2x128xf32>
    tpu.vector_store %arg16[%c0_119, %c0_120], %245 {strides = array<i32>} : memref<2x128xf32, #tpu.memory_space<vmem>>, vector<2x128xf32>,
    return
  }
  func.func @transform_0(%arg0: i32) -> (i32, i32, i32) {
    %c0_i32 = arith.constant 0 : i32
    %c0_i32_0 = arith.constant 0 : i32
    %c0_i32_1 = arith.constant 0 : i32
    %c0_i32_2 = arith.constant 0 : i32
    return %c0_i32, %c0_i32_0, %c0_i32_1 : i32, i32, i32
  }
  func.func @transform_1(%arg0: i32) -> (i32, i32, i32) {
    %c0_i32 = arith.constant 0 : i32
    %c0_i32_0 = arith.constant 0 : i32
    %c0_i32_1 = arith.constant 0 : i32
    %c0_i32_2 = arith.constant 0 : i32
    return %c0_i32, %c0_i32_0, %c0_i32_1 : i32, i32, i32
  }
  func.func @transform_2(%arg0: i32) -> (i32, i32, i32) {
    %c0_i32 = arith.constant 0 : i32
    %c0_i32_0 = arith.constant 0 : i32
    %c0_i32_1 = arith.constant 0 : i32
    %c0_i32_2 = arith.constant 0 : i32
    return %c0_i32, %c0_i32_0, %c0_i32_1 : i32, i32, i32
  }
  func.func @transform_3(%arg0: i32) -> (i32, i32, i32) {
    %c0_i32 = arith.constant 0 : i32
    %c0_i32_0 = arith.constant 0 : i32
    %c0_i32_1 = arith.constant 0 : i32
    %c0_i32_2 = arith.constant 0 : i32
    return %c0_i32, %c0_i32_0, %c0_i32_1 : i32, i32, i32
  }
  func.func @transform_4(%arg0: i32) -> (i32, i32, i32) {
    %c0_i32 = arith.constant 0 : i32
    %c0_i32_0 = arith.constant 0 : i32
    %c0_i32_1 = arith.constant 0 : i32
    %c0_i32_2 = arith.constant 0 : i32
    return %c0_i32, %c0_i32_0, %c0_i32_1 : i32, i32, i32
  }
  func.func @transform_5(%arg0: i32) -> (i32, i32, i32) {
    %c0_i32 = arith.constant 0 : i32
    %c0_i32_0 = arith.constant 0 : i32
    %c0_i32_1 = arith.constant 0 : i32
    %c0_i32_2 = arith.constant 0 : i32
    return %c0_i32, %c0_i32_0, %c0_i32_1 : i32, i32, i32
  }
  func.func @transform_6(%arg0: i32) -> (i32, i32, i32) {
    %c0_i32 = arith.constant 0 : i32
    %c0_i32_0 = arith.constant 0 : i32
    %c0_i32_1 = arith.constant 0 : i32
    %c0_i32_2 = arith.constant 0 : i32
    return %c0_i32, %c0_i32_0, %c0_i32_1 : i32, i32, i32
  }
  func.func @transform_7(%arg0: i32) -> (i32, i32, i32) {
    %c0_i32 = arith.constant 0 : i32
    %c0_i32_0 = arith.constant 0 : i32
    %c0_i32_1 = arith.constant 0 : i32
    %c0_i32_2 = arith.constant 0 : i32
    return %c0_i32, %c0_i32_0, %c0_i32_1 : i32, i32, i32
  }
  func.func @transform_8(%arg0: i32) -> (i32, i32, i32) {
    %c0_i32 = arith.constant 0 : i32
    %c0_i32_0 = arith.constant 0 : i32
    %c0_i32_1 = arith.constant 0 : i32
    %c0_i32_2 = arith.constant 0 : i32
    return %c0_i32, %c0_i32_0, %c0_i32_1 : i32, i32, i32
  }
  func.func @transform_9(%arg0: i32) -> (i32, i32, i32) {
    %c0_i32 = arith.constant 0 : i32
    %c0_i32_0 = arith.constant 0 : i32
    %c0_i32_1 = arith.constant 0 : i32
    %c0_i32_2 = arith.constant 0 : i32
    return %c0_i32, %c0_i32_0, %c0_i32_1 : i32, i32, i32
  }
  func.func @transform_10(%arg0: i32) -> (i32, i32, i32) {
    %c0_i32 = arith.constant 0 : i32
    %c0_i32_0 = arith.constant 0 : i32
    %c0_i32_1 = arith.constant 0 : i32
    %c0_i32_2 = arith.constant 0 : i32
    return %c0_i32, %c0_i32_0, %c0_i32_1 : i32, i32, i32
  }
  func.func @transform_11(%arg0: i32) -> (i32, i32, i32) {
    %c0_i32 = arith.constant 0 : i32
    %c0_i32_0 = arith.constant 0 : i32
    %c0_i32_1 = arith.constant 0 : i32
    %c0_i32_2 = arith.constant 0 : i32
    return %c0_i32, %c0_i32_0, %c0_i32_1 : i32, i32, i32
  }
  func.func @transform_12(%arg0: i32) -> (i32, i32, i32) {
    %c0_i32 = arith.constant 0 : i32
    %c0_i32_0 = arith.constant 0 : i32
    %c0_i32_1 = arith.constant 0 : i32
    %c0_i32_2 = arith.constant 0 : i32
    return %c0_i32, %c0_i32_0, %c0_i32_1 : i32, i32, i32
  }
  func.func @transform_13(%arg0: i32) -> (i32, i32) {
    %c0_i32 = arith.constant 0 : i32
    %c0_i32_0 = arith.constant 0 : i32
    %c0_i32_1 = arith.constant 0 : i32
    return %c0_i32, %c0_i32_0 : i32, i32
  }
  func.func @transform_14(%arg0: i32) -> (i32, i32) {
    %c0_i32 = arith.constant 0 : i32
    %c0_i32_0 = arith.constant 0 : i32
    %c0_i32_1 = arith.constant 0 : i32
    return %c0_i32, %c0_i32_0 : i32, i32
  }
  func.func @transform_15(%arg0: i32) -> (i32, i32) {
    %c0_i32 = arith.constant 0 : i32
    %c0_i32_0 = arith.constant 0 : i32
    %c0_i32_1 = arith.constant 0 : i32
    return %c0_i32, %c0_i32_0 : i32, i32
  }
}

</mosaic_0001>

<llo_original>
// kernel: forward.1
$region0: #{forward.1}
  #allocation0 [shape = 'u32[]', space=smem, size = 0x4, offset = 0x4, fixed_abs, tag = 'smem constant byte address 0x4 - core index']
  #allocation1 [shape = 'u32[144,128]{1,0:T(1,128)}', space=vmem, size = 0x12000, scoped, tag = 'internal scratch']
  %s0 = inlined_call_operand.vmem [shape: f32[2,8,32], index: 0, kind: input, shape index: {}]
  %s1 = inlined_call_operand.vmem [shape: bf16[2,32,96], index: 1, kind: input, shape index: {}]
  %s2 = inlined_call_operand.vmem [shape: f32[2,1,96], index: 2, kind: input, shape index: {}]
  %s3 = inlined_call_operand.vmem [shape: bf16[2,32,32], index: 3, kind: input, shape index: {}]
  %s4 = inlined_call_operand.vmem [shape: f32[2,1,32], index: 4, kind: input, shape index: {}]
  %s5 = inlined_call_operand.vmem [shape: f32[2,1,32], index: 5, kind: input, shape index: {}, may-alias: {5,7}]
  %s6 = inlined_call_operand.vmem [shape: f32[2,1,32], index: 6, kind: input, shape index: {}, may-alias: {6,8}]
  %s7 = inlined_call_operand.vmem [shape: f32[2,1,32], index: 7, kind: input, shape index: {}, may-alias: {5,7}]
  %s8 = inlined_call_operand.vmem [shape: f32[2,1,32], index: 8, kind: input, shape index: {}, may-alias: {6,8}]
  %s9 = inlined_call_operand.vmem [shape: bf16[2,32,64], index: 9, kind: input, shape index: {}]
  %s10 = inlined_call_operand.vmem [shape: f32[2,1,64], index: 10, kind: input, shape index: {}]
  %s11 = inlined_call_operand.vmem [shape: bf16[2,64,32], index: 11, kind: input, shape index: {}]
  %s12 = inlined_call_operand.vmem [shape: f32[2,1,32], index: 12, kind: input, shape index: {}]
  %s13 = inlined_call_operand.vmem [shape: bf16[32,128], index: 13, kind: input, shape index: {}]
  %s14 = inlined_call_operand.vmem [shape: f32[1,128], index: 14, kind: input, shape index: {}]
  %s15 = inlined_call_operand.hbm [shape: f32[2,128], index: 15, kind: output, shape index: {}]
  %s16 = sld [smem:[#allocation0]]
  $region70: #{forward.1} parent=0
    _
  %s18 = ssub.s32 1, %s16
  %s19 = scalar_select 0, %s18, %s16
  $region1: #{forward.1} parent=0
    #allocation2 [shape = 'u8[1024]{0}', space=vmem, size = 0x400, scoped, tag = 'output window, operand 0, single buffered']
    #allocation3 [shape = 's32[1]{0}', space=sflag, size = 0x4, scoped, tag = 'scoped memory for forward.1']
    %20 = vsyncpa [#allocation3], 0
    // Predicated region
    $region2: #{forward.1} parent=1 // pred_check
      _
    $region3: #{forward.1} parent=1 // pred_check_branch
      %22 = sbr.rel (0) target = $region5
    $region4: #{forward.1} parent=1 // pred_region
      _
    $region5: #{forward.1} parent=1 // pred_fallthru
      _
    // Predicated region
    $region6: #{forward.1} parent=1 // pred_check
      _
    $region7: #{forward.1} parent=1 // pred_check_branch
      %24 = sbr.rel (0) target = $region9
    $region8: #{forward.1} parent=1 // pred_region
      _
    $region9: #{forward.1} parent=1 // pred_fallthru
      _
    // Predicated region
    $region10: #{forward.1} parent=1 // pred_check
      _
    $region11: #{forward.1} parent=1 // pred_check_branch
      %26 = sbr.rel (0) target = $region13
    $region12: #{forward.1} parent=1 // pred_region
      _
    $region13: #{forward.1} parent=1 // pred_fallthru
      _
    // Predicated region
    $region14: #{forward.1} parent=1 // pred_check
      _
    $region15: #{forward.1} parent=1 // pred_check_branch
      %28 = sbr.rel (0) target = $region17
    $region16: #{forward.1} parent=1 // pred_region
      _
    $region17: #{forward.1} parent=1 // pred_fallthru
      _
    // Predicated region
    $region18: #{forward.1} parent=1 // pred_check
      _
    $region19: #{forward.1} parent=1 // pred_check_branch
      %30 = sbr.rel (0) target = $region21
    $region20: #{forward.1} parent=1 // pred_region
      _
    $region21: #{forward.1} parent=1 // pred_fallthru
      _
    // Predicated region
    $region22: #{forward.1} parent=1 // pred_check
      _
    $region23: #{forward.1} parent=1 // pred_check_branch
      %32 = sbr.rel (0) target = $region25
    $region24: #{forward.1} parent=1 // pred_region
      _
    $region25: #{forward.1} parent=1 // pred_fallthru
      _
    // Predicated region
    $region26: #{forward.1} parent=1 // pred_check
      _
    $region27: #{forward.1} parent=1 // pred_check_branch
      %34 = sbr.rel (0) target = $region29
    $region28: #{forward.1} parent=1 // pred_region
      _
    $region29: #{forward.1} parent=1 // pred_fallthru
      _
    // Predicated region
    $region30: #{forward.1} parent=1 // pred_check
      _
    $region31: #{forward.1} parent=1 // pred_check_branch
      %36 = sbr.rel (0) target = $region33
    $region32: #{forward.1} parent=1 // pred_region
      _
    $region33: #{forward.1} parent=1 // pred_fallthru
      _
    // Predicated region
    $region34: #{forward.1} parent=1 // pred_check
      _
    $region35: #{forward.1} parent=1 // pred_check_branch
      %38 = sbr.rel (0) target = $region37
    $region36: #{forward.1} parent=1 // pred_region
      _
    $region37: #{forward.1} parent=1 // pred_fallthru
      _
    // Predicated region
    $region38: #{forward.1} parent=1 // pred_check
      _
    $region39: #{forward.1} parent=1 // pred_check_branch
      %40 = sbr.rel (0) target = $region41
    $region40: #{forward.1} parent=1 // pred_region
      _
    $region41: #{forward.1} parent=1 // pred_fallthru
      _
    // Predicated region
    $region42: #{forward.1} parent=1 // pred_check
      _
    $region43: #{forward.1} parent=1 // pred_check_branch
      %42 = sbr.rel (0) target = $region45
    $region44: #{forward.1} parent=1 // pred_region
      _
    $region45: #{forward.1} parent=1 // pred_fallthru
      _
    // Predicated region
    $region46: #{forward.1} parent=1 // pred_check
      _
    $region47: #{forward.1} parent=1 // pred_check_branch
      %44 = sbr.rel (0) target = $region49
    $region48: #{forward.1} parent=1 // pred_region
      _
    $region49: #{forward.1} parent=1 // pred_fallthru
      _
    // Predicated region
    $region50: #{forward.1} parent=1 // pred_check
      _
    $region51: #{forward.1} parent=1 // pred_check_branch
      %46 = sbr.rel (0) target = $region53
    $region52: #{forward.1} parent=1 // pred_region
      _
    $region53: #{forward.1} parent=1 // pred_fallthru
      _
    // Predicated region
    $region54: #{forward.1} parent=1 // pred_check
      _
    $region55: #{forward.1} parent=1 // pred_check_branch
      %48 = sbr.rel (0) target = $region57
    $region56: #{forward.1} parent=1 // pred_region
      _
    $region57: #{forward.1} parent=1 // pred_fallthru
      _
    // Predicated region
    $region58: #{forward.1} parent=1 // pred_check
      _
    $region59: #{forward.1} parent=1 // pred_check_branch
      %50 = sbr.rel (0) target = $region61
    $region60: #{forward.1} parent=1 // pred_region
      _
    $region61: #{forward.1} parent=1 // pred_fallthru
      _
    %v52 = vld [vmem:[%s0] sm:$0xff]
    %v53 = vld [vmem:[%s0 + $0x8] sm:$0xff]
    %v54 = vpack.c.bf16 %v53, %v52
    %v55 = vld [vmem:[%s1] sm:$0xf]
    %v56 = vld [vmem:[%s1 + $0x4] sm:$0xf]
    %v57 = vld [vmem:[%s1 + $0x8] sm:$0xf]
    %v58 = vld [vmem:[%s1 + $0xc] sm:$0xf]
    %v59 = vld [vmem:[%s2] sm:$0x1]
    %v61 = vlaneseq
    %v62 = vshrl.u32 %v61, 7
    %v63 = vsub.s32 0, %v62
    %v64 = vrot.slane %v59, %v63
    %v70 = vunpack.c.l.b16 %v55
    %v71 = vunpack.c.l.b16 %v56
    %v72 = vunpack.c.l.b16 %v57
    %v73 = vunpack.c.l.b16 %v58
    %v74 = vpack.c.b16 %v71, %v70
    %v75 = vpack.c.b16 %v73, %v72
    %vm78 = vcmask 261120
    %v80 = vsel %vm78, %v54, 0
    %82 = vmatprep.subr.bf16.mxu0 0
    %83 = vmatpush1.bf16.msra.mxu0 %v74
    %84 = vmatprep.subr.bf16.mxu0 0
    %85 = vmatpush1.bf16.msra.mxu0 %v75
    %86 = vmatprep.subr.bf16.mxu0 0
    %87 = vmatpush1.bf16.msra.mxu0 0
    %88 = vmatprep.subr.bf16.mxu0 0
    %89 = vmatpush1.bf16.msra.mxu0 0
    %90 = vmatprep.subr.bf16.mxu0 0
    %91 = vmatpush1.bf16.msra.mxu0 0
    %92 = vmatprep.subr.bf16.mxu0 0
    %93 = vmatpush1.bf16.msra.mxu0 0
    %94 = vmatprep.subr.bf16.mxu0 0
    %95 = vmatpush1.bf16.msra.mxu0 0
    %96 = vmatprep.subr.bf16.mxu0 0
    %97 = vmatpush1.bf16.msra.mxu0 0
    %98 = vmatprep.subr.bf16.mxu0 0
    %99 = vmatpush1.bf16.msra.mxu0 0
    %100 = vmatprep.subr.bf16.mxu0 0
    %101 = vmatpush1.bf16.msra.mxu0 0
    %102 = vmatprep.subr.bf16.mxu0 0
    %103 = vmatpush1.bf16.msra.mxu0 0
    %104 = vmatprep.subr.bf16.mxu0 0
    %105 = vmatpush1.bf16.msra.mxu0 0
    %106 = vmatprep.subr.bf16.mxu0 0
    %107 = vmatpush1.bf16.msra.mxu0 0
    %108 = vmatprep.subr.bf16.mxu0 0
    %109 = vmatpush1.bf16.msra.mxu0 0
    %110 = vmatprep.subr.bf16.mxu0 0
    %111 = vmatpush1.bf16.msra.mxu0 0
    %112 = vmatprep.subr.bf16.mxu0 0
    %113 = vmatpush1.bf16.msra.mxu0 0
    %114 = vmatprep.mubr.bf16.mxu0 0
    %115 = vmatmul.mubr.bf16.gmra.mrb[0].mxu0 %v80
    %v116 = vpop.f32.mrb[0].mxu0
    %v117 = vadd.f32 %v64, %v116
    %v118 = vpop.f32.mrb[0].mxu0
    %v119 = vpop.f32.mrb[0].mxu0
    %v120 = vadd.f32 %v64, %v119
    %v121 = vpop.f32.mrb[0].mxu0
    %122 = vdwg.mxu0
    %125 = vrot.lane.b32.xlu0 %v117, 120
    %v126 = vpop.permute.xlu0 %125
    %127 = vrot.lane.b32.xlu0 %v120, 120
    %v128 = vpop.permute.xlu0 %127
    %131 = vrot.lane.b32.xlu0 %v117, 112
    %v132 = vpop.permute.xlu0 %131
    %133 = vrot.lane.b32.xlu0 %v120, 112
    %v134 = vpop.permute.xlu0 %133
    %137 = vrot.lane.b32.xlu0 %v117, 104
    %v138 = vpop.permute.xlu0 %137
    %139 = vrot.lane.b32.xlu0 %v120, 104
    %v140 = vpop.permute.xlu0 %139
    %v143 = vcombine.low %v117, %v132
    %v144 = vcombine.high %v117, %v132
    %v146 = vunpack.c.l.s4 1983009808
    %v147 = vunpack.c.0.s8 %v146
    %v148 = vlaneseq
    %v149 = vshrl.u32 %v148, 7
    %v150 = vsub.s32 %v147, %v149
    %v151 = vrot.slane %v143, %v150
    %v153 = vunpack.c.l.s4 1983009808
    %v154 = vunpack.c.0.s8 %v153
    %v155 = vlaneseq
    %v156 = vshrl.u32 %v155, 7
    %v157 = vsub.s32 %v154, %v156
    %v158 = vrot.slane %v144, %v157
    %v159 = vcombine.low %v126, %v138
    %v160 = vcombine.high %v126, %v138
    %v162 = vunpack.c.l.s4 1983009808
    %v163 = vunpack.c.0.s8 %v162
    %v164 = vlaneseq
    %v165 = vshrl.u32 %v164, 7
    %v166 = vsub.s32 %v163, %v165
    %v167 = vrot.slane %v159, %v166
    %v169 = vunpack.c.l.s4 1983009808
    %v170 = vunpack.c.0.s8 %v169
    %v171 = vlaneseq
    %v172 = vshrl.u32 %v171, 7
    %v173 = vsub.s32 %v170, %v172
    %v174 = vrot.slane %v160, %v173
    %v175 = vcombine.low %v151, %v167
    %v176 = vcombine.high %v151, %v167
    %v178 = vunpack.c.l.s4 1934713408
    %v179 = vunpack.c.0.s8 %v178
    %v180 = vlaneseq
    %v181 = vshrl.u32 %v180, 7
    %v182 = vsub.s32 %v179, %v181
    %v183 = vrot.slane %v175, %v182
    %v185 = vunpack.c.l.s4 1934713408
    %v186 = vunpack.c.0.s8 %v185
    %v187 = vlaneseq
    %v188 = vshrl.u32 %v187, 7
    %v189 = vsub.s32 %v186, %v188
    %v190 = vrot.slane %v176, %v189
    %v191 = vcombine.low %v158, %v174
    %v192 = vcombine.high %v158, %v174
    %v194 = vunpack.c.l.s4 1934713408
    %v195 = vunpack.c.0.s8 %v194
    %v196 = vlaneseq
    %v197 = vshrl.u32 %v196, 7
    %v198 = vsub.s32 %v195, %v197
    %v199 = vrot.slane %v191, %v198
    %v201 = vunpack.c.l.s4 1934713408
    %v202 = vunpack.c.0.s8 %v201
    %v203 = vlaneseq
    %v204 = vshrl.u32 %v203, 7
    %v205 = vsub.s32 %v202, %v204
    %v206 = vrot.slane %v192, %v205
    %v207 = vcombine.high %v183, 0.0
    %v208 = vcombine.high %v190, 0.0
    %v209 = vcombine.high %v199, 0.0
    %v210 = vcombine.high %v206, 0.0
    %v211 = vcombine.low %v120, %v134
    %v212 = vcombine.high %v120, %v134
    %v214 = vunpack.c.l.s4 1983009808
    %v215 = vunpack.c.0.s8 %v214
    %v216 = vlaneseq
    %v217 = vshrl.u32 %v216, 7
    %v218 = vsub.s32 %v215, %v217
    %v219 = vrot.slane %v211, %v218
    %v221 = vunpack.c.l.s4 1983009808
    %v222 = vunpack.c.0.s8 %v221
    %v223 = vlaneseq
    %v224 = vshrl.u32 %v223, 7
    %v225 = vsub.s32 %v222, %v224
    %v226 = vrot.slane %v212, %v225
    %v227 = vcombine.low %v128, %v140
    %v228 = vcombine.high %v128, %v140
    %v230 = vunpack.c.l.s4 1983009808
    %v231 = vunpack.c.0.s8 %v230
    %v232 = vlaneseq
    %v233 = vshrl.u32 %v232, 7
    %v234 = vsub.s32 %v231, %v233
    %v235 = vrot.slane %v227, %v234
    %v237 = vunpack.c.l.s4 1983009808
    %v238 = vunpack.c.0.s8 %v237
    %v239 = vlaneseq
    %v240 = vshrl.u32 %v239, 7
    %v241 = vsub.s32 %v238, %v240
    %v242 = vrot.slane %v228, %v241
    %v243 = vcombine.low %v219, %v235
    %v244 = vcombine.high %v219, %v235
    %v246 = vunpack.c.l.s4 1934713408
    %v247 = vunpack.c.0.s8 %v246
    %v248 = vlaneseq
    %v249 = vshrl.u32 %v248, 7
    %v250 = vsub.s32 %v247, %v249
    %v251 = vrot.slane %v243, %v250
    %v253 = vunpack.c.l.s4 1934713408
    %v254 = vunpack.c.0.s8 %v253
    %v255 = vlaneseq
    %v256 = vshrl.u32 %v255, 7
    %v257 = vsub.s32 %v254, %v256
    %v258 = vrot.slane %v244, %v257
    %v259 = vcombine.low %v226, %v242
    %v260 = vcombine.high %v226, %v242
    %v262 = vunpack.c.l.s4 1934713408
    %v263 = vunpack.c.0.s8 %v262
    %v264 = vlaneseq
    %v265 = vshrl.u32 %v264, 7
    %v266 = vsub.s32 %v263, %v265
    %v267 = vrot.slane %v259, %v266
    %v269 = vunpack.c.l.s4 1934713408
    %v270 = vunpack.c.0.s8 %v269
    %v271 = vlaneseq
    %v272 = vshrl.u32 %v271, 7
    %v273 = vsub.s32 %v270, %v272
    %v274 = vrot.slane %v260, %v273
    %v275 = vcombine.high %v251, 0.0
    %v276 = vcombine.high %v258, 0.0
    %v277 = vcombine.high %v267, 0.0
    %v278 = vcombine.high %v274, 0.0
    %v279 = vcombine.low %v183, %v190
    %v281 = vunpack.c.l.s4 1983009808
    %v282 = vunpack.c.0.s8 %v281
    %v283 = vlaneseq
    %v284 = vshrl.u32 %v283, 7
    %v285 = vsub.s32 %v282, %v284
    %v286 = vrot.slane %v279, %v285
    %v287 = vcombine.low %v207, %v208
    %v289 = vunpack.c.l.s4 1983009808
    %v290 = vunpack.c.0.s8 %v289
    %v291 = vlaneseq
    %v292 = vshrl.u32 %v291, 7
    %v293 = vsub.s32 %v290, %v292
    %v294 = vrot.slane %v287, %v293
    %v295 = vcombine.low %v199, %v206
    %v297 = vunpack.c.l.s4 1983009808
    %v298 = vunpack.c.0.s8 %v297
    %v299 = vlaneseq
    %v300 = vshrl.u32 %v299, 7
    %v301 = vsub.s32 %v298, %v300
    %v302 = vrot.slane %v295, %v301
    %v303 = vcombine.low %v209, %v210
    %v305 = vunpack.c.l.s4 1983009808
    %v306 = vunpack.c.0.s8 %v305
    %v307 = vlaneseq
    %v308 = vshrl.u32 %v307, 7
    %v309 = vsub.s32 %v306, %v308
    %v310 = vrot.slane %v303, %v309
    %v311 = vcombine.low %v286, %v294
    %v312 = vcombine.high %v286, %v294
    %v314 = vunpack.c.l.s4 1934713408
    %v315 = vunpack.c.0.s8 %v314
    %v316 = vlaneseq
    %v317 = vshrl.u32 %v316, 7
    %v318 = vsub.s32 %v315, %v317
    %v319 = vrot.slane %v311, %v318
    %v321 = vunpack.c.l.s4 1934713408
    %v322 = vunpack.c.0.s8 %v321
    %v323 = vlaneseq
    %v324 = vshrl.u32 %v323, 7
    %v325 = vsub.s32 %v322, %v324
    %v326 = vrot.slane %v312, %v325
    %v327 = vcombine.low %v302, %v310
    %v328 = vcombine.high %v302, %v310
    %v330 = vunpack.c.l.s4 1934713408
    %v331 = vunpack.c.0.s8 %v330
    %v332 = vlaneseq
    %v333 = vshrl.u32 %v332, 7
    %v334 = vsub.s32 %v331, %v333
    %v335 = vrot.slane %v327, %v334
    %v337 = vunpack.c.l.s4 1934713408
    %v338 = vunpack.c.0.s8 %v337
    %v339 = vlaneseq
    %v340 = vshrl.u32 %v339, 7
    %v341 = vsub.s32 %v338, %v340
    %v342 = vrot.slane %v328, %v341
    %v343 = vcombine.low %v319, %v335
    %v344 = vcombine.high %v319, %v335
    %v345 = vcombine.low %v326, %v342
    %v346 = vcombine.high %v326, %v342
    %v347 = vcombine.low %v251, %v258
    %v349 = vunpack.c.l.s4 1983009808
    %v350 = vunpack.c.0.s8 %v349
    %v351 = vlaneseq
    %v352 = vshrl.u32 %v351, 7
    %v353 = vsub.s32 %v350, %v352
    %v354 = vrot.slane %v347, %v353
    %v355 = vcombine.low %v275, %v276
    %v357 = vunpack.c.l.s4 1983009808
    %v358 = vunpack.c.0.s8 %v357
    %v359 = vlaneseq
    %v360 = vshrl.u32 %v359, 7
    %v361 = vsub.s32 %v358, %v360
    %v362 = vrot.slane %v355, %v361
    %v363 = vcombine.low %v267, %v274
    %v365 = vunpack.c.l.s4 1983009808
    %v366 = vunpack.c.0.s8 %v365
    %v367 = vlaneseq
    %v368 = vshrl.u32 %v367, 7
    %v369 = vsub.s32 %v366, %v368
    %v370 = vrot.slane %v363, %v369
    %v371 = vcombine.low %v277, %v278
    %v373 = vunpack.c.l.s4 1983009808
    %v374 = vunpack.c.0.s8 %v373
    %v375 = vlaneseq
    %v376 = vshrl.u32 %v375, 7
    %v377 = vsub.s32 %v374, %v376
    %v378 = vrot.slane %v371, %v377
    %v379 = vcombine.low %v354, %v362
    %v380 = vcombine.high %v354, %v362
    %v382 = vunpack.c.l.s4 1934713408
    %v383 = vunpack.c.0.s8 %v382
    %v384 = vlaneseq
    %v385 = vshrl.u32 %v384, 7
    %v386 = vsub.s32 %v383, %v385
    %v387 = vrot.slane %v379, %v386
    %v389 = vunpack.c.l.s4 1934713408
    %v390 = vunpack.c.0.s8 %v389
    %v391 = vlaneseq
    %v392 = vshrl.u32 %v391, 7
    %v393 = vsub.s32 %v390, %v392
    %v394 = vrot.slane %v380, %v393
    %v395 = vcombine.low %v370, %v378
    %v396 = vcombine.high %v370, %v378
    %v398 = vunpack.c.l.s4 1934713408
    %v399 = vunpack.c.0.s8 %v398
    %v400 = vlaneseq
    %v401 = vshrl.u32 %v400, 7
    %v402 = vsub.s32 %v399, %v401
    %v403 = vrot.slane %v395, %v402
    %v405 = vunpack.c.l.s4 1934713408
    %v406 = vunpack.c.0.s8 %v405
    %v407 = vlaneseq
    %v408 = vshrl.u32 %v407, 7
    %v409 = vsub.s32 %v406, %v408
    %v410 = vrot.slane %v396, %v409
    %v411 = vcombine.low %v387, %v403
    %v412 = vcombine.high %v387, %v403
    %v413 = vcombine.low %v394, %v410
    %v414 = vcombine.high %v394, %v410
    %v415 = vpack.c.bf16 %v343, %v343
    %v416 = vpack.c.bf16 %v344, %v344
    %v417 = vpack.c.bf16 %v345, %v345
    %v418 = vpack.c.bf16 %v346, %v346
    %v419 = vpack.c.bf16 %v411, %v411
    %v420 = vpack.c.bf16 %v412, %v412
    %v421 = vpack.c.bf16 %v413, %v413
    %v422 = vpack.c.bf16 %v414, %v414
    %423 = vrot.lane.b32.xlu0 %v117, 96
    %v424 = vpop.permute.xlu0 %423
    %425 = vrot.lane.b32.xlu0 %v120, 96
    %v426 = vpop.permute.xlu0 %425
    %427 = vrot.lane.b32.xlu0 %v126, 96
    %v428 = vpop.permute.xlu0 %427
    %429 = vrot.lane.b32.xlu0 %v128, 96
    %v430 = vpop.permute.xlu0 %429
    %431 = vrot.lane.b32.xlu0 %v132, 96
    %v432 = vpop.permute.xlu0 %431
    %433 = vrot.lane.b32.xlu0 %v134, 96
    %v434 = vpop.permute.xlu0 %433
    %435 = vrot.lane.b32.xlu0 %v138, 96
    %v436 = vpop.permute.xlu0 %435
    %437 = vrot.lane.b32.xlu0 %v140, 96
    %v438 = vpop.permute.xlu0 %437
    %v447 = vcombine.low %v424, %v432
    %v448 = vcombine.high %v424, %v432
    %v450 = vunpack.c.l.s4 1983009808
    %v451 = vunpack.c.0.s8 %v450
    %v452 = vlaneseq
    %v453 = vshrl.u32 %v452, 7
    %v454 = vsub.s32 %v451, %v453
    %v455 = vrot.slane %v447, %v454
    %v457 = vunpack.c.l.s4 1983009808
    %v458 = vunpack.c.0.s8 %v457
    %v459 = vlaneseq
    %v460 = vshrl.u32 %v459, 7
    %v461 = vsub.s32 %v458, %v460
    %v462 = vrot.slane %v448, %v461
    %v463 = vcombine.low %v428, %v436
    %v464 = vcombine.high %v428, %v436
    %v466 = vunpack.c.l.s4 1983009808
    %v467 = vunpack.c.0.s8 %v466
    %v468 = vlaneseq
    %v469 = vshrl.u32 %v468, 7
    %v470 = vsub.s32 %v467, %v469
    %v471 = vrot.slane %v463, %v470
    %v473 = vunpack.c.l.s4 1983009808
    %v474 = vunpack.c.0.s8 %v473
    %v475 = vlaneseq
    %v476 = vshrl.u32 %v475, 7
    %v477 = vsub.s32 %v474, %v476
    %v478 = vrot.slane %v464, %v477
    %v479 = vcombine.low %v455, %v471
    %v480 = vcombine.high %v455, %v471
    %v482 = vunpack.c.l.s4 1934713408
    %v483 = vunpack.c.0.s8 %v482
    %v484 = vlaneseq
    %v485 = vshrl.u32 %v484, 7
    %v486 = vsub.s32 %v483, %v485
    %v487 = vrot.slane %v479, %v486
    %v489 = vunpack.c.l.s4 1934713408
    %v490 = vunpack.c.0.s8 %v489
    %v491 = vlaneseq
    %v492 = vshrl.u32 %v491, 7
    %v493 = vsub.s32 %v490, %v492
    %v494 = vrot.slane %v480, %v493
    %v495 = vcombine.low %v462, %v478
    %v496 = vcombine.high %v462, %v478
    %v498 = vunpack.c.l.s4 1934713408
    %v499 = vunpack.c.0.s8 %v498
    %v500 = vlaneseq
    %v501 = vshrl.u32 %v500, 7
    %v502 = vsub.s32 %v499, %v501
    %v503 = vrot.slane %v495, %v502
    %v505 = vunpack.c.l.s4 1934713408
    %v506 = vunpack.c.0.s8 %v505
    %v507 = vlaneseq
    %v508 = vshrl.u32 %v507, 7
    %v509 = vsub.s32 %v506, %v508
    %v510 = vrot.slane %v496, %v509
    %v511 = vcombine.high %v487, 0.0
    %v512 = vcombine.high %v494, 0.0
    %v513 = vcombine.high %v503, 0.0
    %v514 = vcombine.high %v510, 0.0
    %v515 = vcombine.low %v426, %v434
    %v516 = vcombine.high %v426, %v434
    %v518 = vunpack.c.l.s4 1983009808
    %v519 = vunpack.c.0.s8 %v518
    %v520 = vlaneseq
    %v521 = vshrl.u32 %v520, 7
    %v522 = vsub.s32 %v519, %v521
    %v523 = vrot.slane %v515, %v522
    %v525 = vunpack.c.l.s4 1983009808
    %v526 = vunpack.c.0.s8 %v525
    %v527 = vlaneseq
    %v528 = vshrl.u32 %v527, 7
    %v529 = vsub.s32 %v526, %v528
    %v530 = vrot.slane %v516, %v529
    %v531 = vcombine.low %v430, %v438
    %v532 = vcombine.high %v430, %v438
    %v534 = vunpack.c.l.s4 1983009808
    %v535 = vunpack.c.0.s8 %v534
    %v536 = vlaneseq
    %v537 = vshrl.u32 %v536, 7
    %v538 = vsub.s32 %v535, %v537
    %v539 = vrot.slane %v531, %v538
    %v541 = vunpack.c.l.s4 1983009808
    %v542 = vunpack.c.0.s8 %v541
    %v543 = vlaneseq
    %v544 = vshrl.u32 %v543, 7
    %v545 = vsub.s32 %v542, %v544
    %v546 = vrot.slane %v532, %v545
    %v547 = vcombine.low %v523, %v539
    %v548 = vcombine.high %v523, %v539
    %v550 = vunpack.c.l.s4 1934713408
    %v551 = vunpack.c.0.s8 %v550
    %v552 = vlaneseq
    %v553 = vshrl.u32 %v552, 7
    %v554 = vsub.s32 %v551, %v553
    %v555 = vrot.slane %v547, %v554
    %v557 = vunpack.c.l.s4 1934713408
    %v558 = vunpack.c.0.s8 %v557
    %v559 = vlaneseq
    %v560 = vshrl.u32 %v559, 7
    %v561 = vsub.s32 %v558, %v560
    %v562 = vrot.slane %v548, %v561
    %v563 = vcombine.low %v530, %v546
    %v564 = vcombine.high %v530, %v546
    %v566 = vunpack.c.l.s4 1934713408
    %v567 = vunpack.c.0.s8 %v566
    %v568 = vlaneseq
    %v569 = vshrl.u32 %v568, 7
    %v570 = vsub.s32 %v567, %v569
    %v571 = vrot.slane %v563, %v570
    %v573 = vunpack.c.l.s4 1934713408
    %v574 = vunpack.c.0.s8 %v573
    %v575 = vlaneseq
    %v576 = vshrl.u32 %v575, 7
    %v577 = vsub.s32 %v574, %v576
    %v578 = vrot.slane %v564, %v577
    %v579 = vcombine.high %v555, 0.0
    %v580 = vcombine.high %v562, 0.0
    %v581 = vcombine.high %v571, 0.0
    %v582 = vcombine.high %v578, 0.0
    %v583 = vcombine.low %v487, %v494
    %v585 = vunpack.c.l.s4 1983009808
    %v586 = vunpack.c.0.s8 %v585
    %v587 = vlaneseq
    %v588 = vshrl.u32 %v587, 7
    %v589 = vsub.s32 %v586, %v588
    %v590 = vrot.slane %v583, %v589
    %v591 = vcombine.low %v511, %v512
    %v593 = vunpack.c.l.s4 1983009808
    %v594 = vunpack.c.0.s8 %v593
    %v595 = vlaneseq
    %v596 = vshrl.u32 %v595, 7
    %v597 = vsub.s32 %v594, %v596
    %v598 = vrot.slane %v591, %v597
    %v599 = vcombine.low %v503, %v510
    %v601 = vunpack.c.l.s4 1983009808
    %v602 = vunpack.c.0.s8 %v601
    %v603 = vlaneseq
    %v604 = vshrl.u32 %v603, 7
    %v605 = vsub.s32 %v602, %v604
    %v606 = vrot.slane %v599, %v605
    %v607 = vcombine.low %v513, %v514
    %v609 = vunpack.c.l.s4 1983009808
    %v610 = vunpack.c.0.s8 %v609
    %v611 = vlaneseq
    %v612 = vshrl.u32 %v611, 7
    %v613 = vsub.s32 %v610, %v612
    %v614 = vrot.slane %v607, %v613
    %v615 = vcombine.low %v590, %v598
    %v616 = vcombine.high %v590, %v598
    %v618 = vunpack.c.l.s4 1934713408
    %v619 = vunpack.c.0.s8 %v618
    %v620 = vlaneseq
    %v621 = vshrl.u32 %v620, 7
    %v622 = vsub.s32 %v619, %v621
    %v623 = vrot.slane %v615, %v622
    %v625 = vunpack.c.l.s4 1934713408
    %v626 = vunpack.c.0.s8 %v625
    %v627 = vlaneseq
    %v628 = vshrl.u32 %v627, 7
    %v629 = vsub.s32 %v626, %v628
    %v630 = vrot.slane %v616, %v629
    %v631 = vcombine.low %v606, %v614
    %v632 = vcombine.high %v606, %v614
    %v634 = vunpack.c.l.s4 1934713408
    %v635 = vunpack.c.0.s8 %v634
    %v636 = vlaneseq
    %v637 = vshrl.u32 %v636, 7
    %v638 = vsub.s32 %v635, %v637
    %v639 = vrot.slane %v631, %v638
    %v641 = vunpack.c.l.s4 1934713408
    %v642 = vunpack.c.0.s8 %v641
    %v643 = vlaneseq
    %v644 = vshrl.u32 %v643, 7
    %v645 = vsub.s32 %v642, %v644
    %v646 = vrot.slane %v632, %v645
    %v647 = vcombine.low %v623, %v639
    %v648 = vcombine.high %v623, %v639
    %v649 = vcombine.low %v630, %v646
    %v650 = vcombine.high %v630, %v646
    %v651 = vcombine.low %v555, %v562
    %v653 = vunpack.c.l.s4 1983009808
    %v654 = vunpack.c.0.s8 %v653
    %v655 = vlaneseq
    %v656 = vshrl.u32 %v655, 7
    %v657 = vsub.s32 %v654, %v656
    %v658 = vrot.slane %v651, %v657
    %v659 = vcombine.low %v579, %v580
    %v661 = vunpack.c.l.s4 1983009808
    %v662 = vunpack.c.0.s8 %v661
    %v663 = vlaneseq
    %v664 = vshrl.u32 %v663, 7
    %v665 = vsub.s32 %v662, %v664
    %v666 = vrot.slane %v659, %v665
    %v667 = vcombine.low %v571, %v578
    %v669 = vunpack.c.l.s4 1983009808
    %v670 = vunpack.c.0.s8 %v669
    %v671 = vlaneseq
    %v672 = vshrl.u32 %v671, 7
    %v673 = vsub.s32 %v670, %v672
    %v674 = vrot.slane %v667, %v673
    %v675 = vcombine.low %v581, %v582
    %v677 = vunpack.c.l.s4 1983009808
    %v678 = vunpack.c.0.s8 %v677
    %v679 = vlaneseq
    %v680 = vshrl.u32 %v679, 7
    %v681 = vsub.s32 %v678, %v680
    %v682 = vrot.slane %v675, %v681
    %v683 = vcombine.low %v658, %v666
    %v684 = vcombine.high %v658, %v666
    %v686 = vunpack.c.l.s4 1934713408
    %v687 = vunpack.c.0.s8 %v686
    %v688 = vlaneseq
    %v689 = vshrl.u32 %v688, 7
    %v690 = vsub.s32 %v687, %v689
    %v691 = vrot.slane %v683, %v690
    %v693 = vunpack.c.l.s4 1934713408
    %v694 = vunpack.c.0.s8 %v693
    %v695 = vlaneseq
    %v696 = vshrl.u32 %v695, 7
    %v697 = vsub.s32 %v694, %v696
    %v698 = vrot.slane %v684, %v697
    %v699 = vcombine.low %v674, %v682
    %v700 = vcombine.high %v674, %v682
    %v702 = vunpack.c.l.s4 1934713408
    %v703 = vunpack.c.0.s8 %v702
    %v704 = vlaneseq
    %v705 = vshrl.u32 %v704, 7
    %v706 = vsub.s32 %v703, %v705
    %v707 = vrot.slane %v699, %v706
    %v709 = vunpack.c.l.s4 1934713408
    %v710 = vunpack.c.0.s8 %v709
    %v711 = vlaneseq
    %v712 = vshrl.u32 %v711, 7
    %v713 = vsub.s32 %v710, %v712
    %v714 = vrot.slane %v700, %v713
    %v715 = vcombine.low %v691, %v707
    %v716 = vcombine.high %v691, %v707
    %v717 = vcombine.low %v698, %v714
    %v718 = vcombine.high %v698, %v714
    %v719 = vpack.c.bf16 %v647, %v647
    %v720 = vpack.c.bf16 %v648, %v648
    %v721 = vpack.c.bf16 %v649, %v649
    %v722 = vpack.c.bf16 %v650, %v650
    %v723 = vpack.c.bf16 %v715, %v715
    %v724 = vpack.c.bf16 %v716, %v716
    %v725 = vpack.c.bf16 %v717, %v717
    %v726 = vpack.c.bf16 %v718, %v718
    %727 = vrot.lane.b32.xlu0 %v117, 64
    %v728 = vpop.permute.xlu0 %727
    %729 = vrot.lane.b32.xlu0 %v120, 64
    %v730 = vpop.permute.xlu0 %729
    %731 = vrot.lane.b32.xlu0 %v126, 64
    %v732 = vpop.permute.xlu0 %731
    %733 = vrot.lane.b32.xlu0 %v128, 64
    %v734 = vpop.permute.xlu0 %733
    %735 = vrot.lane.b32.xlu0 %v132, 64
    %v736 = vpop.permute.xlu0 %735
    %737 = vrot.lane.b32.xlu0 %v134, 64
    %v738 = vpop.permute.xlu0 %737
    %739 = vrot.lane.b32.xlu0 %v138, 64
    %v740 = vpop.permute.xlu0 %739
    %741 = vrot.lane.b32.xlu0 %v140, 64
    %v742 = vpop.permute.xlu0 %741
    %v751 = vcombine.low %v728, %v736
    %v752 = vcombine.high %v728, %v736
    %v754 = vunpack.c.l.s4 1983009808
    %v755 = vunpack.c.0.s8 %v754
    %v756 = vlaneseq
    %v757 = vshrl.u32 %v756, 7
    %v758 = vsub.s32 %v755, %v757
    %v759 = vrot.slane %v751, %v758
    %v761 = vunpack.c.l.s4 1983009808
    %v762 = vunpack.c.0.s8 %v761
    %v763 = vlaneseq
    %v764 = vshrl.u32 %v763, 7
    %v765 = vsub.s32 %v762, %v764
    %v766 = vrot.slane %v752, %v765
    %v767 = vcombine.low %v732, %v740
    %v768 = vcombine.high %v732, %v740
    %v770 = vunpack.c.l.s4 1983009808
    %v771 = vunpack.c.0.s8 %v770
    %v772 = vlaneseq
    %v773 = vshrl.u32 %v772, 7
    %v774 = vsub.s32 %v771, %v773
    %v775 = vrot.slane %v767, %v774
    %v777 = vunpack.c.l.s4 1983009808
    %v778 = vunpack.c.0.s8 %v777
    %v779 = vlaneseq
    %v780 = vshrl.u32 %v779, 7
    %v781 = vsub.s32 %v778, %v780
    %v782 = vrot.slane %v768, %v781
    %v783 = vcombine.low %v759, %v775
    %v784 = vcombine.high %v759, %v775
    %v786 = vunpack.c.l.s4 1934713408
    %v787 = vunpack.c.0.s8 %v786
    %v788 = vlaneseq
    %v789 = vshrl.u32 %v788, 7
    %v790 = vsub.s32 %v787, %v789
    %v791 = vrot.slane %v783, %v790
    %v793 = vunpack.c.l.s4 1934713408
    %v794 = vunpack.c.0.s8 %v793
    %v795 = vlaneseq
    %v796 = vshrl.u32 %v795, 7
    %v797 = vsub.s32 %v794, %v796
    %v798 = vrot.slane %v784, %v797
    %v799 = vcombine.low %v766, %v782
    %v800 = vcombine.high %v766, %v782
    %v802 = vunpack.c.l.s4 1934713408
    %v803 = vunpack.c.0.s8 %v802
    %v804 = vlaneseq
    %v805 = vshrl.u32 %v804, 7
    %v806 = vsub.s32 %v803, %v805
    %v807 = vrot.slane %v799, %v806
    %v809 = vunpack.c.l.s4 1934713408
    %v810 = vunpack.c.0.s8 %v809
    %v811 = vlaneseq
    %v812 = vshrl.u32 %v811, 7
    %v813 = vsub.s32 %v810, %v812
    %v814 = vrot.slane %v800, %v813
    %v815 = vcombine.high %v791, 0.0
    %v816 = vcombine.high %v798, 0.0
    %v817 = vcombine.high %v807, 0.0
    %v818 = vcombine.high %v814, 0.0
    %v819 = vcombine.low %v730, %v738
    %v820 = vcombine.high %v730, %v738
    %v822 = vunpack.c.l.s4 1983009808
    %v823 = vunpack.c.0.s8 %v822
    %v824 = vlaneseq
    %v825 = vshrl.u32 %v824, 7
    %v826 = vsub.s32 %v823, %v825
    %v827 = vrot.slane %v819, %v826
    %v829 = vunpack.c.l.s4 1983009808
    %v830 = vunpack.c.0.s8 %v829
    %v831 = vlaneseq
    %v832 = vshrl.u32 %v831, 7
    %v833 = vsub.s32 %v830, %v832
    %v834 = vrot.slane %v820, %v833
    %v835 = vcombine.low %v734, %v742
    %v836 = vcombine.high %v734, %v742
    %v838 = vunpack.c.l.s4 1983009808
    %v839 = vunpack.c.0.s8 %v838
    %v840 = vlaneseq
    %v841 = vshrl.u32 %v840, 7
    %v842 = vsub.s32 %v839, %v841
    %v843 = vrot.slane %v835, %v842
    %v845 = vunpack.c.l.s4 1983009808
    %v846 = vunpack.c.0.s8 %v845
    %v847 = vlaneseq
    %v848 = vshrl.u32 %v847, 7
    %v849 = vsub.s32 %v846, %v848
    %v850 = vrot.slane %v836, %v849
    %v851 = vcombine.low %v827, %v843
    %v852 = vcombine.high %v827, %v843
    %v854 = vunpack.c.l.s4 1934713408
    %v855 = vunpack.c.0.s8 %v854
    %v856 = vlaneseq
    %v857 = vshrl.u32 %v856, 7
    %v858 = vsub.s32 %v855, %v857
    %v859 = vrot.slane %v851, %v858
    %v861 = vunpack.c.l.s4 1934713408
    %v862 = vunpack.c.0.s8 %v861
    %v863 = vlaneseq
    %v864 = vshrl.u32 %v863, 7
    %v865 = vsub.s32 %v862, %v864
    %v866 = vrot.slane %v852, %v865
    %v867 = vcombine.low %v834, %v850
    %v868 = vcombine.high %v834, %v850
    %v870 = vunpack.c.l.s4 1934713408
    %v871 = vunpack.c.0.s8 %v870
    %v872 = vlaneseq
    %v873 = vshrl.u32 %v872, 7
    %v874 = vsub.s32 %v871, %v873
    %v875 = vrot.slane %v867, %v874
    %v877 = vunpack.c.l.s4 1934713408
    %v878 = vunpack.c.0.s8 %v877
    %v879 = vlaneseq
    %v880 = vshrl.u32 %v879, 7
    %v881 = vsub.s32 %v878, %v880
    %v882 = vrot.slane %v868, %v881
    %v883 = vcombine.high %v859, 0.0
    %v884 = vcombine.high %v866, 0.0
    %v885 = vcombine.high %v875, 0.0
    %v886 = vcombine.high %v882, 0.0
    %v887 = vcombine.low %v791, %v798
    %v889 = vunpack.c.l.s4 1983009808
    %v890 = vunpack.c.0.s8 %v889
    %v891 = vlaneseq
    %v892 = vshrl.u32 %v891, 7
    %v893 = vsub.s32 %v890, %v892
    %v894 = vrot.slane %v887, %v893
    %v895 = vcombine.low %v815, %v816
    %v897 = vunpack.c.l.s4 1983009808
    %v898 = vunpack.c.0.s8 %v897
    %v899 = vlaneseq
    %v900 = vshrl.u32 %v899, 7
    %v901 = vsub.s32 %v898, %v900
    %v902 = vrot.slane %v895, %v901
    %v903 = vcombine.low %v807, %v814
    %v905 = vunpack.c.l.s4 1983009808
    %v906 = vunpack.c.0.s8 %v905
    %v907 = vlaneseq
    %v908 = vshrl.u32 %v907, 7
    %v909 = vsub.s32 %v906, %v908
    %v910 = vrot.slane %v903, %v909
    %v911 = vcombine.low %v817, %v818
    %v913 = vunpack.c.l.s4 1983009808
    %v914 = vunpack.c.0.s8 %v913
    %v915 = vlaneseq
    %v916 = vshrl.u32 %v915, 7
    %v917 = vsub.s32 %v914, %v916
    %v918 = vrot.slane %v911, %v917
    %v919 = vcombine.low %v894, %v902
    %v920 = vcombine.high %v894, %v902
    %v922 = vunpack.c.l.s4 1934713408
    %v923 = vunpack.c.0.s8 %v922
    %v924 = vlaneseq
    %v925 = vshrl.u32 %v924, 7
    %v926 = vsub.s32 %v923, %v925
    %v927 = vrot.slane %v919, %v926
    %v929 = vunpack.c.l.s4 1934713408
    %v930 = vunpack.c.0.s8 %v929
    %v931 = vlaneseq
    %v932 = vshrl.u32 %v931, 7
    %v933 = vsub.s32 %v930, %v932
    %v934 = vrot.slane %v920, %v933
    %v935 = vcombine.low %v910, %v918
    %v936 = vcombine.high %v910, %v918
    %v938 = vunpack.c.l.s4 1934713408
    %v939 = vunpack.c.0.s8 %v938
    %v940 = vlaneseq
    %v941 = vshrl.u32 %v940, 7
    %v942 = vsub.s32 %v939, %v941
    %v943 = vrot.slane %v935, %v942
    %v945 = vunpack.c.l.s4 1934713408
    %v946 = vunpack.c.0.s8 %v945
    %v947 = vlaneseq
    %v948 = vshrl.u32 %v947, 7
    %v949 = vsub.s32 %v946, %v948
    %v950 = vrot.slane %v936, %v949
    %v951 = vcombine.low %v927, %v943
    %v952 = vcombine.high %v927, %v943
    %v953 = vcombine.low %v934, %v950
    %v954 = vcombine.high %v934, %v950
    %v955 = vcombine.low %v859, %v866
    %v957 = vunpack.c.l.s4 1983009808
    %v958 = vunpack.c.0.s8 %v957
    %v959 = vlaneseq
    %v960 = vshrl.u32 %v959, 7
    %v961 = vsub.s32 %v958, %v960
    %v962 = vrot.slane %v955, %v961
    %v963 = vcombine.low %v883, %v884
    %v965 = vunpack.c.l.s4 1983009808
    %v966 = vunpack.c.0.s8 %v965
    %v967 = vlaneseq
    %v968 = vshrl.u32 %v967, 7
    %v969 = vsub.s32 %v966, %v968
    %v970 = vrot.slane %v963, %v969
    %v971 = vcombine.low %v875, %v882
    %v973 = vunpack.c.l.s4 1983009808
    %v974 = vunpack.c.0.s8 %v973
    %v975 = vlaneseq
    %v976 = vshrl.u32 %v975, 7
    %v977 = vsub.s32 %v974, %v976
    %v978 = vrot.slane %v971, %v977
    %v979 = vcombine.low %v885, %v886
    %v981 = vunpack.c.l.s4 1983009808
    %v982 = vunpack.c.0.s8 %v981
    %v983 = vlaneseq
    %v984 = vshrl.u32 %v983, 7
    %v985 = vsub.s32 %v982, %v984
    %v986 = vrot.slane %v979, %v985
    %v987 = vcombine.low %v962, %v970
    %v988 = vcombine.high %v962, %v970
    %v990 = vunpack.c.l.s4 1934713408
    %v991 = vunpack.c.0.s8 %v990
    %v992 = vlaneseq
    %v993 = vshrl.u32 %v992, 7
    %v994 = vsub.s32 %v991, %v993
    %v995 = vrot.slane %v987, %v994
    %v997 = vunpack.c.l.s4 1934713408
    %v998 = vunpack.c.0.s8 %v997
    %v999 = vlaneseq
    %v1000 = vshrl.u32 %v999, 7
    %v1001 = vsub.s32 %v998, %v1000
    %v1002 = vrot.slane %v988, %v1001
    %v1003 = vcombine.low %v978, %v986
    %v1004 = vcombine.high %v978, %v986
    %v1006 = vunpack.c.l.s4 1934713408
    %v1007 = vunpack.c.0.s8 %v1006
    %v1008 = vlaneseq
    %v1009 = vshrl.u32 %v1008, 7
    %v1010 = vsub.s32 %v1007, %v1009
    %v1011 = vrot.slane %v1003, %v1010
    %v1013 = vunpack.c.l.s4 1934713408
    %v1014 = vunpack.c.0.s8 %v1013
    %v1015 = vlaneseq
    %v1016 = vshrl.u32 %v1015, 7
    %v1017 = vsub.s32 %v1014, %v1016
    %v1018 = vrot.slane %v1004, %v1017
    %v1019 = vcombine.low %v995, %v1011
    %v1020 = vcombine.high %v995, %v1011
    %v1021 = vcombine.low %v1002, %v1018
    %v1022 = vcombine.high %v1002, %v1018
    %v1023 = vpack.c.bf16 %v951, %v951
    %v1024 = vpack.c.bf16 %v952, %v952
    %v1025 = vpack.c.bf16 %v953, %v953
    %v1026 = vpack.c.bf16 %v954, %v954
    %v1027 = vpack.c.bf16 %v1019, %v1019
    %v1028 = vpack.c.bf16 %v1020, %v1020
    %v1029 = vpack.c.bf16 %v1021, %v1021
    %v1030 = vpack.c.bf16 %v1022, %v1022
    %vm1031 = vcmask 64512
    %v1033 = vsel %vm1031, %v415, 0
    %v1036 = vsel %vm1031, %v719, 0
    %1038 = vmatprep.subr.bf16.mxu0 0
    %1039 = vmatpush1.bf16.xpose.msra.mxu0 %v1036
    %1040 = vmatprep.subr.bf16.mxu0 0
    %1041 = vmatpush1.bf16.xpose.msra.mxu0 0
    %1042 = vmatprep.subr.bf16.mxu0 0
    %1043 = vmatpush1.bf16.xpose.msra.mxu0 0
    %1044 = vmatprep.subr.bf16.mxu0 0
    %1045 = vmatpush1.bf16.xpose.msra.mxu0 0
    %1046 = vmatprep.subr.bf16.mxu0 0
    %1047 = vmatpush1.bf16.xpose.msra.mxu0 0
    %1048 = vmatprep.subr.bf16.mxu0 0
    %1049 = vmatpush1.bf16.xpose.msra.mxu0 0
    %1050 = vmatprep.subr.bf16.mxu0 0
    %1051 = vmatpush1.bf16.xpose.msra.mxu0 0
    %1052 = vmatprep.subr.bf16.mxu0 0
    %1053 = vmatpush1.bf16.xpose.msra.mxu0 0
    %1054 = vmatprep.subr.bf16.mxu0 0
    %1055 = vmatpush1.bf16.xpose.msra.mxu0 0
    %1056 = vmatprep.subr.bf16.mxu0 0
    %1057 = vmatpush1.bf16.xpose.msra.mxu0 0
    %1058 = vmatprep.subr.bf16.mxu0 0
    %1059 = vmatpush1.bf16.xpose.msra.mxu0 0
    %1060 = vmatprep.subr.bf16.mxu0 0
    %1061 = vmatpush1.bf16.xpose.msra.mxu0 0
    %1062 = vmatprep.subr.bf16.mxu0 0
    %1063 = vmatpush1.bf16.xpose.msra.mxu0 0
    %1064 = vmatprep.subr.bf16.mxu0 0
    %1065 = vmatpush1.bf16.xpose.msra.mxu0 0
    %1066 = vmatprep.subr.bf16.mxu0 0
    %1067 = vmatpush1.bf16.xpose.msra.mxu0 0
    %1068 = vmatprep.subr.bf16.mxu0 0
    %1069 = vmatpush1.bf16.xpose.msra.mxu0 0
    %1070 = vmatprep.mubr.bf16.mxu0 0
    %1071 = vmatmul.mubr.bf16.gmra.mrb[0].mxu0 %v1033
    %v1072 = vpop.f32.mrb[0].mxu0
    %v1073 = vadd.f32 0.0, %v1072
    %v1074 = vpop.f32.mrb[0].mxu0
    %v1075 = vpop.f32.mrb[0].mxu0
    %v1076 = vpop.f32.mrb[0].mxu0
    %1077 = vdwg.mxu0
    %v1079 = vsel %vm1031, %v416, 0
    %v1082 = vsel %vm1031, %v720, 0
    %1084 = vmatprep.subr.bf16.mxu0 0
    %1085 = vmatpush1.bf16.xpose.msra.mxu0 %v1082
    %1086 = vmatprep.subr.bf16.mxu0 0
    %1087 = vmatpush1.bf16.xpose.msra.mxu0 0
    %1088 = vmatprep.subr.bf16.mxu0 0
    %1089 = vmatpush1.bf16.xpose.msra.mxu0 0
    %1090 = vmatprep.subr.bf16.mxu0 0
    %1091 = vmatpush1.bf16.xpose.msra.mxu0 0
    %1092 = vmatprep.subr.bf16.mxu0 0
    %1093 = vmatpush1.bf16.xpose.msra.mxu0 0
    %1094 = vmatprep.subr.bf16.mxu0 0
    %1095 = vmatpush1.bf16.xpose.msra.mxu0 0
    %1096 = vmatprep.subr.bf16.mxu0 0
    %1097 = vmatpush1.bf16.xpose.msra.mxu0 0
    %1098 = vmatprep.subr.bf16.mxu0 0
    %1099 = vmatpush1.bf16.xpose.msra.mxu0 0
    %1100 = vmatprep.subr.bf16.mxu0 0
    %1101 = vmatpush1.bf16.xpose.msra.mxu0 0
    %1102 = vmatprep.subr.bf16.mxu0 0
    %1103 = vmatpush1.bf16.xpose.msra.mxu0 0
    %1104 = vmatprep.subr.bf16.mxu0 0
    %1105 = vmatpush1.bf16.xpose.msra.mxu0 0
    %1106 = vmatprep.subr.bf16.mxu0 0
    %1107 = vmatpush1.bf16.xpose.msra.mxu0 0
    %1108 = vmatprep.subr.bf16.mxu0 0
    %1109 = vmatpush1.bf16.xpose.msra.mxu0 0
    %1110 = vmatprep.subr.bf16.mxu0 0
    %1111 = vmatpush1.bf16.xpose.msra.mxu0 0
    %1112 = vmatprep.subr.bf16.mxu0 0
    %1113 = vmatpush1.bf16.xpose.msra.mxu0 0
    %1114 = vmatprep.subr.bf16.mxu0 0
    %1115 = vmatpush1.bf16.xpose.msra.mxu0 0
    %1116 = vmatprep.mubr.bf16.mxu0 0
    %1117 = vmatmul.mubr.bf16.gmra.mrb[0].mxu0 %v1079
    %v1118 = vpop.f32.mrb[0].mxu0
    %v1119 = vadd.f32 0.0, %v1118
    %v1120 = vpop.f32.mrb[0].mxu0
    %v1121 = vpop.f32.mrb[0].mxu0
    %v1122 = vpop.f32.mrb[0].mxu0
    %1123 = vdwg.mxu0
    %v1125 = vsel %vm1031, %v417, 0
    %v1128 = vsel %vm1031, %v721, 0
    %1130 = vmatprep.subr.bf16.mxu0 0
    %1131 = vmatpush1.bf16.xpose.msra.mxu0 %v1128
    %1132 = vmatprep.subr.bf16.mxu0 0
    %1133 = vmatpush1.bf16.xpose.msra.mxu0 0
    %1134 = vmatprep.subr.bf16.mxu0 0
    %1135 = vmatpush1.bf16.xpose.msra.mxu0 0
    %1136 = vmatprep.subr.bf16.mxu0 0
    %1137 = vmatpush1.bf16.xpose.msra.mxu0 0
    %1138 = vmatprep.subr.bf16.mxu0 0
    %1139 = vmatpush1.bf16.xpose.msra.mxu0 0
    %1140 = vmatprep.subr.bf16.mxu0 0
    %1141 = vmatpush1.bf16.xpose.msra.mxu0 0
    %1142 = vmatprep.subr.bf16.mxu0 0
    %1143 = vmatpush1.bf16.xpose.msra.mxu0 0
    %1144 = vmatprep.subr.bf16.mxu0 0
    %1145 = vmatpush1.bf16.xpose.msra.mxu0 0
    %1146 = vmatprep.subr.bf16.mxu0 0
    %1147 = vmatpush1.bf16.xpose.msra.mxu0 0
    %1148 = vmatprep.subr.bf16.mxu0 0
    %1149 = vmatpush1.bf16.xpose.msra.mxu0 0
    %1150 = vmatprep.subr.bf16.mxu0 0
    %1151 = vmatpush1.bf16.xpose.msra.mxu0 0
    %1152 = vmatprep.subr.bf16.mxu0 0
    %1153 = vmatpush1.bf16.xpose.msra.mxu0 0
    %1154 = vmatprep.subr.bf16.mxu0 0
    %1155 = vmatpush1.bf16.xpose.msra.mxu0 0
    %1156 = vmatprep.subr.bf16.mxu0 0
    %1157 = vmatpush1.bf16.xpose.msra.mxu0 0
    %1158 = vmatprep.subr.bf16.mxu0 0
    %1159 = vmatpush1.bf16.xpose.msra.mxu0 0
    %1160 = vmatprep.subr.bf16.mxu0 0
    %1161 = vmatpush1.bf16.xpose.msra.mxu0 0
    %1162 = vmatprep.mubr.bf16.mxu0 0
    %1163 = vmatmul.mubr.bf16.gmra.mrb[0].mxu0 %v1125
    %v1164 = vpop.f32.mrb[0].mxu0
    %v1165 = vadd.f32 0.0, %v1164
    %v1166 = vpop.f32.mrb[0].mxu0
    %v1167 = vpop.f32.mrb[0].mxu0
    %v1168 = vpop.f32.mrb[0].mxu0
    %1169 = vdwg.mxu0
    %v1171 = vsel %vm1031, %v418, 0
    %v1174 = vsel %vm1031, %v722, 0
    %1176 = vmatprep.subr.bf16.mxu0 0
    %1177 = vmatpush1.bf16.xpose.msra.mxu0 %v1174
    %1178 = vmatprep.subr.bf16.mxu0 0
    %1179 = vmatpush1.bf16.xpose.msra.mxu0 0
    %1180 = vmatprep.subr.bf16.mxu0 0
    %1181 = vmatpush1.bf16.xpose.msra.mxu0 0
    %1182 = vmatprep.subr.bf16.mxu0 0
    %1183 = vmatpush1.bf16.xpose.msra.mxu0 0
    %1184 = vmatprep.subr.bf16.mxu0 0
    %1185 = vmatpush1.bf16.xpose.msra.mxu0 0
    %1186 = vmatprep.subr.bf16.mxu0 0
    %1187 = vmatpush1.bf16.xpose.msra.mxu0 0
    %1188 = vmatprep.subr.bf16.mxu0 0
    %1189 = vmatpush1.bf16.xpose.msra.mxu0 0
    %1190 = vmatprep.subr.bf16.mxu0 0
    %1191 = vmatpush1.bf16.xpose.msra.mxu0 0
    %1192 = vmatprep.subr.bf16.mxu0 0
    %1193 = vmatpush1.bf16.xpose.msra.mxu0 0
    %1194 = vmatprep.subr.bf16.mxu0 0
    %1195 = vmatpush1.bf16.xpose.msra.mxu0 0
    %1196 = vmatprep.subr.bf16.mxu0 0
    %1197 = vmatpush1.bf16.xpose.msra.mxu0 0
    %1198 = vmatprep.subr.bf16.mxu0 0
    %1199 = vmatpush1.bf16.xpose.msra.mxu0 0
    %1200 = vmatprep.subr.bf16.mxu0 0
    %1201 = vmatpush1.bf16.xpose.msra.mxu0 0
    %1202 = vmatprep.subr.bf16.mxu0 0
    %1203 = vmatpush1.bf16.xpose.msra.mxu0 0
    %1204 = vmatprep.subr.bf16.mxu0 0
    %1205 = vmatpush1.bf16.xpose.msra.mxu0 0
    %1206 = vmatprep.subr.bf16.mxu0 0
    %1207 = vmatpush1.bf16.xpose.msra.mxu0 0
    %1208 = vmatprep.mubr.bf16.mxu0 0
    %1209 = vmatmul.mubr.bf16.gmra.mrb[0].mxu0 %v1171
    %v1210 = vpop.f32.mrb[0].mxu0
    %v1211 = vadd.f32 0.0, %v1210
    %v1212 = vpop.f32.mrb[0].mxu0
    %v1213 = vpop.f32.mrb[0].mxu0
    %v1214 = vpop.f32.mrb[0].mxu0
    %1215 = vdwg.mxu0
    %v1217 = vsel %vm1031, %v419, 0
    %v1220 = vsel %vm1031, %v723, 0
    %1222 = vmatprep.subr.bf16.mxu0 0
    %1223 = vmatpush1.bf16.xpose.msra.mxu0 %v1220
    %1224 = vmatprep.subr.bf16.mxu0 0
    %1225 = vmatpush1.bf16.xpose.msra.mxu0 0
    %1226 = vmatprep.subr.bf16.mxu0 0
    %1227 = vmatpush1.bf16.xpose.msra.mxu0 0
    %1228 = vmatprep.subr.bf16.mxu0 0
    %1229 = vmatpush1.bf16.xpose.msra.mxu0 0
    %1230 = vmatprep.subr.bf16.mxu0 0
    %1231 = vmatpush1.bf16.xpose.msra.mxu0 0
    %1232 = vmatprep.subr.bf16.mxu0 0
    %1233 = vmatpush1.bf16.xpose.msra.mxu0 0
    %1234 = vmatprep.subr.bf16.mxu0 0
    %1235 = vmatpush1.bf16.xpose.msra.mxu0 0
    %1236 = vmatprep.subr.bf16.mxu0 0
    %1237 = vmatpush1.bf16.xpose.msra.mxu0 0
    %1238 = vmatprep.subr.bf16.mxu0 0
    %1239 = vmatpush1.bf16.xpose.msra.mxu0 0
    %1240 = vmatprep.subr.bf16.mxu0 0
    %1241 = vmatpush1.bf16.xpose.msra.mxu0 0
    %1242 = vmatprep.subr.bf16.mxu0 0
    %1243 = vmatpush1.bf16.xpose.msra.mxu0 0
    %1244 = vmatprep.subr.bf16.mxu0 0
    %1245 = vmatpush1.bf16.xpose.msra.mxu0 0
    %1246 = vmatprep.subr.bf16.mxu0 0
    %1247 = vmatpush1.bf16.xpose.msra.mxu0 0
    %1248 = vmatprep.subr.bf16.mxu0 0
    %1249 = vmatpush1.bf16.xpose.msra.mxu0 0
    %1250 = vmatprep.subr.bf16.mxu0 0
    %1251 = vmatpush1.bf16.xpose.msra.mxu0 0
    %1252 = vmatprep.subr.bf16.mxu0 0
    %1253 = vmatpush1.bf16.xpose.msra.mxu0 0
    %1254 = vmatprep.mubr.bf16.mxu0 0
    %1255 = vmatmul.mubr.bf16.gmra.mrb[0].mxu0 %v1217
    %v1256 = vpop.f32.mrb[0].mxu0
    %v1257 = vadd.f32 0.0, %v1256
    %v1258 = vpop.f32.mrb[0].mxu0
    %v1259 = vpop.f32.mrb[0].mxu0
    %v1260 = vpop.f32.mrb[0].mxu0
    %1261 = vdwg.mxu0
    %v1263 = vsel %vm1031, %v420, 0
    %v1266 = vsel %vm1031, %v724, 0
    %1268 = vmatprep.subr.bf16.mxu0 0
    %1269 = vmatpush1.bf16.xpose.msra.mxu0 %v1266
    %1270 = vmatprep.subr.bf16.mxu0 0
    %1271 = vmatpush1.bf16.xpose.msra.mxu0 0
    %1272 = vmatprep.subr.bf16.mxu0 0
    %1273 = vmatpush1.bf16.xpose.msra.mxu0 0
    %1274 = vmatprep.subr.bf16.mxu0 0
    %1275 = vmatpush1.bf16.xpose.msra.mxu0 0
    %1276 = vmatprep.subr.bf16.mxu0 0
    %1277 = vmatpush1.bf16.xpose.msra.mxu0 0
    %1278 = vmatprep.subr.bf16.mxu0 0
    %1279 = vmatpush1.bf16.xpose.msra.mxu0 0
    %1280 = vmatprep.subr.bf16.mxu0 0
    %1281 = vmatpush1.bf16.xpose.msra.mxu0 0
    %1282 = vmatprep.subr.bf16.mxu0 0
    %1283 = vmatpush1.bf16.xpose.msra.mxu0 0
    %1284 = vmatprep.subr.bf16.mxu0 0
    %1285 = vmatpush1.bf16.xpose.msra.mxu0 0
    %1286 = vmatprep.subr.bf16.mxu0 0
    %1287 = vmatpush1.bf16.xpose.msra.mxu0 0
    %1288 = vmatprep.subr.bf16.mxu0 0
    %1289 = vmatpush1.bf16.xpose.msra.mxu0 0
    %1290 = vmatprep.subr.bf16.mxu0 0
    %1291 = vmatpush1.bf16.xpose.msra.mxu0 0
    %1292 = vmatprep.subr.bf16.mxu0 0
    %1293 = vmatpush1.bf16.xpose.msra.mxu0 0
    %1294 = vmatprep.subr.bf16.mxu0 0
    %1295 = vmatpush1.bf16.xpose.msra.mxu0 0
    %1296 = vmatprep.subr.bf16.mxu0 0
    %1297 = vmatpush1.bf16.xpose.msra.mxu0 0
    %1298 = vmatprep.subr.bf16.mxu0 0
    %1299 = vmatpush1.bf16.xpose.msra.mxu0 0
    %1300 = vmatprep.mubr.bf16.mxu0 0
    %1301 = vmatmul.mubr.bf16.gmra.mrb[0].mxu0 %v1263
    %v1302 = vpop.f32.mrb[0].mxu0
    %v1303 = vadd.f32 0.0, %v1302
    %v1304 = vpop.f32.mrb[0].mxu0
    %v1305 = vpop.f32.mrb[0].mxu0
    %v1306 = vpop.f32.mrb[0].mxu0
    %1307 = vdwg.mxu0
    %v1309 = vsel %vm1031, %v421, 0
    %v1312 = vsel %vm1031, %v725, 0
    %1314 = vmatprep.subr.bf16.mxu0 0
    %1315 = vmatpush1.bf16.xpose.msra.mxu0 %v1312
    %1316 = vmatprep.subr.bf16.mxu0 0
    %1317 = vmatpush1.bf16.xpose.msra.mxu0 0
    %1318 = vmatprep.subr.bf16.mxu0 0
    %1319 = vmatpush1.bf16.xpose.msra.mxu0 0
    %1320 = vmatprep.subr.bf16.mxu0 0
    %1321 = vmatpush1.bf16.xpose.msra.mxu0 0
    %1322 = vmatprep.subr.bf16.mxu0 0
    %1323 = vmatpush1.bf16.xpose.msra.mxu0 0
    %1324 = vmatprep.subr.bf16.mxu0 0
    %1325 = vmatpush1.bf16.xpose.msra.mxu0 0
    %1326 = vmatprep.subr.bf16.mxu0 0
    %1327 = vmatpush1.bf16.xpose.msra.mxu0 0
    %1328 = vmatprep.subr.bf16.mxu0 0
    %1329 = vmatpush1.bf16.xpose.msra.mxu0 0
    %1330 = vmatprep.subr.bf16.mxu0 0
    %1331 = vmatpush1.bf16.xpose.msra.mxu0 0
    %1332 = vmatprep.subr.bf16.mxu0 0
    %1333 = vmatpush1.bf16.xpose.msra.mxu0 0
    %1334 = vmatprep.subr.bf16.mxu0 0
    %1335 = vmatpush1.bf16.xpose.msra.mxu0 0
    %1336 = vmatprep.subr.bf16.mxu0 0
    %1337 = vmatpush1.bf16.xpose.msra.mxu0 0
    %1338 = vmatprep.subr.bf16.mxu0 0
    %1339 = vmatpush1.bf16.xpose.msra.mxu0 0
    %1340 = vmatprep.subr.bf16.mxu0 0
    %1341 = vmatpush1.bf16.xpose.msra.mxu0 0
    %1342 = vmatprep.subr.bf16.mxu0 0
    %1343 = vmatpush1.bf16.xpose.msra.mxu0 0
    %1344 = vmatprep.subr.bf16.mxu0 0
    %1345 = vmatpush1.bf16.xpose.msra.mxu0 0
    %1346 = vmatprep.mubr.bf16.mxu0 0
    %1347 = vmatmul.mubr.bf16.gmra.mrb[0].mxu0 %v1309
    %v1348 = vpop.f32.mrb[0].mxu0
    %v1349 = vadd.f32 0.0, %v1348
    %v1350 = vpop.f32.mrb[0].mxu0
    %v1351 = vpop.f32.mrb[0].mxu0
    %v1352 = vpop.f32.mrb[0].mxu0
    %1353 = vdwg.mxu0
    %v1355 = vsel %vm1031, %v422, 0
    %v1358 = vsel %vm1031, %v726, 0
    %1360 = vmatprep.subr.bf16.mxu0 0
    %1361 = vmatpush1.bf16.xpose.msra.mxu0 %v1358
    %1362 = vmatprep.subr.bf16.mxu0 0
    %1363 = vmatpush1.bf16.xpose.msra.mxu0 0
    %1364 = vmatprep.subr.bf16.mxu0 0
    %1365 = vmatpush1.bf16.xpose.msra.mxu0 0
    %1366 = vmatprep.subr.bf16.mxu0 0
    %1367 = vmatpush1.bf16.xpose.msra.mxu0 0
    %1368 = vmatprep.subr.bf16.mxu0 0
    %1369 = vmatpush1.bf16.xpose.msra.mxu0 0
    %1370 = vmatprep.subr.bf16.mxu0 0
    %1371 = vmatpush1.bf16.xpose.msra.mxu0 0
    %1372 = vmatprep.subr.bf16.mxu0 0
    %1373 = vmatpush1.bf16.xpose.msra.mxu0 0
    %1374 = vmatprep.subr.bf16.mxu0 0
    %1375 = vmatpush1.bf16.xpose.msra.mxu0 0
    %1376 = vmatprep.subr.bf16.mxu0 0
    %1377 = vmatpush1.bf16.xpose.msra.mxu0 0
    %1378 = vmatprep.subr.bf16.mxu0 0
    %1379 = vmatpush1.bf16.xpose.msra.mxu0 0
    %1380 = vmatprep.subr.bf16.mxu0 0
    %1381 = vmatpush1.bf16.xpose.msra.mxu0 0
    %1382 = vmatprep.subr.bf16.mxu0 0
    %1383 = vmatpush1.bf16.xpose.msra.mxu0 0
    %1384 = vmatprep.subr.bf16.mxu0 0
    %1385 = vmatpush1.bf16.xpose.msra.mxu0 0
    %1386 = vmatprep.subr.bf16.mxu0 0
    %1387 = vmatpush1.bf16.xpose.msra.mxu0 0
    %1388 = vmatprep.subr.bf16.mxu0 0
    %1389 = vmatpush1.bf16.xpose.msra.mxu0 0
    %1390 = vmatprep.subr.bf16.mxu0 0
    %1391 = vmatpush1.bf16.xpose.msra.mxu0 0
    %1392 = vmatprep.mubr.bf16.mxu0 0
    %1393 = vmatmul.mubr.bf16.gmra.mrb[0].mxu0 %v1355
    %v1394 = vpop.f32.mrb[0].mxu0
    %v1395 = vadd.f32 0.0, %v1394
    %v1396 = vpop.f32.mrb[0].mxu0
    %v1397 = vpop.f32.mrb[0].mxu0
    %v1398 = vpop.f32.mrb[0].mxu0
    %1399 = vdwg.mxu0
    %v1400 = vmul.f32 %v1073, 0.35355338
    %v1401 = vmul.f32 %v1119, 0.35355338
    %v1402 = vmul.f32 %v1165, 0.35355338
    %v1403 = vmul.f32 %v1211, 0.35355338
    %v1404 = vmul.f32 %v1257, 0.35355338
    %v1405 = vmul.f32 %v1303, 0.35355338
    %v1406 = vmul.f32 %v1349, 0.35355338
    %v1407 = vmul.f32 %v1395, 0.35355338
    %v1408 = vsel %vm1031, %v1400, -inf
    %1409 = vmax.xlane.f32.xlu0 %v1408
    %v1410 = vpop.xlane.xlu0 %1409
    %v1411 = vsel %vm1031, %v1401, -inf
    %1412 = vmax.xlane.f32.xlu0 %v1411
    %v1413 = vpop.xlane.xlu0 %1412
    %v1414 = vsel %vm1031, %v1402, -inf
    %1415 = vmax.xlane.f32.xlu0 %v1414
    %v1416 = vpop.xlane.xlu0 %1415
    %v1417 = vsel %vm1031, %v1403, -inf
    %1418 = vmax.xlane.f32.xlu0 %v1417
    %v1419 = vpop.xlane.xlu0 %1418
    %v1420 = vsel %vm1031, %v1404, -inf
    %1421 = vmax.xlane.f32.xlu0 %v1420
    %v1422 = vpop.xlane.xlu0 %1421
    %v1423 = vsel %vm1031, %v1405, -inf
    %1424 = vmax.xlane.f32.xlu0 %v1423
    %v1425 = vpop.xlane.xlu0 %1424
    %v1426 = vsel %vm1031, %v1406, -inf
    %1427 = vmax.xlane.f32.xlu0 %v1426
    %v1428 = vpop.xlane.xlu0 %1427
    %v1429 = vsel %vm1031, %v1407, -inf
    %1430 = vmax.xlane.f32.xlu0 %v1429
    %v1431 = vpop.xlane.xlu0 %1430
    %v1432 = vsub.f32 %v1400, %v1410
    %v1433 = vsub.f32 %v1401, %v1413
    %v1434 = vsub.f32 %v1402, %v1416
    %v1435 = vsub.f32 %v1403, %v1419
    %v1436 = vsub.f32 %v1404, %v1422
    %v1437 = vsub.f32 %v1405, %v1425
    %v1438 = vsub.f32 %v1406, %v1428
    %v1439 = vsub.f32 %v1407, %v1431
    %v1440 = vmul.f32 %v1432, 1.442695
    %v1441 = vpow.pop %v1440
    %v1442 = vmul.f32 %v1433, 1.442695
    %v1443 = vpow.pop %v1442
    %v1444 = vmul.f32 %v1434, 1.442695
    %v1445 = vpow.pop %v1444
    %v1446 = vmul.f32 %v1435, 1.442695
    %v1447 = vpow.pop %v1446
    %v1448 = vmul.f32 %v1436, 1.442695
    %v1449 = vpow.pop %v1448
    %v1450 = vmul.f32 %v1437, 1.442695
    %v1451 = vpow.pop %v1450
    %v1452 = vmul.f32 %v1438, 1.442695
    %v1453 = vpow.pop %v1452
    %v1454 = vmul.f32 %v1439, 1.442695
    %v1455 = vpow.pop %v1454
    %v1456 = vsel %vm1031, %v1441, 0.0
    %1457 = vadd.xlane.f32.xlu0 %v1456
    %v1458 = vpop.xlane.xlu0 %1457
    %v1459 = vsel %vm1031, %v1443, 0.0
    %1460 = vadd.xlane.f32.xlu0 %v1459
    %v1461 = vpop.xlane.xlu0 %1460
    %v1462 = vsel %vm1031, %v1445, 0.0
    %1463 = vadd.xlane.f32.xlu0 %v1462
    %v1464 = vpop.xlane.xlu0 %1463
    %v1465 = vsel %vm1031, %v1447, 0.0
    %1466 = vadd.xlane.f32.xlu0 %v1465
    %v1467 = vpop.xlane.xlu0 %1466
    %v1468 = vsel %vm1031, %v1449, 0.0
    %1469 = vadd.xlane.f32.xlu0 %v1468
    %v1470 = vpop.xlane.xlu0 %1469
    %v1471 = vsel %vm1031, %v1451, 0.0
    %1472 = vadd.xlane.f32.xlu0 %v1471
    %v1473 = vpop.xlane.xlu0 %1472
    %v1474 = vsel %vm1031, %v1453, 0.0
    %1475 = vadd.xlane.f32.xlu0 %v1474
    %v1476 = vpop.xlane.xlu0 %1475
    %v1477 = vsel %vm1031, %v1455, 0.0
    %1478 = vadd.xlane.f32.xlu0 %v1477
    %v1479 = vpop.xlane.xlu0 %1478
    %v1480 = vrcp.pop %v1458
    %v1481 = vrcp.pop %v1461
    %v1482 = vrcp.pop %v1464
    %v1483 = vrcp.pop %v1467
    %v1484 = vrcp.pop %v1470
    %v1485 = vrcp.pop %v1473
    %v1486 = vrcp.pop %v1476
    %v1487 = vrcp.pop %v1479
    %v1488 = vmul.f32 %v1441, %v1480
    %v1489 = vmul.f32 %v1443, %v1481
    %v1490 = vmul.f32 %v1445, %v1482
    %v1491 = vmul.f32 %v1447, %v1483
    %v1492 = vmul.f32 %v1449, %v1484
    %v1493 = vmul.f32 %v1451, %v1485
    %v1494 = vmul.f32 %v1453, %v1486
    %v1495 = vmul.f32 %v1455, %v1487
    %v1496 = vpack.c.bf16 %v1488, %v1488
    %v1497 = vpack.c.bf16 %v1489, %v1489
    %v1498 = vpack.c.bf16 %v1490, %v1490
    %v1499 = vpack.c.bf16 %v1491, %v1491
    %v1500 = vpack.c.bf16 %v1492, %v1492
    %v1501 = vpack.c.bf16 %v1493, %v1493
    %v1502 = vpack.c.bf16 %v1494, %v1494
    %v1503 = vpack.c.bf16 %v1495, %v1495
    %v1505 = vsel %vm1031, %v1496, 0
    %vm1507 = vcmask 1043456
    %v1509 = vsel %vm1507, %v1023, 0
    %1511 = vmatprep.subr.bf16.mxu0 0
    %1512 = vmatpush1.bf16.msra.mxu0 %v1509
    %1513 = vmatprep.subr.bf16.mxu0 0
    %1514 = vmatpush1.bf16.msra.mxu0 0
    %1515 = vmatprep.subr.bf16.mxu0 0
    %1516 = vmatpush1.bf16.msra.mxu0 0
    %1517 = vmatprep.subr.bf16.mxu0 0
    %1518 = vmatpush1.bf16.msra.mxu0 0
    %1519 = vmatprep.subr.bf16.mxu0 0
    %1520 = vmatpush1.bf16.msra.mxu0 0
    %1521 = vmatprep.subr.bf16.mxu0 0
    %1522 = vmatpush1.bf16.msra.mxu0 0
    %1523 = vmatprep.subr.bf16.mxu0 0
    %1524 = vmatpush1.bf16.msra.mxu0 0
    %1525 = vmatprep.subr.bf16.mxu0 0
    %1526 = vmatpush1.bf16.msra.mxu0 0
    %1527 = vmatprep.subr.bf16.mxu0 0
    %1528 = vmatpush1.bf16.msra.mxu0 0
    %1529 = vmatprep.subr.bf16.mxu0 0
    %1530 = vmatpush1.bf16.msra.mxu0 0
    %1531 = vmatprep.subr.bf16.mxu0 0
    %1532 = vmatpush1.bf16.msra.mxu0 0
    %1533 = vmatprep.subr.bf16.mxu0 0
    %1534 = vmatpush1.bf16.msra.mxu0 0
    %1535 = vmatprep.subr.bf16.mxu0 0
    %1536 = vmatpush1.bf16.msra.mxu0 0
    %1537 = vmatprep.subr.bf16.mxu0 0
    %1538 = vmatpush1.bf16.msra.mxu0 0
    %1539 = vmatprep.subr.bf16.mxu0 0
    %1540 = vmatpush1.bf16.msra.mxu0 0
    %1541 = vmatprep.subr.bf16.mxu0 0
    %1542 = vmatpush1.bf16.msra.mxu0 0
    %1543 = vmatprep.mubr.bf16.mxu0 0
    %1544 = vmatmul.mubr.bf16.gmra.mrb[0].mxu0 %v1505
    %v1545 = vpop.f32.mrb[0].mxu0
    %v1546 = vadd.f32 0.0, %v1545
    %v1547 = vpop.f32.mrb[0].mxu0
    %v1548 = vpop.f32.mrb[0].mxu0
    %v1549 = vpop.f32.mrb[0].mxu0
    %1550 = vdwg.mxu0
    %v1552 = vsel %vm1031, %v1497, 0
    %v1555 = vsel %vm1507, %v1024, 0
    %1557 = vmatprep.subr.bf16.mxu0 0
    %1558 = vmatpush1.bf16.msra.mxu0 %v1555
    %1559 = vmatprep.subr.bf16.mxu0 0
    %1560 = vmatpush1.bf16.msra.mxu0 0
    %1561 = vmatprep.subr.bf16.mxu0 0
    %1562 = vmatpush1.bf16.msra.mxu0 0
    %1563 = vmatprep.subr.bf16.mxu0 0
    %1564 = vmatpush1.bf16.msra.mxu0 0
    %1565 = vmatprep.subr.bf16.mxu0 0
    %1566 = vmatpush1.bf16.msra.mxu0 0
    %1567 = vmatprep.subr.bf16.mxu0 0
    %1568 = vmatpush1.bf16.msra.mxu0 0
    %1569 = vmatprep.subr.bf16.mxu0 0
    %1570 = vmatpush1.bf16.msra.mxu0 0
    %1571 = vmatprep.subr.bf16.mxu0 0
    %1572 = vmatpush1.bf16.msra.mxu0 0
    %1573 = vmatprep.subr.bf16.mxu0 0
    %1574 = vmatpush1.bf16.msra.mxu0 0
    %1575 = vmatprep.subr.bf16.mxu0 0
    %1576 = vmatpush1.bf16.msra.mxu0 0
    %1577 = vmatprep.subr.bf16.mxu0 0
    %1578 = vmatpush1.bf16.msra.mxu0 0
    %1579 = vmatprep.subr.bf16.mxu0 0
    %1580 = vmatpush1.bf16.msra.mxu0 0
    %1581 = vmatprep.subr.bf16.mxu0 0
    %1582 = vmatpush1.bf16.msra.mxu0 0
    %1583 = vmatprep.subr.bf16.mxu0 0
    %1584 = vmatpush1.bf16.msra.mxu0 0
    %1585 = vmatprep.subr.bf16.mxu0 0
    %1586 = vmatpush1.bf16.msra.mxu0 0
    %1587 = vmatprep.subr.bf16.mxu0 0
    %1588 = vmatpush1.bf16.msra.mxu0 0
    %1589 = vmatprep.mubr.bf16.mxu0 0
    %1590 = vmatmul.mubr.bf16.gmra.mrb[0].mxu0 %v1552
    %v1591 = vpop.f32.mrb[0].mxu0
    %v1592 = vadd.f32 0.0, %v1591
    %v1593 = vpop.f32.mrb[0].mxu0
    %v1594 = vpop.f32.mrb[0].mxu0
    %v1595 = vpop.f32.mrb[0].mxu0
    %1596 = vdwg.mxu0
    %v1598 = vsel %vm1031, %v1498, 0
    %v1601 = vsel %vm1507, %v1025, 0
    %1603 = vmatprep.subr.bf16.mxu0 0
    %1604 = vmatpush1.bf16.msra.mxu0 %v1601
    %1605 = vmatprep.subr.bf16.mxu0 0
    %1606 = vmatpush1.bf16.msra.mxu0 0
    %1607 = vmatprep.subr.bf16.mxu0 0
    %1608 = vmatpush1.bf16.msra.mxu0 0
    %1609 = vmatprep.subr.bf16.mxu0 0
    %1610 = vmatpush1.bf16.msra.mxu0 0
    %1611 = vmatprep.subr.bf16.mxu0 0
    %1612 = vmatpush1.bf16.msra.mxu0 0
    %1613 = vmatprep.subr.bf16.mxu0 0
    %1614 = vmatpush1.bf16.msra.mxu0 0
    %1615 = vmatprep.subr.bf16.mxu0 0
    %1616 = vmatpush1.bf16.msra.mxu0 0
    %1617 = vmatprep.subr.bf16.mxu0 0
    %1618 = vmatpush1.bf16.msra.mxu0 0
    %1619 = vmatprep.subr.bf16.mxu0 0
    %1620 = vmatpush1.bf16.msra.mxu0 0
    %1621 = vmatprep.subr.bf16.mxu0 0
    %1622 = vmatpush1.bf16.msra.mxu0 0
    %1623 = vmatprep.subr.bf16.mxu0 0
    %1624 = vmatpush1.bf16.msra.mxu0 0
    %1625 = vmatprep.subr.bf16.mxu0 0
    %1626 = vmatpush1.bf16.msra.mxu0 0
    %1627 = vmatprep.subr.bf16.mxu0 0
    %1628 = vmatpush1.bf16.msra.mxu0 0
    %1629 = vmatprep.subr.bf16.mxu0 0
    %1630 = vmatpush1.bf16.msra.mxu0 0
    %1631 = vmatprep.subr.bf16.mxu0 0
    %1632 = vmatpush1.bf16.msra.mxu0 0
    %1633 = vmatprep.subr.bf16.mxu0 0
    %1634 = vmatpush1.bf16.msra.mxu0 0
    %1635 = vmatprep.mubr.bf16.mxu0 0
    %1636 = vmatmul.mubr.bf16.gmra.mrb[0].mxu0 %v1598
    %v1637 = vpop.f32.mrb[0].mxu0
    %v1638 = vadd.f32 0.0, %v1637
    %v1639 = vpop.f32.mrb[0].mxu0
    %v1640 = vpop.f32.mrb[0].mxu0
    %v1641 = vpop.f32.mrb[0].mxu0
    %1642 = vdwg.mxu0
    %v1644 = vsel %vm1031, %v1499, 0
    %v1647 = vsel %vm1507, %v1026, 0
    %1649 = vmatprep.subr.bf16.mxu0 0
    %1650 = vmatpush1.bf16.msra.mxu0 %v1647
    %1651 = vmatprep.subr.bf16.mxu0 0
    %1652 = vmatpush1.bf16.msra.mxu0 0
    %1653 = vmatprep.subr.bf16.mxu0 0
    %1654 = vmatpush1.bf16.msra.mxu0 0
    %1655 = vmatprep.subr.bf16.mxu0 0
    %1656 = vmatpush1.bf16.msra.mxu0 0
    %1657 = vmatprep.subr.bf16.mxu0 0
    %1658 = vmatpush1.bf16.msra.mxu0 0
    %1659 = vmatprep.subr.bf16.mxu0 0
    %1660 = vmatpush1.bf16.msra.mxu0 0
    %1661 = vmatprep.subr.bf16.mxu0 0
    %1662 = vmatpush1.bf16.msra.mxu0 0
    %1663 = vmatprep.subr.bf16.mxu0 0
    %1664 = vmatpush1.bf16.msra.mxu0 0
    %1665 = vmatprep.subr.bf16.mxu0 0
    %1666 = vmatpush1.bf16.msra.mxu0 0
    %1667 = vmatprep.subr.bf16.mxu0 0
    %1668 = vmatpush1.bf16.msra.mxu0 0
    %1669 = vmatprep.subr.bf16.mxu0 0
    %1670 = vmatpush1.bf16.msra.mxu0 0
    %1671 = vmatprep.subr.bf16.mxu0 0
    %1672 = vmatpush1.bf16.msra.mxu0 0
    %1673 = vmatprep.subr.bf16.mxu0 0
    %1674 = vmatpush1.bf16.msra.mxu0 0
    %1675 = vmatprep.subr.bf16.mxu0 0
    %1676 = vmatpush1.bf16.msra.mxu0 0
    %1677 = vmatprep.subr.bf16.mxu0 0
    %1678 = vmatpush1.bf16.msra.mxu0 0
    %1679 = vmatprep.subr.bf16.mxu0 0
    %1680 = vmatpush1.bf16.msra.mxu0 0
    %1681 = vmatprep.mubr.bf16.mxu0 0
    %1682 = vmatmul.mubr.bf16.gmra.mrb[0].mxu0 %v1644
    %v1683 = vpop.f32.mrb[0].mxu0
    %v1684 = vadd.f32 0.0, %v1683
    %v1685 = vpop.f32.mrb[0].mxu0
    %v1686 = vpop.f32.mrb[0].mxu0
    %v1687 = vpop.f32.mrb[0].mxu0
    %1688 = vdwg.mxu0
    %v1690 = vsel %vm1031, %v1500, 0
    %v1693 = vsel %vm1507, %v1027, 0
    %1695 = vmatprep.subr.bf16.mxu0 0
    %1696 = vmatpush1.bf16.msra.mxu0 %v1693
    %1697 = vmatprep.subr.bf16.mxu0 0
    %1698 = vmatpush1.bf16.msra.mxu0 0
    %1699 = vmatprep.subr.bf16.mxu0 0
    %1700 = vmatpush1.bf16.msra.mxu0 0
    %1701 = vmatprep.subr.bf16.mxu0 0
    %1702 = vmatpush1.bf16.msra.mxu0 0
    %1703 = vmatprep.subr.bf16.mxu0 0
    %1704 = vmatpush1.bf16.msra.mxu0 0
    %1705 = vmatprep.subr.bf16.mxu0 0
    %1706 = vmatpush1.bf16.msra.mxu0 0
    %1707 = vmatprep.subr.bf16.mxu0 0
    %1708 = vmatpush1.bf16.msra.mxu0 0
    %1709 = vmatprep.subr.bf16.mxu0 0
    %1710 = vmatpush1.bf16.msra.mxu0 0
    %1711 = vmatprep.subr.bf16.mxu0 0
    %1712 = vmatpush1.bf16.msra.mxu0 0
    %1713 = vmatprep.subr.bf16.mxu0 0
    %1714 = vmatpush1.bf16.msra.mxu0 0
    %1715 = vmatprep.subr.bf16.mxu0 0
    %1716 = vmatpush1.bf16.msra.mxu0 0
    %1717 = vmatprep.subr.bf16.mxu0 0
    %1718 = vmatpush1.bf16.msra.mxu0 0
    %1719 = vmatprep.subr.bf16.mxu0 0
    %1720 = vmatpush1.bf16.msra.mxu0 0
    %1721 = vmatprep.subr.bf16.mxu0 0
    %1722 = vmatpush1.bf16.msra.mxu0 0
    %1723 = vmatprep.subr.bf16.mxu0 0
    %1724 = vmatpush1.bf16.msra.mxu0 0
    %1725 = vmatprep.subr.bf16.mxu0 0
    %1726 = vmatpush1.bf16.msra.mxu0 0
    %1727 = vmatprep.mubr.bf16.mxu0 0
    %1728 = vmatmul.mubr.bf16.gmra.mrb[0].mxu0 %v1690
    %v1729 = vpop.f32.mrb[0].mxu0
    %v1730 = vadd.f32 0.0, %v1729
    %v1731 = vpop.f32.mrb[0].mxu0
    %v1732 = vpop.f32.mrb[0].mxu0
    %v1733 = vpop.f32.mrb[0].mxu0
    %1734 = vdwg.mxu0
    %v1736 = vsel %vm1031, %v1501, 0
    %v1739 = vsel %vm1507, %v1028, 0
    %1741 = vmatprep.subr.bf16.mxu0 0
    %1742 = vmatpush1.bf16.msra.mxu0 %v1739
    %1743 = vmatprep.subr.bf16.mxu0 0
    %1744 = vmatpush1.bf16.msra.mxu0 0
    %1745 = vmatprep.subr.bf16.mxu0 0
    %1746 = vmatpush1.bf16.msra.mxu0 0
    %1747 = vmatprep.subr.bf16.mxu0 0
    %1748 = vmatpush1.bf16.msra.mxu0 0
    %1749 = vmatprep.subr.bf16.mxu0 0
    %1750 = vmatpush1.bf16.msra.mxu0 0
    %1751 = vmatprep.subr.bf16.mxu0 0
    %1752 = vmatpush1.bf16.msra.mxu0 0
    %1753 = vmatprep.subr.bf16.mxu0 0
    %1754 = vmatpush1.bf16.msra.mxu0 0
    %1755 = vmatprep.subr.bf16.mxu0 0
    %1756 = vmatpush1.bf16.msra.mxu0 0
    %1757 = vmatprep.subr.bf16.mxu0 0
    %1758 = vmatpush1.bf16.msra.mxu0 0
    %1759 = vmatprep.subr.bf16.mxu0 0
    %1760 = vmatpush1.bf16.msra.mxu0 0
    %1761 = vmatprep.subr.bf16.mxu0 0
    %1762 = vmatpush1.bf16.msra.mxu0 0
    %1763 = vmatprep.subr.bf16.mxu0 0
    %1764 = vmatpush1.bf16.msra.mxu0 0
    %1765 = vmatprep.subr.bf16.mxu0 0
    %1766 = vmatpush1.bf16.msra.mxu0 0
    %1767 = vmatprep.subr.bf16.mxu0 0
    %1768 = vmatpush1.bf16.msra.mxu0 0
    %1769 = vmatprep.subr.bf16.mxu0 0
    %1770 = vmatpush1.bf16.msra.mxu0 0
    %1771 = vmatprep.subr.bf16.mxu0 0
    %1772 = vmatpush1.bf16.msra.mxu0 0
    %1773 = vmatprep.mubr.bf16.mxu0 0
    %1774 = vmatmul.mubr.bf16.gmra.mrb[0].mxu0 %v1736
    %v1775 = vpop.f32.mrb[0].mxu0
    %v1776 = vadd.f32 0.0, %v1775
    %v1777 = vpop.f32.mrb[0].mxu0
    %v1778 = vpop.f32.mrb[0].mxu0
    %v1779 = vpop.f32.mrb[0].mxu0
    %1780 = vdwg.mxu0
    %v1782 = vsel %vm1031, %v1502, 0
    %v1785 = vsel %vm1507, %v1029, 0
    %1787 = vmatprep.subr.bf16.mxu0 0
    %1788 = vmatpush1.bf16.msra.mxu0 %v1785
    %1789 = vmatprep.subr.bf16.mxu0 0
    %1790 = vmatpush1.bf16.msra.mxu0 0
    %1791 = vmatprep.subr.bf16.mxu0 0
    %1792 = vmatpush1.bf16.msra.mxu0 0
    %1793 = vmatprep.subr.bf16.mxu0 0
    %1794 = vmatpush1.bf16.msra.mxu0 0
    %1795 = vmatprep.subr.bf16.mxu0 0
    %1796 = vmatpush1.bf16.msra.mxu0 0
    %1797 = vmatprep.subr.bf16.mxu0 0
    %1798 = vmatpush1.bf16.msra.mxu0 0
    %1799 = vmatprep.subr.bf16.mxu0 0
    %1800 = vmatpush1.bf16.msra.mxu0 0
    %1801 = vmatprep.subr.bf16.mxu0 0
    %1802 = vmatpush1.bf16.msra.mxu0 0
    %1803 = vmatprep.subr.bf16.mxu0 0
    %1804 = vmatpush1.bf16.msra.mxu0 0
    %1805 = vmatprep.subr.bf16.mxu0 0
    %1806 = vmatpush1.bf16.msra.mxu0 0
    %1807 = vmatprep.subr.bf16.mxu0 0
    %1808 = vmatpush1.bf16.msra.mxu0 0
    %1809 = vmatprep.subr.bf16.mxu0 0
    %1810 = vmatpush1.bf16.msra.mxu0 0
    %1811 = vmatprep.subr.bf16.mxu0 0
    %1812 = vmatpush1.bf16.msra.mxu0 0
    %1813 = vmatprep.subr.bf16.mxu0 0
    %1814 = vmatpush1.bf16.msra.mxu0 0
    %1815 = vmatprep.subr.bf16.mxu0 0
    %1816 = vmatpush1.bf16.msra.mxu0 0
    %1817 = vmatprep.subr.bf16.mxu0 0
    %1818 = vmatpush1.bf16.msra.mxu0 0
    %1819 = vmatprep.mubr.bf16.mxu0 0
    %1820 = vmatmul.mubr.bf16.gmra.mrb[0].mxu0 %v1782
    %v1821 = vpop.f32.mrb[0].mxu0
    %v1822 = vadd.f32 0.0, %v1821
    %v1823 = vpop.f32.mrb[0].mxu0
    %v1824 = vpop.f32.mrb[0].mxu0
    %v1825 = vpop.f32.mrb[0].mxu0
    %1826 = vdwg.mxu0
    %v1828 = vsel %vm1031, %v1503, 0
    %v1831 = vsel %vm1507, %v1030, 0
    %1833 = vmatprep.subr.bf16.mxu0 0
    %1834 = vmatpush1.bf16.msra.mxu0 %v1831
    %1835 = vmatprep.subr.bf16.mxu0 0
    %1836 = vmatpush1.bf16.msra.mxu0 0
    %1837 = vmatprep.subr.bf16.mxu0 0
    %1838 = vmatpush1.bf16.msra.mxu0 0
    %1839 = vmatprep.subr.bf16.mxu0 0
    %1840 = vmatpush1.bf16.msra.mxu0 0
    %1841 = vmatprep.subr.bf16.mxu0 0
    %1842 = vmatpush1.bf16.msra.mxu0 0
    %1843 = vmatprep.subr.bf16.mxu0 0
    %1844 = vmatpush1.bf16.msra.mxu0 0
    %1845 = vmatprep.subr.bf16.mxu0 0
    %1846 = vmatpush1.bf16.msra.mxu0 0
    %1847 = vmatprep.subr.bf16.mxu0 0
    %1848 = vmatpush1.bf16.msra.mxu0 0
    %1849 = vmatprep.subr.bf16.mxu0 0
    %1850 = vmatpush1.bf16.msra.mxu0 0
    %1851 = vmatprep.subr.bf16.mxu0 0
    %1852 = vmatpush1.bf16.msra.mxu0 0
    %1853 = vmatprep.subr.bf16.mxu0 0
    %1854 = vmatpush1.bf16.msra.mxu0 0
    %1855 = vmatprep.subr.bf16.mxu0 0
    %1856 = vmatpush1.bf16.msra.mxu0 0
    %1857 = vmatprep.subr.bf16.mxu0 0
    %1858 = vmatpush1.bf16.msra.mxu0 0
    %1859 = vmatprep.subr.bf16.mxu0 0
    %1860 = vmatpush1.bf16.msra.mxu0 0
    %1861 = vmatprep.subr.bf16.mxu0 0
    %1862 = vmatpush1.bf16.msra.mxu0 0
    %1863 = vmatprep.subr.bf16.mxu0 0
    %1864 = vmatpush1.bf16.msra.mxu0 0
    %1865 = vmatprep.mubr.bf16.mxu0 0
    %1866 = vmatmul.mubr.bf16.gmra.mrb[0].mxu0 %v1828
    %v1867 = vpop.f32.mrb[0].mxu0
    %v1868 = vadd.f32 0.0, %v1867
    %v1869 = vpop.f32.mrb[0].mxu0
    %v1870 = vpop.f32.mrb[0].mxu0
    %v1871 = vpop.f32.mrb[0].mxu0
    %1872 = vdwg.mxu0
    %v1873 = vcombine.low %v1546, %v1638
    %v1874 = vcombine.high %v1546, %v1638
    %v1876 = vunpack.c.l.s4 1983009808
    %v1877 = vunpack.c.0.s8 %v1876
    %v1878 = vlaneseq
    %v1879 = vshrl.u32 %v1878, 7
    %v1880 = vsub.s32 %v1877, %v1879
    %v1881 = vrot.slane %v1873, %v1880
    %v1883 = vunpack.c.l.s4 1983009808
    %v1884 = vunpack.c.0.s8 %v1883
    %v1885 = vlaneseq
    %v1886 = vshrl.u32 %v1885, 7
    %v1887 = vsub.s32 %v1884, %v1886
    %v1888 = vrot.slane %v1874, %v1887
    %v1889 = vcombine.low %v1592, %v1684
    %v1890 = vcombine.high %v1592, %v1684
    %v1892 = vunpack.c.l.s4 1983009808
    %v1893 = vunpack.c.0.s8 %v1892
    %v1894 = vlaneseq
    %v1895 = vshrl.u32 %v1894, 7
    %v1896 = vsub.s32 %v1893, %v1895
    %v1897 = vrot.slane %v1889, %v1896
    %v1899 = vunpack.c.l.s4 1983009808
    %v1900 = vunpack.c.0.s8 %v1899
    %v1901 = vlaneseq
    %v1902 = vshrl.u32 %v1901, 7
    %v1903 = vsub.s32 %v1900, %v1902
    %v1904 = vrot.slane %v1890, %v1903
    %v1905 = vcombine.low %v1881, %v1897
    %v1906 = vcombine.high %v1881, %v1897
    %v1908 = vunpack.c.l.s4 1934713408
    %v1909 = vunpack.c.0.s8 %v1908
    %v1910 = vlaneseq
    %v1911 = vshrl.u32 %v1910, 7
    %v1912 = vsub.s32 %v1909, %v1911
    %v1913 = vrot.slane %v1905, %v1912
    %v1915 = vunpack.c.l.s4 1934713408
    %v1916 = vunpack.c.0.s8 %v1915
    %v1917 = vlaneseq
    %v1918 = vshrl.u32 %v1917, 7
    %v1919 = vsub.s32 %v1916, %v1918
    %v1920 = vrot.slane %v1906, %v1919
    %v1921 = vcombine.low %v1888, %v1904
    %v1922 = vcombine.high %v1888, %v1904
    %v1924 = vunpack.c.l.s4 1934713408
    %v1925 = vunpack.c.0.s8 %v1924
    %v1926 = vlaneseq
    %v1927 = vshrl.u32 %v1926, 7
    %v1928 = vsub.s32 %v1925, %v1927
    %v1929 = vrot.slane %v1921, %v1928
    %v1931 = vunpack.c.l.s4 1934713408
    %v1932 = vunpack.c.0.s8 %v1931
    %v1933 = vlaneseq
    %v1934 = vshrl.u32 %v1933, 7
    %v1935 = vsub.s32 %v1932, %v1934
    %v1936 = vrot.slane %v1922, %v1935
    %v1937 = vcombine.high %v1913, 0.0
    %v1938 = vcombine.high %v1920, 0.0
    %v1939 = vcombine.high %v1929, 0.0
    %v1940 = vcombine.high %v1936, 0.0
    %v1941 = vcombine.low %v1730, %v1822
    %v1942 = vcombine.high %v1730, %v1822
    %v1944 = vunpack.c.l.s4 1983009808
    %v1945 = vunpack.c.0.s8 %v1944
    %v1946 = vlaneseq
    %v1947 = vshrl.u32 %v1946, 7
    %v1948 = vsub.s32 %v1945, %v1947
    %v1949 = vrot.slane %v1941, %v1948
    %v1951 = vunpack.c.l.s4 1983009808
    %v1952 = vunpack.c.0.s8 %v1951
    %v1953 = vlaneseq
    %v1954 = vshrl.u32 %v1953, 7
    %v1955 = vsub.s32 %v1952, %v1954
    %v1956 = vrot.slane %v1942, %v1955
    %v1957 = vcombine.low %v1776, %v1868
    %v1958 = vcombine.high %v1776, %v1868
    %v1960 = vunpack.c.l.s4 1983009808
    %v1961 = vunpack.c.0.s8 %v1960
    %v1962 = vlaneseq
    %v1963 = vshrl.u32 %v1962, 7
    %v1964 = vsub.s32 %v1961, %v1963
    %v1965 = vrot.slane %v1957, %v1964
    %v1967 = vunpack.c.l.s4 1983009808
    %v1968 = vunpack.c.0.s8 %v1967
    %v1969 = vlaneseq
    %v1970 = vshrl.u32 %v1969, 7
    %v1971 = vsub.s32 %v1968, %v1970
    %v1972 = vrot.slane %v1958, %v1971
    %v1973 = vcombine.low %v1949, %v1965
    %v1974 = vcombine.high %v1949, %v1965
    %v1976 = vunpack.c.l.s4 1934713408
    %v1977 = vunpack.c.0.s8 %v1976
    %v1978 = vlaneseq
    %v1979 = vshrl.u32 %v1978, 7
    %v1980 = vsub.s32 %v1977, %v1979
    %v1981 = vrot.slane %v1973, %v1980
    %v1983 = vunpack.c.l.s4 1934713408
    %v1984 = vunpack.c.0.s8 %v1983
    %v1985 = vlaneseq
    %v1986 = vshrl.u32 %v1985, 7
    %v1987 = vsub.s32 %v1984, %v1986
    %v1988 = vrot.slane %v1974, %v1987
    %v1989 = vcombine.low %v1956, %v1972
    %v1990 = vcombine.high %v1956, %v1972
    %v1992 = vunpack.c.l.s4 1934713408
    %v1993 = vunpack.c.0.s8 %v1992
    %v1994 = vlaneseq
    %v1995 = vshrl.u32 %v1994, 7
    %v1996 = vsub.s32 %v1993, %v1995
    %v1997 = vrot.slane %v1989, %v1996
    %v1999 = vunpack.c.l.s4 1934713408
    %v2000 = vunpack.c.0.s8 %v1999
    %v2001 = vlaneseq
    %v2002 = vshrl.u32 %v2001, 7
    %v2003 = vsub.s32 %v2000, %v2002
    %v2004 = vrot.slane %v1990, %v2003
    %v2005 = vcombine.high %v1981, 0.0
    %v2006 = vcombine.high %v1988, 0.0
    %v2007 = vcombine.high %v1997, 0.0
    %v2008 = vcombine.high %v2004, 0.0
    %v2009 = vcombine.low %v1913, %v1920
    %v2011 = vunpack.c.l.s4 1983009808
    %v2012 = vunpack.c.0.s8 %v2011
    %v2013 = vlaneseq
    %v2014 = vshrl.u32 %v2013, 7
    %v2015 = vsub.s32 %v2012, %v2014
    %v2016 = vrot.slane %v2009, %v2015
    %v2017 = vcombine.low %v1937, %v1938
    %v2019 = vunpack.c.l.s4 1983009808
    %v2020 = vunpack.c.0.s8 %v2019
    %v2021 = vlaneseq
    %v2022 = vshrl.u32 %v2021, 7
    %v2023 = vsub.s32 %v2020, %v2022
    %v2024 = vrot.slane %v2017, %v2023
    %v2025 = vcombine.low %v1929, %v1936
    %v2027 = vunpack.c.l.s4 1983009808
    %v2028 = vunpack.c.0.s8 %v2027
    %v2029 = vlaneseq
    %v2030 = vshrl.u32 %v2029, 7
    %v2031 = vsub.s32 %v2028, %v2030
    %v2032 = vrot.slane %v2025, %v2031
    %v2033 = vcombine.low %v1939, %v1940
    %v2035 = vunpack.c.l.s4 1983009808
    %v2036 = vunpack.c.0.s8 %v2035
    %v2037 = vlaneseq
    %v2038 = vshrl.u32 %v2037, 7
    %v2039 = vsub.s32 %v2036, %v2038
    %v2040 = vrot.slane %v2033, %v2039
    %v2041 = vcombine.low %v2016, %v2024
    %v2042 = vcombine.high %v2016, %v2024
    %v2044 = vunpack.c.l.s4 1934713408
    %v2045 = vunpack.c.0.s8 %v2044
    %v2046 = vlaneseq
    %v2047 = vshrl.u32 %v2046, 7
    %v2048 = vsub.s32 %v2045, %v2047
    %v2049 = vrot.slane %v2041, %v2048
    %v2051 = vunpack.c.l.s4 1934713408
    %v2052 = vunpack.c.0.s8 %v2051
    %v2053 = vlaneseq
    %v2054 = vshrl.u32 %v2053, 7
    %v2055 = vsub.s32 %v2052, %v2054
    %v2056 = vrot.slane %v2042, %v2055
    %v2057 = vcombine.low %v2032, %v2040
    %v2058 = vcombine.high %v2032, %v2040
    %v2060 = vunpack.c.l.s4 1934713408
    %v2061 = vunpack.c.0.s8 %v2060
    %v2062 = vlaneseq
    %v2063 = vshrl.u32 %v2062, 7
    %v2064 = vsub.s32 %v2061, %v2063
    %v2065 = vrot.slane %v2057, %v2064
    %v2067 = vunpack.c.l.s4 1934713408
    %v2068 = vunpack.c.0.s8 %v2067
    %v2069 = vlaneseq
    %v2070 = vshrl.u32 %v2069, 7
    %v2071 = vsub.s32 %v2068, %v2070
    %v2072 = vrot.slane %v2058, %v2071
    %v2073 = vcombine.low %v2049, %v2065
    %v2074 = vcombine.high %v2049, %v2065
    %v2075 = vcombine.low %v2056, %v2072
    %v2076 = vcombine.high %v2056, %v2072
    %v2077 = vcombine.low %v1981, %v1988
    %v2079 = vunpack.c.l.s4 1983009808
    %v2080 = vunpack.c.0.s8 %v2079
    %v2081 = vlaneseq
    %v2082 = vshrl.u32 %v2081, 7
    %v2083 = vsub.s32 %v2080, %v2082
    %v2084 = vrot.slane %v2077, %v2083
    %v2085 = vcombine.low %v2005, %v2006
    %v2087 = vunpack.c.l.s4 1983009808
    %v2088 = vunpack.c.0.s8 %v2087
    %v2089 = vlaneseq
    %v2090 = vshrl.u32 %v2089, 7
    %v2091 = vsub.s32 %v2088, %v2090
    %v2092 = vrot.slane %v2085, %v2091
    %v2093 = vcombine.low %v1997, %v2004
    %v2095 = vunpack.c.l.s4 1983009808
    %v2096 = vunpack.c.0.s8 %v2095
    %v2097 = vlaneseq
    %v2098 = vshrl.u32 %v2097, 7
    %v2099 = vsub.s32 %v2096, %v2098
    %v2100 = vrot.slane %v2093, %v2099
    %v2101 = vcombine.low %v2007, %v2008
    %v2103 = vunpack.c.l.s4 1983009808
    %v2104 = vunpack.c.0.s8 %v2103
    %v2105 = vlaneseq
    %v2106 = vshrl.u32 %v2105, 7
    %v2107 = vsub.s32 %v2104, %v2106
    %v2108 = vrot.slane %v2101, %v2107
    %v2109 = vcombine.low %v2084, %v2092
    %v2110 = vcombine.high %v2084, %v2092
    %v2112 = vunpack.c.l.s4 1934713408
    %v2113 = vunpack.c.0.s8 %v2112
    %v2114 = vlaneseq
    %v2115 = vshrl.u32 %v2114, 7
    %v2116 = vsub.s32 %v2113, %v2115
    %v2117 = vrot.slane %v2109, %v2116
    %v2119 = vunpack.c.l.s4 1934713408
    %v2120 = vunpack.c.0.s8 %v2119
    %v2121 = vlaneseq
    %v2122 = vshrl.u32 %v2121, 7
    %v2123 = vsub.s32 %v2120, %v2122
    %v2124 = vrot.slane %v2110, %v2123
    %v2125 = vcombine.low %v2100, %v2108
    %v2126 = vcombine.high %v2100, %v2108
    %v2128 = vunpack.c.l.s4 1934713408
    %v2129 = vunpack.c.0.s8 %v2128
    %v2130 = vlaneseq
    %v2131 = vshrl.u32 %v2130, 7
    %v2132 = vsub.s32 %v2129, %v2131
    %v2133 = vrot.slane %v2125, %v2132
    %v2135 = vunpack.c.l.s4 1934713408
    %v2136 = vunpack.c.0.s8 %v2135
    %v2137 = vlaneseq
    %v2138 = vshrl.u32 %v2137, 7
    %v2139 = vsub.s32 %v2136, %v2138
    %v2140 = vrot.slane %v2126, %v2139
    %v2141 = vcombine.low %v2117, %v2133
    %v2142 = vcombine.high %v2117, %v2133
    %v2143 = vcombine.low %v2124, %v2140
    %v2144 = vcombine.high %v2124, %v2140
    %2147 = vrot.lane.b32.xlu0 %v2074, 8
    %v2148 = vpop.permute.xlu0 %2147
    %2149 = vrot.lane.b32.xlu0 %v2142, 8
    %v2150 = vpop.permute.xlu0 %2149
    %2155 = vrot.lane.b32.xlu0 %v2075, 16
    %v2156 = vpop.permute.xlu0 %2155
    %2157 = vrot.lane.b32.xlu0 %v2143, 16
    %v2158 = vpop.permute.xlu0 %2157
    %2163 = vrot.lane.b32.xlu0 %v2076, 24
    %v2164 = vpop.permute.xlu0 %2163
    %2165 = vrot.lane.b32.xlu0 %v2144, 24
    %v2166 = vpop.permute.xlu0 %2165
    %v2169 = vsel %vm1031, %v2073, %v2148
    %v2170 = vsel %vm1031, %v2141, %v2150
    %vm2171 = vcmask 130048
    %v2172 = vsel %vm2171, %v2169, %v2156
    %v2173 = vsel %vm2171, %v2170, %v2158
    %vm2174 = vcmask 195584
    %v2175 = vsel %vm2174, %v2172, %v2164
    %v2176 = vsel %vm2174, %v2173, %v2166
    %v2177 = vpack.c.bf16 %v2176, %v2175
    %v2178 = vld [vmem:[%s3] sm:$0xf]
    %v2179 = vld [vmem:[%s3 + $0x4] sm:$0xf]
    %v2180 = vld [vmem:[%s3 + $0x8] sm:$0xf]
    %v2181 = vld [vmem:[%s3 + $0xc] sm:$0xf]
    %v2182 = vld [vmem:[%s4] sm:$0x1]
    %v2184 = vlaneseq
    %v2185 = vshrl.u32 %v2184, 7
    %v2186 = vsub.s32 0, %v2185
    %v2187 = vrot.slane %v2182, %v2186
    %v2193 = vunpack.c.l.b16 %v2178
    %v2194 = vunpack.c.l.b16 %v2179
    %v2195 = vunpack.c.l.b16 %v2180
    %v2196 = vunpack.c.l.b16 %v2181
    %v2197 = vpack.c.b16 %v2194, %v2193
    %v2198 = vpack.c.b16 %v2196, %v2195
    %v2202 = vsel %vm78, %v2177, 0
    %2204 = vmatprep.subr.bf16.mxu0 0
    %2205 = vmatpush1.bf16.msra.mxu0 %v2197
    %2206 = vmatprep.subr.bf16.mxu0 0
    %2207 = vmatpush1.bf16.msra.mxu0 %v2198
    %2208 = vmatprep.subr.bf16.mxu0 0
    %2209 = vmatpush1.bf16.msra.mxu0 0
    %2210 = vmatprep.subr.bf16.mxu0 0
    %2211 = vmatpush1.bf16.msra.mxu0 0
    %2212 = vmatprep.subr.bf16.mxu0 0
    %2213 = vmatpush1.bf16.msra.mxu0 0
    %2214 = vmatprep.subr.bf16.mxu0 0
    %2215 = vmatpush1.bf16.msra.mxu0 0
    %2216 = vmatprep.subr.bf16.mxu0 0
    %2217 = vmatpush1.bf16.msra.mxu0 0
    %2218 = vmatprep.subr.bf16.mxu0 0
    %2219 = vmatpush1.bf16.msra.mxu0 0
    %2220 = vmatprep.subr.bf16.mxu0 0
    %2221 = vmatpush1.bf16.msra.mxu0 0
    %2222 = vmatprep.subr.bf16.mxu0 0
    %2223 = vmatpush1.bf16.msra.mxu0 0
    %2224 = vmatprep.subr.bf16.mxu0 0
    %2225 = vmatpush1.bf16.msra.mxu0 0
    %2226 = vmatprep.subr.bf16.mxu0 0
    %2227 = vmatpush1.bf16.msra.mxu0 0
    %2228 = vmatprep.subr.bf16.mxu0 0
    %2229 = vmatpush1.bf16.msra.mxu0 0
    %2230 = vmatprep.subr.bf16.mxu0 0
    %2231 = vmatpush1.bf16.msra.mxu0 0
    %2232 = vmatprep.subr.bf16.mxu0 0
    %2233 = vmatpush1.bf16.msra.mxu0 0
    %2234 = vmatprep.subr.bf16.mxu0 0
    %2235 = vmatpush1.bf16.msra.mxu0 0
    %2236 = vmatprep.mubr.bf16.mxu0 0
    %2237 = vmatmul.mubr.bf16.gmra.mrb[0].mxu0 %v2202
    %v2238 = vpop.f32.mrb[0].mxu0
    %v2239 = vadd.f32 %v2187, %v2238
    %v2240 = vpop.f32.mrb[0].mxu0
    %v2241 = vpop.f32.mrb[0].mxu0
    %v2242 = vadd.f32 %v2187, %v2241
    %v2243 = vpop.f32.mrb[0].mxu0
    %2244 = vdwg.mxu0
    %v2245 = vadd.f32 %v52, %v2239
    %v2246 = vadd.f32 %v53, %v2242
    %v2247 = vld [vmem:[%s5] sm:$0x1]
    %v2248 = vld [vmem:[%s6] sm:$0x1]
    %v2249 = vsel %vm78, %v2245, 0.0
    %2250 = vadd.xlane.f32.xlu0 %v2249
    %v2251 = vpop.xlane.xlu0 %2250
    %v2252 = vsel %vm78, %v2246, 0.0
    %2253 = vadd.xlane.f32.xlu0 %v2252
    %v2254 = vpop.xlane.xlu0 %2253
    %v2255 = vrcp.pop 32.0
    %v2256 = vmul.f32 %v2251, %v2255
    %v2257 = vmul.f32 %v2254, %v2255
    %v2258 = vsub.f32 %v2245, %v2256
    %v2259 = vsub.f32 %v2246, %v2257
    %v2260 = vmul.f32 %v2258, %v2258
    %v2261 = vmul.f32 %v2259, %v2259
    %v2262 = vsel %vm78, %v2260, 0.0
    %2263 = vadd.xlane.f32.xlu0 %v2262
    %v2264 = vpop.xlane.xlu0 %2263
    %v2265 = vsel %vm78, %v2261, 0.0
    %2266 = vadd.xlane.f32.xlu0 %v2265
    %v2267 = vpop.xlane.xlu0 %2266
    %v2268 = vmul.f32 %v2264, %v2255
    %v2269 = vmul.f32 %v2267, %v2255
    %v2270 = vadd.f32 %v2268, 1e-05
    %v2271 = vadd.f32 %v2269, 1e-05
    %v2272 = vrsqrt.pop %v2270
    %v2273 = vrsqrt.pop %v2271
    %v2274 = vmul.f32 %v2258, %v2272
    %v2275 = vmul.f32 %v2259, %v2273
    %v2277 = vlaneseq
    %v2278 = vshrl.u32 %v2277, 7
    %v2279 = vsub.s32 0, %v2278
    %v2280 = vrot.slane %v2247, %v2279
    %v2282 = vmul.f32 %v2274, %v2280
    %v2283 = vmul.f32 %v2275, %v2280
    %v2285 = vlaneseq
    %v2286 = vshrl.u32 %v2285, 7
    %v2287 = vsub.s32 0, %v2286
    %v2288 = vrot.slane %v2248, %v2287
    %v2290 = vadd.f32 %v2282, %v2288
    %v2291 = vadd.f32 %v2283, %v2288
    %v2292 = vpack.c.bf16 %v2291, %v2290
    %v2293 = vld [vmem:[%s9] sm:$0xf]
    %v2294 = vld [vmem:[%s9 + $0x4] sm:$0xf]
    %v2295 = vld [vmem:[%s9 + $0x8] sm:$0xf]
    %v2296 = vld [vmem:[%s9 + $0xc] sm:$0xf]
    %v2297 = vld [vmem:[%s10] sm:$0x1]
    %v2299 = vlaneseq
    %v2300 = vshrl.u32 %v2299, 7
    %v2301 = vsub.s32 0, %v2300
    %v2302 = vrot.slane %v2297, %v2301
    %v2308 = vunpack.c.l.b16 %v2293
    %v2309 = vunpack.c.l.b16 %v2294
    %v2310 = vunpack.c.l.b16 %v2295
    %v2311 = vunpack.c.l.b16 %v2296
    %v2312 = vpack.c.b16 %v2309, %v2308
    %v2313 = vpack.c.b16 %v2311, %v2310
    %v2317 = vsel %vm78, %v2292, 0
    %2319 = vmatprep.subr.bf16.mxu0 0
    %2320 = vmatpush1.bf16.msra.mxu0 %v2312
    %2321 = vmatprep.subr.bf16.mxu0 0
    %2322 = vmatpush1.bf16.msra.mxu0 %v2313
    %2323 = vmatprep.subr.bf16.mxu0 0
    %2324 = vmatpush1.bf16.msra.mxu0 0
    %2325 = vmatprep.subr.bf16.mxu0 0
    %2326 = vmatpush1.bf16.msra.mxu0 0
    %2327 = vmatprep.subr.bf16.mxu0 0
    %2328 = vmatpush1.bf16.msra.mxu0 0
    %2329 = vmatprep.subr.bf16.mxu0 0
    %2330 = vmatpush1.bf16.msra.mxu0 0
    %2331 = vmatprep.subr.bf16.mxu0 0
    %2332 = vmatpush1.bf16.msra.mxu0 0
    %2333 = vmatprep.subr.bf16.mxu0 0
    %2334 = vmatpush1.bf16.msra.mxu0 0
    %2335 = vmatprep.subr.bf16.mxu0 0
    %2336 = vmatpush1.bf16.msra.mxu0 0
    %2337 = vmatprep.subr.bf16.mxu0 0
    %2338 = vmatpush1.bf16.msra.mxu0 0
    %2339 = vmatprep.subr.bf16.mxu0 0
    %2340 = vmatpush1.bf16.msra.mxu0 0
    %2341 = vmatprep.subr.bf16.mxu0 0
    %2342 = vmatpush1.bf16.msra.mxu0 0
    %2343 = vmatprep.subr.bf16.mxu0 0
    %2344 = vmatpush1.bf16.msra.mxu0 0
    %2345 = vmatprep.subr.bf16.mxu0 0
    %2346 = vmatpush1.bf16.msra.mxu0 0
    %2347 = vmatprep.subr.bf16.mxu0 0
    %2348 = vmatpush1.bf16.msra.mxu0 0
    %2349 = vmatprep.subr.bf16.mxu0 0
    %2350 = vmatpush1.bf16.msra.mxu0 0
    %2351 = vmatprep.mubr.bf16.mxu0 0
    %2352 = vmatmul.mubr.bf16.gmra.mrb[0].mxu0 %v2317
    %v2353 = vpop.f32.mrb[0].mxu0
    %v2354 = vadd.f32 %v2302, %v2353
    %v2355 = vpop.f32.mrb[0].mxu0
    %v2356 = vpop.f32.mrb[0].mxu0
    %v2357 = vadd.f32 %v2302, %v2356
    %v2358 = vpop.f32.mrb[0].mxu0
    %2359 = vdwg.mxu0
    %v2360 = vmax.f32 %v2354, 0.0
    %v2361 = vmax.f32 %v2357, 0.0
    %v2362 = vpack.c.bf16 %v2361, %v2360
    %v2363 = vld [vmem:[%s11] sm:$0xf]
    %v2364 = vld [vmem:[%s11 + $0x4] sm:$0xf]
    %v2365 = vld [vmem:[%s11 + $0x8] sm:$0xf]
    %v2366 = vld [vmem:[%s11 + $0xc] sm:$0xf]
    %v2367 = vld [vmem:[%s11 + $0x10] sm:$0xf]
    %v2368 = vld [vmem:[%s11 + $0x14] sm:$0xf]
    %v2369 = vld [vmem:[%s11 + $0x18] sm:$0xf]
    %v2370 = vld [vmem:[%s11 + $0x1c] sm:$0xf]
    %v2371 = vld [vmem:[%s12] sm:$0x1]
    %v2373 = vlaneseq
    %v2374 = vshrl.u32 %v2373, 7
    %v2375 = vsub.s32 0, %v2374
    %v2376 = vrot.slane %v2371, %v2375
    %v2386 = vunpack.c.l.b16 %v2363
    %v2387 = vunpack.c.l.b16 %v2364
    %v2388 = vunpack.c.l.b16 %v2365
    %v2389 = vunpack.c.l.b16 %v2366
    %v2390 = vunpack.c.l.b16 %v2367
    %v2391 = vunpack.c.l.b16 %v2368
    %v2392 = vunpack.c.l.b16 %v2369
    %v2393 = vunpack.c.l.b16 %v2370
    %v2394 = vpack.c.b16 %v2387, %v2386
    %v2395 = vpack.c.b16 %v2389, %v2388
    %v2396 = vpack.c.b16 %v2391, %v2390
    %v2397 = vpack.c.b16 %v2393, %v2392
    %vm2402 = vcmask 523264
    %v2404 = vsel %vm2402, %v2362, 0
    %2406 = vmatprep.subr.bf16.mxu0 0
    %2407 = vmatpush1.bf16.msra.mxu0 %v2394
    %2408 = vmatprep.subr.bf16.mxu0 0
    %2409 = vmatpush1.bf16.msra.mxu0 %v2395
    %2410 = vmatprep.subr.bf16.mxu0 0
    %2411 = vmatpush1.bf16.msra.mxu0 %v2396
    %2412 = vmatprep.subr.bf16.mxu0 0
    %2413 = vmatpush1.bf16.msra.mxu0 %v2397
    %2414 = vmatprep.subr.bf16.mxu0 0
    %2415 = vmatpush1.bf16.msra.mxu0 0
    %2416 = vmatprep.subr.bf16.mxu0 0
    %2417 = vmatpush1.bf16.msra.mxu0 0
    %2418 = vmatprep.subr.bf16.mxu0 0
    %2419 = vmatpush1.bf16.msra.mxu0 0
    %2420 = vmatprep.subr.bf16.mxu0 0
    %2421 = vmatpush1.bf16.msra.mxu0 0
    %2422 = vmatprep.subr.bf16.mxu0 0
    %2423 = vmatpush1.bf16.msra.mxu0 0
    %2424 = vmatprep.subr.bf16.mxu0 0
    %2425 = vmatpush1.bf16.msra.mxu0 0
    %2426 = vmatprep.subr.bf16.mxu0 0
    %2427 = vmatpush1.bf16.msra.mxu0 0
    %2428 = vmatprep.subr.bf16.mxu0 0
    %2429 = vmatpush1.bf16.msra.mxu0 0
    %2430 = vmatprep.subr.bf16.mxu0 0
    %2431 = vmatpush1.bf16.msra.mxu0 0
    %2432 = vmatprep.subr.bf16.mxu0 0
    %2433 = vmatpush1.bf16.msra.mxu0 0
    %2434 = vmatprep.subr.bf16.mxu0 0
    %2435 = vmatpush1.bf16.msra.mxu0 0
    %2436 = vmatprep.subr.bf16.mxu0 0
    %2437 = vmatpush1.bf16.msra.mxu0 0
    %2438 = vmatprep.mubr.bf16.mxu0 0
    %2439 = vmatmul.mubr.bf16.gmra.mrb[0].mxu0 %v2404
    %v2440 = vpop.f32.mrb[0].mxu0
    %v2441 = vadd.f32 %v2376, %v2440
    %v2442 = vpop.f32.mrb[0].mxu0
    %v2443 = vpop.f32.mrb[0].mxu0
    %v2444 = vadd.f32 %v2376, %v2443
    %v2445 = vpop.f32.mrb[0].mxu0
    %2446 = vdwg.mxu0
    %v2447 = vadd.f32 %v2290, %v2441
    %v2448 = vadd.f32 %v2291, %v2444
    %v2449 = vld [vmem:[%s7] sm:$0x1]
    %v2450 = vld [vmem:[%s8] sm:$0x1]
    %v2451 = vsel %vm78, %v2447, 0.0
    %2452 = vadd.xlane.f32.xlu0 %v2451
    %v2453 = vpop.xlane.xlu0 %2452
    %v2454 = vsel %vm78, %v2448, 0.0
    %2455 = vadd.xlane.f32.xlu0 %v2454
    %v2456 = vpop.xlane.xlu0 %2455
    %v2457 = vmul.f32 %v2453, %v2255
    %v2458 = vmul.f32 %v2456, %v2255
    %v2459 = vsub.f32 %v2447, %v2457
    %v2460 = vsub.f32 %v2448, %v2458
    %v2461 = vmul.f32 %v2459, %v2459
    %v2462 = vmul.f32 %v2460, %v2460
    %v2463 = vsel %vm78, %v2461, 0.0
    %2464 = vadd.xlane.f32.xlu0 %v2463
    %v2465 = vpop.xlane.xlu0 %2464
    %v2466 = vsel %vm78, %v2462, 0.0
    %2467 = vadd.xlane.f32.xlu0 %v2466
    %v2468 = vpop.xlane.xlu0 %2467
    %v2469 = vmul.f32 %v2465, %v2255
    %v2470 = vmul.f32 %v2468, %v2255
    %v2471 = vadd.f32 %v2469, 1e-05
    %v2472 = vadd.f32 %v2470, 1e-05
    %v2473 = vrsqrt.pop %v2471
    %v2474 = vrsqrt.pop %v2472
    %v2475 = vmul.f32 %v2459, %v2473
    %v2476 = vmul.f32 %v2460, %v2474
    %v2478 = vlaneseq
    %v2479 = vshrl.u32 %v2478, 7
    %v2480 = vsub.s32 0, %v2479
    %v2481 = vrot.slane %v2449, %v2480
    %v2483 = vmul.f32 %v2475, %v2481
    %v2484 = vmul.f32 %v2476, %v2481
    %v2486 = vlaneseq
    %v2487 = vshrl.u32 %v2486, 7
    %v2488 = vsub.s32 0, %v2487
    %v2489 = vrot.slane %v2450, %v2488
    %v2491 = vadd.f32 %v2483, %v2489
    %v2492 = vadd.f32 %v2484, %v2489
    %v2493 = vpack.c.bf16 %v2492, %v2491
    %s2494 = scalar_lea.vmem %s1, 16
    %v2495 = vld [vmem:[%s2494] sm:$0xf]
    %v2496 = vld [vmem:[%s2494 + $0x4] sm:$0xf]
    %v2497 = vld [vmem:[%s2494 + $0x8] sm:$0xf]
    %v2498 = vld [vmem:[%s2494 + $0xc] sm:$0xf]
    %s2499 = scalar_lea.vmem %s2, 1
    %v2500 = vld [vmem:[%s2499] sm:$0x1]
    %v2502 = vlaneseq
    %v2503 = vshrl.u32 %v2502, 7
    %v2504 = vsub.s32 0, %v2503
    %v2505 = vrot.slane %v2500, %v2504
    %v2511 = vunpack.c.l.b16 %v2495
    %v2512 = vunpack.c.l.b16 %v2496
    %v2513 = vunpack.c.l.b16 %v2497
    %v2514 = vunpack.c.l.b16 %v2498
    %v2515 = vpack.c.b16 %v2512, %v2511
    %v2516 = vpack.c.b16 %v2514, %v2513
    %v2520 = vsel %vm78, %v2493, 0
    %2522 = vmatprep.subr.bf16.mxu0 0
    %2523 = vmatpush1.bf16.msra.mxu0 %v2515
    %2524 = vmatprep.subr.bf16.mxu0 0
    %2525 = vmatpush1.bf16.msra.mxu0 %v2516
    %2526 = vmatprep.subr.bf16.mxu0 0
    %2527 = vmatpush1.bf16.msra.mxu0 0
    %2528 = vmatprep.subr.bf16.mxu0 0
    %2529 = vmatpush1.bf16.msra.mxu0 0
    %2530 = vmatprep.subr.bf16.mxu0 0
    %2531 = vmatpush1.bf16.msra.mxu0 0
    %2532 = vmatprep.subr.bf16.mxu0 0
    %2533 = vmatpush1.bf16.msra.mxu0 0
    %2534 = vmatprep.subr.bf16.mxu0 0
    %2535 = vmatpush1.bf16.msra.mxu0 0
    %2536 = vmatprep.subr.bf16.mxu0 0
    %2537 = vmatpush1.bf16.msra.mxu0 0
    %2538 = vmatprep.subr.bf16.mxu0 0
    %2539 = vmatpush1.bf16.msra.mxu0 0
    %2540 = vmatprep.subr.bf16.mxu0 0
    %2541 = vmatpush1.bf16.msra.mxu0 0
    %2542 = vmatprep.subr.bf16.mxu0 0
    %2543 = vmatpush1.bf16.msra.mxu0 0
    %2544 = vmatprep.subr.bf16.mxu0 0
    %2545 = vmatpush1.bf16.msra.mxu0 0
    %2546 = vmatprep.subr.bf16.mxu0 0
    %2547 = vmatpush1.bf16.msra.mxu0 0
    %2548 = vmatprep.subr.bf16.mxu0 0
    %2549 = vmatpush1.bf16.msra.mxu0 0
    %2550 = vmatprep.subr.bf16.mxu0 0
    %2551 = vmatpush1.bf16.msra.mxu0 0
    %2552 = vmatprep.subr.bf16.mxu0 0
    %2553 = vmatpush1.bf16.msra.mxu0 0
    %2554 = vmatprep.mubr.bf16.mxu0 0
    %2555 = vmatmul.mubr.bf16.gmra.mrb[0].mxu0 %v2520
    %v2556 = vpop.f32.mrb[0].mxu0
    %v2557 = vadd.f32 %v2505, %v2556
    %v2558 = vpop.f32.mrb[0].mxu0
    %v2559 = vpop.f32.mrb[0].mxu0
    %v2560 = vadd.f32 %v2505, %v2559
    %v2561 = vpop.f32.mrb[0].mxu0
    %2562 = vdwg.mxu0
    %2565 = vrot.lane.b32.xlu0 %v2557, 120
    %v2566 = vpop.permute.xlu0 %2565
    %2567 = vrot.lane.b32.xlu0 %v2560, 120
    %v2568 = vpop.permute.xlu0 %2567
    %2571 = vrot.lane.b32.xlu0 %v2557, 112
    %v2572 = vpop.permute.xlu0 %2571
    %2573 = vrot.lane.b32.xlu0 %v2560, 112
    %v2574 = vpop.permute.xlu0 %2573
    %2577 = vrot.lane.b32.xlu0 %v2557, 104
    %v2578 = vpop.permute.xlu0 %2577
    %2579 = vrot.lane.b32.xlu0 %v2560, 104
    %v2580 = vpop.permute.xlu0 %2579
    %v2583 = vcombine.low %v2557, %v2572
    %v2584 = vcombine.high %v2557, %v2572
    %v2586 = vunpack.c.l.s4 1983009808
    %v2587 = vunpack.c.0.s8 %v2586
    %v2588 = vlaneseq
    %v2589 = vshrl.u32 %v2588, 7
    %v2590 = vsub.s32 %v2587, %v2589
    %v2591 = vrot.slane %v2583, %v2590
    %v2593 = vunpack.c.l.s4 1983009808
    %v2594 = vunpack.c.0.s8 %v2593
    %v2595 = vlaneseq
    %v2596 = vshrl.u32 %v2595, 7
    %v2597 = vsub.s32 %v2594, %v2596
    %v2598 = vrot.slane %v2584, %v2597
    %v2599 = vcombine.low %v2566, %v2578
    %v2600 = vcombine.high %v2566, %v2578
    %v2602 = vunpack.c.l.s4 1983009808
    %v2603 = vunpack.c.0.s8 %v2602
    %v2604 = vlaneseq
    %v2605 = vshrl.u32 %v2604, 7
    %v2606 = vsub.s32 %v2603, %v2605
    %v2607 = vrot.slane %v2599, %v2606
    %v2609 = vunpack.c.l.s4 1983009808
    %v2610 = vunpack.c.0.s8 %v2609
    %v2611 = vlaneseq
    %v2612 = vshrl.u32 %v2611, 7
    %v2613 = vsub.s32 %v2610, %v2612
    %v2614 = vrot.slane %v2600, %v2613
    %v2615 = vcombine.low %v2591, %v2607
    %v2616 = vcombine.high %v2591, %v2607
    %v2618 = vunpack.c.l.s4 1934713408
    %v2619 = vunpack.c.0.s8 %v2618
    %v2620 = vlaneseq
    %v2621 = vshrl.u32 %v2620, 7
    %v2622 = vsub.s32 %v2619, %v2621
    %v2623 = vrot.slane %v2615, %v2622
    %v2625 = vunpack.c.l.s4 1934713408
    %v2626 = vunpack.c.0.s8 %v2625
    %v2627 = vlaneseq
    %v2628 = vshrl.u32 %v2627, 7
    %v2629 = vsub.s32 %v2626, %v2628
    %v2630 = vrot.slane %v2616, %v2629
    %v2631 = vcombine.low %v2598, %v2614
    %v2632 = vcombine.high %v2598, %v2614
    %v2634 = vunpack.c.l.s4 1934713408
    %v2635 = vunpack.c.0.s8 %v2634
    %v2636 = vlaneseq
    %v2637 = vshrl.u32 %v2636, 7
    %v2638 = vsub.s32 %v2635, %v2637
    %v2639 = vrot.slane %v2631, %v2638
    %v2641 = vunpack.c.l.s4 1934713408
    %v2642 = vunpack.c.0.s8 %v2641
    %v2643 = vlaneseq
    %v2644 = vshrl.u32 %v2643, 7
    %v2645 = vsub.s32 %v2642, %v2644
    %v2646 = vrot.slane %v2632, %v2645
    %v2647 = vcombine.high %v2623, 0.0
    %v2648 = vcombine.high %v2630, 0.0
    %v2649 = vcombine.high %v2639, 0.0
    %v2650 = vcombine.high %v2646, 0.0
    %v2651 = vcombine.low %v2560, %v2574
    %v2652 = vcombine.high %v2560, %v2574
    %v2654 = vunpack.c.l.s4 1983009808
    %v2655 = vunpack.c.0.s8 %v2654
    %v2656 = vlaneseq
    %v2657 = vshrl.u32 %v2656, 7
    %v2658 = vsub.s32 %v2655, %v2657
    %v2659 = vrot.slane %v2651, %v2658
    %v2661 = vunpack.c.l.s4 1983009808
    %v2662 = vunpack.c.0.s8 %v2661
    %v2663 = vlaneseq
    %v2664 = vshrl.u32 %v2663, 7
    %v2665 = vsub.s32 %v2662, %v2664
    %v2666 = vrot.slane %v2652, %v2665
    %v2667 = vcombine.low %v2568, %v2580
    %v2668 = vcombine.high %v2568, %v2580
    %v2670 = vunpack.c.l.s4 1983009808
    %v2671 = vunpack.c.0.s8 %v2670
    %v2672 = vlaneseq
    %v2673 = vshrl.u32 %v2672, 7
    %v2674 = vsub.s32 %v2671, %v2673
    %v2675 = vrot.slane %v2667, %v2674
    %v2677 = vunpack.c.l.s4 1983009808
    %v2678 = vunpack.c.0.s8 %v2677
    %v2679 = vlaneseq
    %v2680 = vshrl.u32 %v2679, 7
    %v2681 = vsub.s32 %v2678, %v2680
    %v2682 = vrot.slane %v2668, %v2681
    %v2683 = vcombine.low %v2659, %v2675
    %v2684 = vcombine.high %v2659, %v2675
    %v2686 = vunpack.c.l.s4 1934713408
    %v2687 = vunpack.c.0.s8 %v2686
    %v2688 = vlaneseq
    %v2689 = vshrl.u32 %v2688, 7
    %v2690 = vsub.s32 %v2687, %v2689
    %v2691 = vrot.slane %v2683, %v2690
    %v2693 = vunpack.c.l.s4 1934713408
    %v2694 = vunpack.c.0.s8 %v2693
    %v2695 = vlaneseq
    %v2696 = vshrl.u32 %v2695, 7
    %v2697 = vsub.s32 %v2694, %v2696
    %v2698 = vrot.slane %v2684, %v2697
    %v2699 = vcombine.low %v2666, %v2682
    %v2700 = vcombine.high %v2666, %v2682
    %v2702 = vunpack.c.l.s4 1934713408
    %v2703 = vunpack.c.0.s8 %v2702
    %v2704 = vlaneseq
    %v2705 = vshrl.u32 %v2704, 7
    %v2706 = vsub.s32 %v2703, %v2705
    %v2707 = vrot.slane %v2699, %v2706
    %v2709 = vunpack.c.l.s4 1934713408
    %v2710 = vunpack.c.0.s8 %v2709
    %v2711 = vlaneseq
    %v2712 = vshrl.u32 %v2711, 7
    %v2713 = vsub.s32 %v2710, %v2712
    %v2714 = vrot.slane %v2700, %v2713
    %v2715 = vcombine.high %v2691, 0.0
    %v2716 = vcombine.high %v2698, 0.0
    %v2717 = vcombine.high %v2707, 0.0
    %v2718 = vcombine.high %v2714, 0.0
    %v2719 = vcombine.low %v2623, %v2630
    %v2721 = vunpack.c.l.s4 1983009808
    %v2722 = vunpack.c.0.s8 %v2721
    %v2723 = vlaneseq
    %v2724 = vshrl.u32 %v2723, 7
    %v2725 = vsub.s32 %v2722, %v2724
    %v2726 = vrot.slane %v2719, %v2725
    %v2727 = vcombine.low %v2647, %v2648
    %v2729 = vunpack.c.l.s4 1983009808
    %v2730 = vunpack.c.0.s8 %v2729
    %v2731 = vlaneseq
    %v2732 = vshrl.u32 %v2731, 7
    %v2733 = vsub.s32 %v2730, %v2732
    %v2734 = vrot.slane %v2727, %v2733
    %v2735 = vcombine.low %v2639, %v2646
    %v2737 = vunpack.c.l.s4 1983009808
    %v2738 = vunpack.c.0.s8 %v2737
    %v2739 = vlaneseq
    %v2740 = vshrl.u32 %v2739, 7
    %v2741 = vsub.s32 %v2738, %v2740
    %v2742 = vrot.slane %v2735, %v2741
    %v2743 = vcombine.low %v2649, %v2650
    %v2745 = vunpack.c.l.s4 1983009808
    %v2746 = vunpack.c.0.s8 %v2745
    %v2747 = vlaneseq
    %v2748 = vshrl.u32 %v2747, 7
    %v2749 = vsub.s32 %v2746, %v2748
    %v2750 = vrot.slane %v2743, %v2749
    %v2751 = vcombine.low %v2726, %v2734
    %v2752 = vcombine.high %v2726, %v2734
    %v2754 = vunpack.c.l.s4 1934713408
    %v2755 = vunpack.c.0.s8 %v2754
    %v2756 = vlaneseq
    %v2757 = vshrl.u32 %v2756, 7
    %v2758 = vsub.s32 %v2755, %v2757
    %v2759 = vrot.slane %v2751, %v2758
    %v2761 = vunpack.c.l.s4 1934713408
    %v2762 = vunpack.c.0.s8 %v2761
    %v2763 = vlaneseq
    %v2764 = vshrl.u32 %v2763, 7
    %v2765 = vsub.s32 %v2762, %v2764
    %v2766 = vrot.slane %v2752, %v2765
    %v2767 = vcombine.low %v2742, %v2750
    %v2768 = vcombine.high %v2742, %v2750
    %v2770 = vunpack.c.l.s4 1934713408
    %v2771 = vunpack.c.0.s8 %v2770
    %v2772 = vlaneseq
    %v2773 = vshrl.u32 %v2772, 7
    %v2774 = vsub.s32 %v2771, %v2773
    %v2775 = vrot.slane %v2767, %v2774
    %v2777 = vunpack.c.l.s4 1934713408
    %v2778 = vunpack.c.0.s8 %v2777
    %v2779 = vlaneseq
    %v2780 = vshrl.u32 %v2779, 7
    %v2781 = vsub.s32 %v2778, %v2780
    %v2782 = vrot.slane %v2768, %v2781
    %v2783 = vcombine.low %v2759, %v2775
    %v2784 = vcombine.high %v2759, %v2775
    %v2785 = vcombine.low %v2766, %v2782
    %v2786 = vcombine.high %v2766, %v2782
    %v2787 = vcombine.low %v2691, %v2698
    %v2789 = vunpack.c.l.s4 1983009808
    %v2790 = vunpack.c.0.s8 %v2789
    %v2791 = vlaneseq
    %v2792 = vshrl.u32 %v2791, 7
    %v2793 = vsub.s32 %v2790, %v2792
    %v2794 = vrot.slane %v2787, %v2793
    %v2795 = vcombine.low %v2715, %v2716
    %v2797 = vunpack.c.l.s4 1983009808
    %v2798 = vunpack.c.0.s8 %v2797
    %v2799 = vlaneseq
    %v2800 = vshrl.u32 %v2799, 7
    %v2801 = vsub.s32 %v2798, %v2800
    %v2802 = vrot.slane %v2795, %v2801
    %v2803 = vcombine.low %v2707, %v2714
    %v2805 = vunpack.c.l.s4 1983009808
    %v2806 = vunpack.c.0.s8 %v2805
    %v2807 = vlaneseq
    %v2808 = vshrl.u32 %v2807, 7
    %v2809 = vsub.s32 %v2806, %v2808
    %v2810 = vrot.slane %v2803, %v2809
    %v2811 = vcombine.low %v2717, %v2718
    %v2813 = vunpack.c.l.s4 1983009808
    %v2814 = vunpack.c.0.s8 %v2813
    %v2815 = vlaneseq
    %v2816 = vshrl.u32 %v2815, 7
    %v2817 = vsub.s32 %v2814, %v2816
    %v2818 = vrot.slane %v2811, %v2817
    %v2819 = vcombine.low %v2794, %v2802
    %v2820 = vcombine.high %v2794, %v2802
    %v2822 = vunpack.c.l.s4 1934713408
    %v2823 = vunpack.c.0.s8 %v2822
    %v2824 = vlaneseq
    %v2825 = vshrl.u32 %v2824, 7
    %v2826 = vsub.s32 %v2823, %v2825
    %v2827 = vrot.slane %v2819, %v2826
    %v2829 = vunpack.c.l.s4 1934713408
    %v2830 = vunpack.c.0.s8 %v2829
    %v2831 = vlaneseq
    %v2832 = vshrl.u32 %v2831, 7
    %v2833 = vsub.s32 %v2830, %v2832
    %v2834 = vrot.slane %v2820, %v2833
    %v2835 = vcombine.low %v2810, %v2818
    %v2836 = vcombine.high %v2810, %v2818
    %v2838 = vunpack.c.l.s4 1934713408
    %v2839 = vunpack.c.0.s8 %v2838
    %v2840 = vlaneseq
    %v2841 = vshrl.u32 %v2840, 7
    %v2842 = vsub.s32 %v2839, %v2841
    %v2843 = vrot.slane %v2835, %v2842
    %v2845 = vunpack.c.l.s4 1934713408
    %v2846 = vunpack.c.0.s8 %v2845
    %v2847 = vlaneseq
    %v2848 = vshrl.u32 %v2847, 7
    %v2849 = vsub.s32 %v2846, %v2848
    %v2850 = vrot.slane %v2836, %v2849
    %v2851 = vcombine.low %v2827, %v2843
    %v2852 = vcombine.high %v2827, %v2843
    %v2853 = vcombine.low %v2834, %v2850
    %v2854 = vcombine.high %v2834, %v2850
    %v2855 = vpack.c.bf16 %v2783, %v2783
    %v2856 = vpack.c.bf16 %v2784, %v2784
    %v2857 = vpack.c.bf16 %v2785, %v2785
    %v2858 = vpack.c.bf16 %v2786, %v2786
    %v2859 = vpack.c.bf16 %v2851, %v2851
    %v2860 = vpack.c.bf16 %v2852, %v2852
    %v2861 = vpack.c.bf16 %v2853, %v2853
    %v2862 = vpack.c.bf16 %v2854, %v2854
    %2863 = vrot.lane.b32.xlu0 %v2557, 96
    %v2864 = vpop.permute.xlu0 %2863
    %2865 = vrot.lane.b32.xlu0 %v2560, 96
    %v2866 = vpop.permute.xlu0 %2865
    %2867 = vrot.lane.b32.xlu0 %v2566, 96
    %v2868 = vpop.permute.xlu0 %2867
    %2869 = vrot.lane.b32.xlu0 %v2568, 96
    %v2870 = vpop.permute.xlu0 %2869
    %2871 = vrot.lane.b32.xlu0 %v2572, 96
    %v2872 = vpop.permute.xlu0 %2871
    %2873 = vrot.lane.b32.xlu0 %v2574, 96
    %v2874 = vpop.permute.xlu0 %2873
    %2875 = vrot.lane.b32.xlu0 %v2578, 96
    %v2876 = vpop.permute.xlu0 %2875
    %2877 = vrot.lane.b32.xlu0 %v2580, 96
    %v2878 = vpop.permute.xlu0 %2877
    %v2887 = vcombine.low %v2864, %v2872
    %v2888 = vcombine.high %v2864, %v2872
    %v2890 = vunpack.c.l.s4 1983009808
    %v2891 = vunpack.c.0.s8 %v2890
    %v2892 = vlaneseq
    %v2893 = vshrl.u32 %v2892, 7
    %v2894 = vsub.s32 %v2891, %v2893
    %v2895 = vrot.slane %v2887, %v2894
    %v2897 = vunpack.c.l.s4 1983009808
    %v2898 = vunpack.c.0.s8 %v2897
    %v2899 = vlaneseq
    %v2900 = vshrl.u32 %v2899, 7
    %v2901 = vsub.s32 %v2898, %v2900
    %v2902 = vrot.slane %v2888, %v2901
    %v2903 = vcombine.low %v2868, %v2876
    %v2904 = vcombine.high %v2868, %v2876
    %v2906 = vunpack.c.l.s4 1983009808
    %v2907 = vunpack.c.0.s8 %v2906
    %v2908 = vlaneseq
    %v2909 = vshrl.u32 %v2908, 7
    %v2910 = vsub.s32 %v2907, %v2909
    %v2911 = vrot.slane %v2903, %v2910
    %v2913 = vunpack.c.l.s4 1983009808
    %v2914 = vunpack.c.0.s8 %v2913
    %v2915 = vlaneseq
    %v2916 = vshrl.u32 %v2915, 7
    %v2917 = vsub.s32 %v2914, %v2916
    %v2918 = vrot.slane %v2904, %v2917
    %v2919 = vcombine.low %v2895, %v2911
    %v2920 = vcombine.high %v2895, %v2911
    %v2922 = vunpack.c.l.s4 1934713408
    %v2923 = vunpack.c.0.s8 %v2922
    %v2924 = vlaneseq
    %v2925 = vshrl.u32 %v2924, 7
    %v2926 = vsub.s32 %v2923, %v2925
    %v2927 = vrot.slane %v2919, %v2926
    %v2929 = vunpack.c.l.s4 1934713408
    %v2930 = vunpack.c.0.s8 %v2929
    %v2931 = vlaneseq
    %v2932 = vshrl.u32 %v2931, 7
    %v2933 = vsub.s32 %v2930, %v2932
    %v2934 = vrot.slane %v2920, %v2933
    %v2935 = vcombine.low %v2902, %v2918
    %v2936 = vcombine.high %v2902, %v2918
    %v2938 = vunpack.c.l.s4 1934713408
    %v2939 = vunpack.c.0.s8 %v2938
    %v2940 = vlaneseq
    %v2941 = vshrl.u32 %v2940, 7
    %v2942 = vsub.s32 %v2939, %v2941
    %v2943 = vrot.slane %v2935, %v2942
    %v2945 = vunpack.c.l.s4 1934713408
    %v2946 = vunpack.c.0.s8 %v2945
    %v2947 = vlaneseq
    %v2948 = vshrl.u32 %v2947, 7
    %v2949 = vsub.s32 %v2946, %v2948
    %v2950 = vrot.slane %v2936, %v2949
    %v2951 = vcombine.high %v2927, 0.0
    %v2952 = vcombine.high %v2934, 0.0
    %v2953 = vcombine.high %v2943, 0.0
    %v2954 = vcombine.high %v2950, 0.0
    %v2955 = vcombine.low %v2866, %v2874
    %v2956 = vcombine.high %v2866, %v2874
    %v2958 = vunpack.c.l.s4 1983009808
    %v2959 = vunpack.c.0.s8 %v2958
    %v2960 = vlaneseq
    %v2961 = vshrl.u32 %v2960, 7
    %v2962 = vsub.s32 %v2959, %v2961
    %v2963 = vrot.slane %v2955, %v2962
    %v2965 = vunpack.c.l.s4 1983009808
    %v2966 = vunpack.c.0.s8 %v2965
    %v2967 = vlaneseq
    %v2968 = vshrl.u32 %v2967, 7
    %v2969 = vsub.s32 %v2966, %v2968
    %v2970 = vrot.slane %v2956, %v2969
    %v2971 = vcombine.low %v2870, %v2878
    %v2972 = vcombine.high %v2870, %v2878
    %v2974 = vunpack.c.l.s4 1983009808
    %v2975 = vunpack.c.0.s8 %v2974
    %v2976 = vlaneseq
    %v2977 = vshrl.u32 %v2976, 7
    %v2978 = vsub.s32 %v2975, %v2977
    %v2979 = vrot.slane %v2971, %v2978
    %v2981 = vunpack.c.l.s4 1983009808
    %v2982 = vunpack.c.0.s8 %v2981
    %v2983 = vlaneseq
    %v2984 = vshrl.u32 %v2983, 7
    %v2985 = vsub.s32 %v2982, %v2984
    %v2986 = vrot.slane %v2972, %v2985
    %v2987 = vcombine.low %v2963, %v2979
    %v2988 = vcombine.high %v2963, %v2979
    %v2990 = vunpack.c.l.s4 1934713408
    %v2991 = vunpack.c.0.s8 %v2990
    %v2992 = vlaneseq
    %v2993 = vshrl.u32 %v2992, 7
    %v2994 = vsub.s32 %v2991, %v2993
    %v2995 = vrot.slane %v2987, %v2994
    %v2997 = vunpack.c.l.s4 1934713408
    %v2998 = vunpack.c.0.s8 %v2997
    %v2999 = vlaneseq
    %v3000 = vshrl.u32 %v2999, 7
    %v3001 = vsub.s32 %v2998, %v3000
    %v3002 = vrot.slane %v2988, %v3001
    %v3003 = vcombine.low %v2970, %v2986
    %v3004 = vcombine.high %v2970, %v2986
    %v3006 = vunpack.c.l.s4 1934713408
    %v3007 = vunpack.c.0.s8 %v3006
    %v3008 = vlaneseq
    %v3009 = vshrl.u32 %v3008, 7
    %v3010 = vsub.s32 %v3007, %v3009
    %v3011 = vrot.slane %v3003, %v3010
    %v3013 = vunpack.c.l.s4 1934713408
    %v3014 = vunpack.c.0.s8 %v3013
    %v3015 = vlaneseq
    %v3016 = vshrl.u32 %v3015, 7
    %v3017 = vsub.s32 %v3014, %v3016
    %v3018 = vrot.slane %v3004, %v3017
    %v3019 = vcombine.high %v2995, 0.0
    %v3020 = vcombine.high %v3002, 0.0
    %v3021 = vcombine.high %v3011, 0.0
    %v3022 = vcombine.high %v3018, 0.0
    %v3023 = vcombine.low %v2927, %v2934
    %v3025 = vunpack.c.l.s4 1983009808
    %v3026 = vunpack.c.0.s8 %v3025
    %v3027 = vlaneseq
    %v3028 = vshrl.u32 %v3027, 7
    %v3029 = vsub.s32 %v3026, %v3028
    %v3030 = vrot.slane %v3023, %v3029
    %v3031 = vcombine.low %v2951, %v2952
    %v3033 = vunpack.c.l.s4 1983009808
    %v3034 = vunpack.c.0.s8 %v3033
    %v3035 = vlaneseq
    %v3036 = vshrl.u32 %v3035, 7
    %v3037 = vsub.s32 %v3034, %v3036
    %v3038 = vrot.slane %v3031, %v3037
    %v3039 = vcombine.low %v2943, %v2950
    %v3041 = vunpack.c.l.s4 1983009808
    %v3042 = vunpack.c.0.s8 %v3041
    %v3043 = vlaneseq
    %v3044 = vshrl.u32 %v3043, 7
    %v3045 = vsub.s32 %v3042, %v3044
    %v3046 = vrot.slane %v3039, %v3045
    %v3047 = vcombine.low %v2953, %v2954
    %v3049 = vunpack.c.l.s4 1983009808
    %v3050 = vunpack.c.0.s8 %v3049
    %v3051 = vlaneseq
    %v3052 = vshrl.u32 %v3051, 7
    %v3053 = vsub.s32 %v3050, %v3052
    %v3054 = vrot.slane %v3047, %v3053
    %v3055 = vcombine.low %v3030, %v3038
    %v3056 = vcombine.high %v3030, %v3038
    %v3058 = vunpack.c.l.s4 1934713408
    %v3059 = vunpack.c.0.s8 %v3058
    %v3060 = vlaneseq
    %v3061 = vshrl.u32 %v3060, 7
    %v3062 = vsub.s32 %v3059, %v3061
    %v3063 = vrot.slane %v3055, %v3062
    %v3065 = vunpack.c.l.s4 1934713408
    %v3066 = vunpack.c.0.s8 %v3065
    %v3067 = vlaneseq
    %v3068 = vshrl.u32 %v3067, 7
    %v3069 = vsub.s32 %v3066, %v3068
    %v3070 = vrot.slane %v3056, %v3069
    %v3071 = vcombine.low %v3046, %v3054
    %v3072 = vcombine.high %v3046, %v3054
    %v3074 = vunpack.c.l.s4 1934713408
    %v3075 = vunpack.c.0.s8 %v3074
    %v3076 = vlaneseq
    %v3077 = vshrl.u32 %v3076, 7
    %v3078 = vsub.s32 %v3075, %v3077
    %v3079 = vrot.slane %v3071, %v3078
    %v3081 = vunpack.c.l.s4 1934713408
    %v3082 = vunpack.c.0.s8 %v3081
    %v3083 = vlaneseq
    %v3084 = vshrl.u32 %v3083, 7
    %v3085 = vsub.s32 %v3082, %v3084
    %v3086 = vrot.slane %v3072, %v3085
    %v3087 = vcombine.low %v3063, %v3079
    %v3088 = vcombine.high %v3063, %v3079
    %v3089 = vcombine.low %v3070, %v3086
    %v3090 = vcombine.high %v3070, %v3086
    %v3091 = vcombine.low %v2995, %v3002
    %v3093 = vunpack.c.l.s4 1983009808
    %v3094 = vunpack.c.0.s8 %v3093
    %v3095 = vlaneseq
    %v3096 = vshrl.u32 %v3095, 7
    %v3097 = vsub.s32 %v3094, %v3096
    %v3098 = vrot.slane %v3091, %v3097
    %v3099 = vcombine.low %v3019, %v3020
    %v3101 = vunpack.c.l.s4 1983009808
    %v3102 = vunpack.c.0.s8 %v3101
    %v3103 = vlaneseq
    %v3104 = vshrl.u32 %v3103, 7
    %v3105 = vsub.s32 %v3102, %v3104
    %v3106 = vrot.slane %v3099, %v3105
    %v3107 = vcombine.low %v3011, %v3018
    %v3109 = vunpack.c.l.s4 1983009808
    %v3110 = vunpack.c.0.s8 %v3109
    %v3111 = vlaneseq
    %v3112 = vshrl.u32 %v3111, 7
    %v3113 = vsub.s32 %v3110, %v3112
    %v3114 = vrot.slane %v3107, %v3113
    %v3115 = vcombine.low %v3021, %v3022
    %v3117 = vunpack.c.l.s4 1983009808
    %v3118 = vunpack.c.0.s8 %v3117
    %v3119 = vlaneseq
    %v3120 = vshrl.u32 %v3119, 7
    %v3121 = vsub.s32 %v3118, %v3120
    %v3122 = vrot.slane %v3115, %v3121
    %v3123 = vcombine.low %v3098, %v3106
    %v3124 = vcombine.high %v3098, %v3106
    %v3126 = vunpack.c.l.s4 1934713408
    %v3127 = vunpack.c.0.s8 %v3126
    %v3128 = vlaneseq
    %v3129 = vshrl.u32 %v3128, 7
    %v3130 = vsub.s32 %v3127, %v3129
    %v3131 = vrot.slane %v3123, %v3130
    %v3133 = vunpack.c.l.s4 1934713408
    %v3134 = vunpack.c.0.s8 %v3133
    %v3135 = vlaneseq
    %v3136 = vshrl.u32 %v3135, 7
    %v3137 = vsub.s32 %v3134, %v3136
    %v3138 = vrot.slane %v3124, %v3137
    %v3139 = vcombine.low %v3114, %v3122
    %v3140 = vcombine.high %v3114, %v3122
    %v3142 = vunpack.c.l.s4 1934713408
    %v3143 = vunpack.c.0.s8 %v3142
    %v3144 = vlaneseq
    %v3145 = vshrl.u32 %v3144, 7
    %v3146 = vsub.s32 %v3143, %v3145
    %v3147 = vrot.slane %v3139, %v3146
    %v3149 = vunpack.c.l.s4 1934713408
    %v3150 = vunpack.c.0.s8 %v3149
    %v3151 = vlaneseq
    %v3152 = vshrl.u32 %v3151, 7
    %v3153 = vsub.s32 %v3150, %v3152
    %v3154 = vrot.slane %v3140, %v3153
    %v3155 = vcombine.low %v3131, %v3147
    %v3156 = vcombine.high %v3131, %v3147
    %v3157 = vcombine.low %v3138, %v3154
    %v3158 = vcombine.high %v3138, %v3154
    %v3159 = vpack.c.bf16 %v3087, %v3087
    %v3160 = vpack.c.bf16 %v3088, %v3088
    %v3161 = vpack.c.bf16 %v3089, %v3089
    %v3162 = vpack.c.bf16 %v3090, %v3090
    %v3163 = vpack.c.bf16 %v3155, %v3155
    %v3164 = vpack.c.bf16 %v3156, %v3156
    %v3165 = vpack.c.bf16 %v3157, %v3157
    %v3166 = vpack.c.bf16 %v3158, %v3158
    %3167 = vrot.lane.b32.xlu0 %v2557, 64
    %v3168 = vpop.permute.xlu0 %3167
    %3169 = vrot.lane.b32.xlu0 %v2560, 64
    %v3170 = vpop.permute.xlu0 %3169
    %3171 = vrot.lane.b32.xlu0 %v2566, 64
    %v3172 = vpop.permute.xlu0 %3171
    %3173 = vrot.lane.b32.xlu0 %v2568, 64
    %v3174 = vpop.permute.xlu0 %3173
    %3175 = vrot.lane.b32.xlu0 %v2572, 64
    %v3176 = vpop.permute.xlu0 %3175
    %3177 = vrot.lane.b32.xlu0 %v2574, 64
    %v3178 = vpop.permute.xlu0 %3177
    %3179 = vrot.lane.b32.xlu0 %v2578, 64
    %v3180 = vpop.permute.xlu0 %3179
    %3181 = vrot.lane.b32.xlu0 %v2580, 64
    %v3182 = vpop.permute.xlu0 %3181
    %v3191 = vcombine.low %v3168, %v3176
    %v3192 = vcombine.high %v3168, %v3176
    %v3194 = vunpack.c.l.s4 1983009808
    %v3195 = vunpack.c.0.s8 %v3194
    %v3196 = vlaneseq
    %v3197 = vshrl.u32 %v3196, 7
    %v3198 = vsub.s32 %v3195, %v3197
    %v3199 = vrot.slane %v3191, %v3198
    %v3201 = vunpack.c.l.s4 1983009808
    %v3202 = vunpack.c.0.s8 %v3201
    %v3203 = vlaneseq
    %v3204 = vshrl.u32 %v3203, 7
    %v3205 = vsub.s32 %v3202, %v3204
    %v3206 = vrot.slane %v3192, %v3205
    %v3207 = vcombine.low %v3172, %v3180
    %v3208 = vcombine.high %v3172, %v3180
    %v3210 = vunpack.c.l.s4 1983009808
    %v3211 = vunpack.c.0.s8 %v3210
    %v3212 = vlaneseq
    %v3213 = vshrl.u32 %v3212, 7
    %v3214 = vsub.s32 %v3211, %v3213
    %v3215 = vrot.slane %v3207, %v3214
    %v3217 = vunpack.c.l.s4 1983009808
    %v3218 = vunpack.c.0.s8 %v3217
    %v3219 = vlaneseq
    %v3220 = vshrl.u32 %v3219, 7
    %v3221 = vsub.s32 %v3218, %v3220
    %v3222 = vrot.slane %v3208, %v3221
    %v3223 = vcombine.low %v3199, %v3215
    %v3224 = vcombine.high %v3199, %v3215
    %v3226 = vunpack.c.l.s4 1934713408
    %v3227 = vunpack.c.0.s8 %v3226
    %v3228 = vlaneseq
    %v3229 = vshrl.u32 %v3228, 7
    %v3230 = vsub.s32 %v3227, %v3229
    %v3231 = vrot.slane %v3223, %v3230
    %v3233 = vunpack.c.l.s4 1934713408
    %v3234 = vunpack.c.0.s8 %v3233
    %v3235 = vlaneseq
    %v3236 = vshrl.u32 %v3235, 7
    %v3237 = vsub.s32 %v3234, %v3236
    %v3238 = vrot.slane %v3224, %v3237
    %v3239 = vcombine.low %v3206, %v3222
    %v3240 = vcombine.high %v3206, %v3222
    %v3242 = vunpack.c.l.s4 1934713408
    %v3243 = vunpack.c.0.s8 %v3242
    %v3244 = vlaneseq
    %v3245 = vshrl.u32 %v3244, 7
    %v3246 = vsub.s32 %v3243, %v3245
    %v3247 = vrot.slane %v3239, %v3246
    %v3249 = vunpack.c.l.s4 1934713408
    %v3250 = vunpack.c.0.s8 %v3249
    %v3251 = vlaneseq
    %v3252 = vshrl.u32 %v3251, 7
    %v3253 = vsub.s32 %v3250, %v3252
    %v3254 = vrot.slane %v3240, %v3253
    %v3255 = vcombine.high %v3231, 0.0
    %v3256 = vcombine.high %v3238, 0.0
    %v3257 = vcombine.high %v3247, 0.0
    %v3258 = vcombine.high %v3254, 0.0
    %v3259 = vcombine.low %v3170, %v3178
    %v3260 = vcombine.high %v3170, %v3178
    %v3262 = vunpack.c.l.s4 1983009808
    %v3263 = vunpack.c.0.s8 %v3262
    %v3264 = vlaneseq
    %v3265 = vshrl.u32 %v3264, 7
    %v3266 = vsub.s32 %v3263, %v3265
    %v3267 = vrot.slane %v3259, %v3266
    %v3269 = vunpack.c.l.s4 1983009808
    %v3270 = vunpack.c.0.s8 %v3269
    %v3271 = vlaneseq
    %v3272 = vshrl.u32 %v3271, 7
    %v3273 = vsub.s32 %v3270, %v3272
    %v3274 = vrot.slane %v3260, %v3273
    %v3275 = vcombine.low %v3174, %v3182
    %v3276 = vcombine.high %v3174, %v3182
    %v3278 = vunpack.c.l.s4 1983009808
    %v3279 = vunpack.c.0.s8 %v3278
    %v3280 = vlaneseq
    %v3281 = vshrl.u32 %v3280, 7
    %v3282 = vsub.s32 %v3279, %v3281
    %v3283 = vrot.slane %v3275, %v3282
    %v3285 = vunpack.c.l.s4 1983009808
    %v3286 = vunpack.c.0.s8 %v3285
    %v3287 = vlaneseq
    %v3288 = vshrl.u32 %v3287, 7
    %v3289 = vsub.s32 %v3286, %v3288
    %v3290 = vrot.slane %v3276, %v3289
    %v3291 = vcombine.low %v3267, %v3283
    %v3292 = vcombine.high %v3267, %v3283
    %v3294 = vunpack.c.l.s4 1934713408
    %v3295 = vunpack.c.0.s8 %v3294
    %v3296 = vlaneseq
    %v3297 = vshrl.u32 %v3296, 7
    %v3298 = vsub.s32 %v3295, %v3297
    %v3299 = vrot.slane %v3291, %v3298
    %v3301 = vunpack.c.l.s4 1934713408
    %v3302 = vunpack.c.0.s8 %v3301
    %v3303 = vlaneseq
    %v3304 = vshrl.u32 %v3303, 7
    %v3305 = vsub.s32 %v3302, %v3304
    %v3306 = vrot.slane %v3292, %v3305
    %v3307 = vcombine.low %v3274, %v3290
    %v3308 = vcombine.high %v3274, %v3290
    %v3310 = vunpack.c.l.s4 1934713408
    %v3311 = vunpack.c.0.s8 %v3310
    %v3312 = vlaneseq
    %v3313 = vshrl.u32 %v3312, 7
    %v3314 = vsub.s32 %v3311, %v3313
    %v3315 = vrot.slane %v3307, %v3314
    %v3317 = vunpack.c.l.s4 1934713408
    %v3318 = vunpack.c.0.s8 %v3317
    %v3319 = vlaneseq
    %v3320 = vshrl.u32 %v3319, 7
    %v3321 = vsub.s32 %v3318, %v3320
    %v3322 = vrot.slane %v3308, %v3321
    %v3323 = vcombine.high %v3299, 0.0
    %v3324 = vcombine.high %v3306, 0.0
    %v3325 = vcombine.high %v3315, 0.0
    %v3326 = vcombine.high %v3322, 0.0
    %v3327 = vcombine.low %v3231, %v3238
    %v3329 = vunpack.c.l.s4 1983009808
    %v3330 = vunpack.c.0.s8 %v3329
    %v3331 = vlaneseq
    %v3332 = vshrl.u32 %v3331, 7
    %v3333 = vsub.s32 %v3330, %v3332
    %v3334 = vrot.slane %v3327, %v3333
    %v3335 = vcombine.low %v3255, %v3256
    %v3337 = vunpack.c.l.s4 1983009808
    %v3338 = vunpack.c.0.s8 %v3337
    %v3339 = vlaneseq
    %v3340 = vshrl.u32 %v3339, 7
    %v3341 = vsub.s32 %v3338, %v3340
    %v3342 = vrot.slane %v3335, %v3341
    %v3343 = vcombine.low %v3247, %v3254
    %v3345 = vunpack.c.l.s4 1983009808
    %v3346 = vunpack.c.0.s8 %v3345
    %v3347 = vlaneseq
    %v3348 = vshrl.u32 %v3347, 7
    %v3349 = vsub.s32 %v3346, %v3348
    %v3350 = vrot.slane %v3343, %v3349
    %v3351 = vcombine.low %v3257, %v3258
    %v3353 = vunpack.c.l.s4 1983009808
    %v3354 = vunpack.c.0.s8 %v3353
    %v3355 = vlaneseq
    %v3356 = vshrl.u32 %v3355, 7
    %v3357 = vsub.s32 %v3354, %v3356
    %v3358 = vrot.slane %v3351, %v3357
    %v3359 = vcombine.low %v3334, %v3342
    %v3360 = vcombine.high %v3334, %v3342
    %v3362 = vunpack.c.l.s4 1934713408
    %v3363 = vunpack.c.0.s8 %v3362
    %v3364 = vlaneseq
    %v3365 = vshrl.u32 %v3364, 7
    %v3366 = vsub.s32 %v3363, %v3365
    %v3367 = vrot.slane %v3359, %v3366
    %v3369 = vunpack.c.l.s4 1934713408
    %v3370 = vunpack.c.0.s8 %v3369
    %v3371 = vlaneseq
    %v3372 = vshrl.u32 %v3371, 7
    %v3373 = vsub.s32 %v3370, %v3372
    %v3374 = vrot.slane %v3360, %v3373
    %v3375 = vcombine.low %v3350, %v3358
    %v3376 = vcombine.high %v3350, %v3358
    %v3378 = vunpack.c.l.s4 1934713408
    %v3379 = vunpack.c.0.s8 %v3378
    %v3380 = vlaneseq
    %v3381 = vshrl.u32 %v3380, 7
    %v3382 = vsub.s32 %v3379, %v3381
    %v3383 = vrot.slane %v3375, %v3382
    %v3385 = vunpack.c.l.s4 1934713408
    %v3386 = vunpack.c.0.s8 %v3385
    %v3387 = vlaneseq
    %v3388 = vshrl.u32 %v3387, 7
    %v3389 = vsub.s32 %v3386, %v3388
    %v3390 = vrot.slane %v3376, %v3389
    %v3391 = vcombine.low %v3367, %v3383
    %v3392 = vcombine.high %v3367, %v3383
    %v3393 = vcombine.low %v3374, %v3390
    %v3394 = vcombine.high %v3374, %v3390
    %v3395 = vcombine.low %v3299, %v3306
    %v3397 = vunpack.c.l.s4 1983009808
    %v3398 = vunpack.c.0.s8 %v3397
    %v3399 = vlaneseq
    %v3400 = vshrl.u32 %v3399, 7
    %v3401 = vsub.s32 %v3398, %v3400
    %v3402 = vrot.slane %v3395, %v3401
    %v3403 = vcombine.low %v3323, %v3324
    %v3405 = vunpack.c.l.s4 1983009808
    %v3406 = vunpack.c.0.s8 %v3405
    %v3407 = vlaneseq
    %v3408 = vshrl.u32 %v3407, 7
    %v3409 = vsub.s32 %v3406, %v3408
    %v3410 = vrot.slane %v3403, %v3409
    %v3411 = vcombine.low %v3315, %v3322
    %v3413 = vunpack.c.l.s4 1983009808
    %v3414 = vunpack.c.0.s8 %v3413
    %v3415 = vlaneseq
    %v3416 = vshrl.u32 %v3415, 7
    %v3417 = vsub.s32 %v3414, %v3416
    %v3418 = vrot.slane %v3411, %v3417
    %v3419 = vcombine.low %v3325, %v3326
    %v3421 = vunpack.c.l.s4 1983009808
    %v3422 = vunpack.c.0.s8 %v3421
    %v3423 = vlaneseq
    %v3424 = vshrl.u32 %v3423, 7
    %v3425 = vsub.s32 %v3422, %v3424
    %v3426 = vrot.slane %v3419, %v3425
    %v3427 = vcombine.low %v3402, %v3410
    %v3428 = vcombine.high %v3402, %v3410
    %v3430 = vunpack.c.l.s4 1934713408
    %v3431 = vunpack.c.0.s8 %v3430
    %v3432 = vlaneseq
    %v3433 = vshrl.u32 %v3432, 7
    %v3434 = vsub.s32 %v3431, %v3433
    %v3435 = vrot.slane %v3427, %v3434
    %v3437 = vunpack.c.l.s4 1934713408
    %v3438 = vunpack.c.0.s8 %v3437
    %v3439 = vlaneseq
    %v3440 = vshrl.u32 %v3439, 7
    %v3441 = vsub.s32 %v3438, %v3440
    %v3442 = vrot.slane %v3428, %v3441
    %v3443 = vcombine.low %v3418, %v3426
    %v3444 = vcombine.high %v3418, %v3426
    %v3446 = vunpack.c.l.s4 1934713408
    %v3447 = vunpack.c.0.s8 %v3446
    %v3448 = vlaneseq
    %v3449 = vshrl.u32 %v3448, 7
    %v3450 = vsub.s32 %v3447, %v3449
    %v3451 = vrot.slane %v3443, %v3450
    %v3453 = vunpack.c.l.s4 1934713408
    %v3454 = vunpack.c.0.s8 %v3453
    %v3455 = vlaneseq
    %v3456 = vshrl.u32 %v3455, 7
    %v3457 = vsub.s32 %v3454, %v3456
    %v3458 = vrot.slane %v3444, %v3457
    %v3459 = vcombine.low %v3435, %v3451
    %v3460 = vcombine.high %v3435, %v3451
    %v3461 = vcombine.low %v3442, %v3458
    %v3462 = vcombine.high %v3442, %v3458
    %v3463 = vpack.c.bf16 %v3391, %v3391
    %v3464 = vpack.c.bf16 %v3392, %v3392
    %v3465 = vpack.c.bf16 %v3393, %v3393
    %v3466 = vpack.c.bf16 %v3394, %v3394
    %v3467 = vpack.c.bf16 %v3459, %v3459
    %v3468 = vpack.c.bf16 %v3460, %v3460
    %v3469 = vpack.c.bf16 %v3461, %v3461
    %v3470 = vpack.c.bf16 %v3462, %v3462
    %v3472 = vsel %vm1031, %v2855, 0
    %v3475 = vsel %vm1031, %v3159, 0
    %3477 = vmatprep.subr.bf16.mxu0 0
    %3478 = vmatpush1.bf16.xpose.msra.mxu0 %v3475
    %3479 = vmatprep.subr.bf16.mxu0 0
    %3480 = vmatpush1.bf16.xpose.msra.mxu0 0
    %3481 = vmatprep.subr.bf16.mxu0 0
    %3482 = vmatpush1.bf16.xpose.msra.mxu0 0
    %3483 = vmatprep.subr.bf16.mxu0 0
    %3484 = vmatpush1.bf16.xpose.msra.mxu0 0
    %3485 = vmatprep.subr.bf16.mxu0 0
    %3486 = vmatpush1.bf16.xpose.msra.mxu0 0
    %3487 = vmatprep.subr.bf16.mxu0 0
    %3488 = vmatpush1.bf16.xpose.msra.mxu0 0
    %3489 = vmatprep.subr.bf16.mxu0 0
    %3490 = vmatpush1.bf16.xpose.msra.mxu0 0
    %3491 = vmatprep.subr.bf16.mxu0 0
    %3492 = vmatpush1.bf16.xpose.msra.mxu0 0
    %3493 = vmatprep.subr.bf16.mxu0 0
    %3494 = vmatpush1.bf16.xpose.msra.mxu0 0
    %3495 = vmatprep.subr.bf16.mxu0 0
    %3496 = vmatpush1.bf16.xpose.msra.mxu0 0
    %3497 = vmatprep.subr.bf16.mxu0 0
    %3498 = vmatpush1.bf16.xpose.msra.mxu0 0
    %3499 = vmatprep.subr.bf16.mxu0 0
    %3500 = vmatpush1.bf16.xpose.msra.mxu0 0
    %3501 = vmatprep.subr.bf16.mxu0 0
    %3502 = vmatpush1.bf16.xpose.msra.mxu0 0
    %3503 = vmatprep.subr.bf16.mxu0 0
    %3504 = vmatpush1.bf16.xpose.msra.mxu0 0
    %3505 = vmatprep.subr.bf16.mxu0 0
    %3506 = vmatpush1.bf16.xpose.msra.mxu0 0
    %3507 = vmatprep.subr.bf16.mxu0 0
    %3508 = vmatpush1.bf16.xpose.msra.mxu0 0
    %3509 = vmatprep.mubr.bf16.mxu0 0
    %3510 = vmatmul.mubr.bf16.gmra.mrb[0].mxu0 %v3472
    %v3511 = vpop.f32.mrb[0].mxu0
    %v3512 = vadd.f32 0.0, %v3511
    %v3513 = vpop.f32.mrb[0].mxu0
    %v3514 = vpop.f32.mrb[0].mxu0
    %v3515 = vpop.f32.mrb[0].mxu0
    %3516 = vdwg.mxu0
    %v3518 = vsel %vm1031, %v2856, 0
    %v3521 = vsel %vm1031, %v3160, 0
    %3523 = vmatprep.subr.bf16.mxu0 0
    %3524 = vmatpush1.bf16.xpose.msra.mxu0 %v3521
    %3525 = vmatprep.subr.bf16.mxu0 0
    %3526 = vmatpush1.bf16.xpose.msra.mxu0 0
    %3527 = vmatprep.subr.bf16.mxu0 0
    %3528 = vmatpush1.bf16.xpose.msra.mxu0 0
    %3529 = vmatprep.subr.bf16.mxu0 0
    %3530 = vmatpush1.bf16.xpose.msra.mxu0 0
    %3531 = vmatprep.subr.bf16.mxu0 0
    %3532 = vmatpush1.bf16.xpose.msra.mxu0 0
    %3533 = vmatprep.subr.bf16.mxu0 0
    %3534 = vmatpush1.bf16.xpose.msra.mxu0 0
    %3535 = vmatprep.subr.bf16.mxu0 0
    %3536 = vmatpush1.bf16.xpose.msra.mxu0 0
    %3537 = vmatprep.subr.bf16.mxu0 0
    %3538 = vmatpush1.bf16.xpose.msra.mxu0 0
    %3539 = vmatprep.subr.bf16.mxu0 0
    %3540 = vmatpush1.bf16.xpose.msra.mxu0 0
    %3541 = vmatprep.subr.bf16.mxu0 0
    %3542 = vmatpush1.bf16.xpose.msra.mxu0 0
    %3543 = vmatprep.subr.bf16.mxu0 0
    %3544 = vmatpush1.bf16.xpose.msra.mxu0 0
    %3545 = vmatprep.subr.bf16.mxu0 0
    %3546 = vmatpush1.bf16.xpose.msra.mxu0 0
    %3547 = vmatprep.subr.bf16.mxu0 0
    %3548 = vmatpush1.bf16.xpose.msra.mxu0 0
    %3549 = vmatprep.subr.bf16.mxu0 0
    %3550 = vmatpush1.bf16.xpose.msra.mxu0 0
    %3551 = vmatprep.subr.bf16.mxu0 0
    %3552 = vmatpush1.bf16.xpose.msra.mxu0 0
    %3553 = vmatprep.subr.bf16.mxu0 0
    %3554 = vmatpush1.bf16.xpose.msra.mxu0 0
    %3555 = vmatprep.mubr.bf16.mxu0 0
    %3556 = vmatmul.mubr.bf16.gmra.mrb[0].mxu0 %v3518
    %v3557 = vpop.f32.mrb[0].mxu0
    %v3558 = vadd.f32 0.0, %v3557
    %v3559 = vpop.f32.mrb[0].mxu0
    %v3560 = vpop.f32.mrb[0].mxu0
    %v3561 = vpop.f32.mrb[0].mxu0
    %3562 = vdwg.mxu0
    %v3564 = vsel %vm1031, %v2857, 0
    %v3567 = vsel %vm1031, %v3161, 0
    %3569 = vmatprep.subr.bf16.mxu0 0
    %3570 = vmatpush1.bf16.xpose.msra.mxu0 %v3567
    %3571 = vmatprep.subr.bf16.mxu0 0
    %3572 = vmatpush1.bf16.xpose.msra.mxu0 0
    %3573 = vmatprep.subr.bf16.mxu0 0
    %3574 = vmatpush1.bf16.xpose.msra.mxu0 0
    %3575 = vmatprep.subr.bf16.mxu0 0
    %3576 = vmatpush1.bf16.xpose.msra.mxu0 0
    %3577 = vmatprep.subr.bf16.mxu0 0
    %3578 = vmatpush1.bf16.xpose.msra.mxu0 0
    %3579 = vmatprep.subr.bf16.mxu0 0
    %3580 = vmatpush1.bf16.xpose.msra.mxu0 0
    %3581 = vmatprep.subr.bf16.mxu0 0
    %3582 = vmatpush1.bf16.xpose.msra.mxu0 0
    %3583 = vmatprep.subr.bf16.mxu0 0
    %3584 = vmatpush1.bf16.xpose.msra.mxu0 0
    %3585 = vmatprep.subr.bf16.mxu0 0
    %3586 = vmatpush1.bf16.xpose.msra.mxu0 0
    %3587 = vmatprep.subr.bf16.mxu0 0
    %3588 = vmatpush1.bf16.xpose.msra.mxu0 0
    %3589 = vmatprep.subr.bf16.mxu0 0
    %3590 = vmatpush1.bf16.xpose.msra.mxu0 0
    %3591 = vmatprep.subr.bf16.mxu0 0
    %3592 = vmatpush1.bf16.xpose.msra.mxu0 0
    %3593 = vmatprep.subr.bf16.mxu0 0
    %3594 = vmatpush1.bf16.xpose.msra.mxu0 0
    %3595 = vmatprep.subr.bf16.mxu0 0
    %3596 = vmatpush1.bf16.xpose.msra.mxu0 0
    %3597 = vmatprep.subr.bf16.mxu0 0
    %3598 = vmatpush1.bf16.xpose.msra.mxu0 0
    %3599 = vmatprep.subr.bf16.mxu0 0
    %3600 = vmatpush1.bf16.xpose.msra.mxu0 0
    %3601 = vmatprep.mubr.bf16.mxu0 0
    %3602 = vmatmul.mubr.bf16.gmra.mrb[0].mxu0 %v3564
    %v3603 = vpop.f32.mrb[0].mxu0
    %v3604 = vadd.f32 0.0, %v3603
    %v3605 = vpop.f32.mrb[0].mxu0
    %v3606 = vpop.f32.mrb[0].mxu0
    %v3607 = vpop.f32.mrb[0].mxu0
    %3608 = vdwg.mxu0
    %v3610 = vsel %vm1031, %v2858, 0
    %v3613 = vsel %vm1031, %v3162, 0
    %3615 = vmatprep.subr.bf16.mxu0 0
    %3616 = vmatpush1.bf16.xpose.msra.mxu0 %v3613
    %3617 = vmatprep.subr.bf16.mxu0 0
    %3618 = vmatpush1.bf16.xpose.msra.mxu0 0
    %3619 = vmatprep.subr.bf16.mxu0 0
    %3620 = vmatpush1.bf16.xpose.msra.mxu0 0
    %3621 = vmatprep.subr.bf16.mxu0 0
    %3622 = vmatpush1.bf16.xpose.msra.mxu0 0
    %3623 = vmatprep.subr.bf16.mxu0 0
    %3624 = vmatpush1.bf16.xpose.msra.mxu0 0
    %3625 = vmatprep.subr.bf16.mxu0 0
    %3626 = vmatpush1.bf16.xpose.msra.mxu0 0
    %3627 = vmatprep.subr.bf16.mxu0 0
    %3628 = vmatpush1.bf16.xpose.msra.mxu0 0
    %3629 = vmatprep.subr.bf16.mxu0 0
    %3630 = vmatpush1.bf16.xpose.msra.mxu0 0
    %3631 = vmatprep.subr.bf16.mxu0 0
    %3632 = vmatpush1.bf16.xpose.msra.mxu0 0
    %3633 = vmatprep.subr.bf16.mxu0 0
    %3634 = vmatpush1.bf16.xpose.msra.mxu0 0
    %3635 = vmatprep.subr.bf16.mxu0 0
    %3636 = vmatpush1.bf16.xpose.msra.mxu0 0
    %3637 = vmatprep.subr.bf16.mxu0 0
    %3638 = vmatpush1.bf16.xpose.msra.mxu0 0
    %3639 = vmatprep.subr.bf16.mxu0 0
    %3640 = vmatpush1.bf16.xpose.msra.mxu0 0
    %3641 = vmatprep.subr.bf16.mxu0 0
    %3642 = vmatpush1.bf16.xpose.msra.mxu0 0
    %3643 = vmatprep.subr.bf16.mxu0 0
    %3644 = vmatpush1.bf16.xpose.msra.mxu0 0
    %3645 = vmatprep.subr.bf16.mxu0 0
    %3646 = vmatpush1.bf16.xpose.msra.mxu0 0
    %3647 = vmatprep.mubr.bf16.mxu0 0
    %3648 = vmatmul.mubr.bf16.gmra.mrb[0].mxu0 %v3610
    %v3649 = vpop.f32.mrb[0].mxu0
    %v3650 = vadd.f32 0.0, %v3649
    %v3651 = vpop.f32.mrb[0].mxu0
    %v3652 = vpop.f32.mrb[0].mxu0
    %v3653 = vpop.f32.mrb[0].mxu0
    %3654 = vdwg.mxu0
    %v3656 = vsel %vm1031, %v2859, 0
    %v3659 = vsel %vm1031, %v3163, 0
    %3661 = vmatprep.subr.bf16.mxu0 0
    %3662 = vmatpush1.bf16.xpose.msra.mxu0 %v3659
    %3663 = vmatprep.subr.bf16.mxu0 0
    %3664 = vmatpush1.bf16.xpose.msra.mxu0 0
    %3665 = vmatprep.subr.bf16.mxu0 0
    %3666 = vmatpush1.bf16.xpose.msra.mxu0 0
    %3667 = vmatprep.subr.bf16.mxu0 0
    %3668 = vmatpush1.bf16.xpose.msra.mxu0 0
    %3669 = vmatprep.subr.bf16.mxu0 0
    %3670 = vmatpush1.bf16.xpose.msra.mxu0 0
    %3671 = vmatprep.subr.bf16.mxu0 0
    %3672 = vmatpush1.bf16.xpose.msra.mxu0 0
    %3673 = vmatprep.subr.bf16.mxu0 0
    %3674 = vmatpush1.bf16.xpose.msra.mxu0 0
    %3675 = vmatprep.subr.bf16.mxu0 0
    %3676 = vmatpush1.bf16.xpose.msra.mxu0 0
    %3677 = vmatprep.subr.bf16.mxu0 0
    %3678 = vmatpush1.bf16.xpose.msra.mxu0 0
    %3679 = vmatprep.subr.bf16.mxu0 0
    %3680 = vmatpush1.bf16.xpose.msra.mxu0 0
    %3681 = vmatprep.subr.bf16.mxu0 0
    %3682 = vmatpush1.bf16.xpose.msra.mxu0 0
    %3683 = vmatprep.subr.bf16.mxu0 0
    %3684 = vmatpush1.bf16.xpose.msra.mxu0 0
    %3685 = vmatprep.subr.bf16.mxu0 0
    %3686 = vmatpush1.bf16.xpose.msra.mxu0 0
    %3687 = vmatprep.subr.bf16.mxu0 0
    %3688 = vmatpush1.bf16.xpose.msra.mxu0 0
    %3689 = vmatprep.subr.bf16.mxu0 0
    %3690 = vmatpush1.bf16.xpose.msra.mxu0 0
    %3691 = vmatprep.subr.bf16.mxu0 0
    %3692 = vmatpush1.bf16.xpose.msra.mxu0 0
    %3693 = vmatprep.mubr.bf16.mxu0 0
    %3694 = vmatmul.mubr.bf16.gmra.mrb[0].mxu0 %v3656
    %v3695 = vpop.f32.mrb[0].mxu0
    %v3696 = vadd.f32 0.0, %v3695
    %v3697 = vpop.f32.mrb[0].mxu0
    %v3698 = vpop.f32.mrb[0].mxu0
    %v3699 = vpop.f32.mrb[0].mxu0
    %3700 = vdwg.mxu0
    %v3702 = vsel %vm1031, %v2860, 0
    %v3705 = vsel %vm1031, %v3164, 0
    %3707 = vmatprep.subr.bf16.mxu0 0
    %3708 = vmatpush1.bf16.xpose.msra.mxu0 %v3705
    %3709 = vmatprep.subr.bf16.mxu0 0
    %3710 = vmatpush1.bf16.xpose.msra.mxu0 0
    %3711 = vmatprep.subr.bf16.mxu0 0
    %3712 = vmatpush1.bf16.xpose.msra.mxu0 0
    %3713 = vmatprep.subr.bf16.mxu0 0
    %3714 = vmatpush1.bf16.xpose.msra.mxu0 0
    %3715 = vmatprep.subr.bf16.mxu0 0
    %3716 = vmatpush1.bf16.xpose.msra.mxu0 0
    %3717 = vmatprep.subr.bf16.mxu0 0
    %3718 = vmatpush1.bf16.xpose.msra.mxu0 0
    %3719 = vmatprep.subr.bf16.mxu0 0
    %3720 = vmatpush1.bf16.xpose.msra.mxu0 0
    %3721 = vmatprep.subr.bf16.mxu0 0
    %3722 = vmatpush1.bf16.xpose.msra.mxu0 0
    %3723 = vmatprep.subr.bf16.mxu0 0
    %3724 = vmatpush1.bf16.xpose.msra.mxu0 0
    %3725 = vmatprep.subr.bf16.mxu0 0
    %3726 = vmatpush1.bf16.xpose.msra.mxu0 0
    %3727 = vmatprep.subr.bf16.mxu0 0
    %3728 = vmatpush1.bf16.xpose.msra.mxu0 0
    %3729 = vmatprep.subr.bf16.mxu0 0
    %3730 = vmatpush1.bf16.xpose.msra.mxu0 0
    %3731 = vmatprep.subr.bf16.mxu0 0
    %3732 = vmatpush1.bf16.xpose.msra.mxu0 0
    %3733 = vmatprep.subr.bf16.mxu0 0
    %3734 = vmatpush1.bf16.xpose.msra.mxu0 0
    %3735 = vmatprep.subr.bf16.mxu0 0
    %3736 = vmatpush1.bf16.xpose.msra.mxu0 0
    %3737 = vmatprep.subr.bf16.mxu0 0
    %3738 = vmatpush1.bf16.xpose.msra.mxu0 0
    %3739 = vmatprep.mubr.bf16.mxu0 0
    %3740 = vmatmul.mubr.bf16.gmra.mrb[0].mxu0 %v3702
    %v3741 = vpop.f32.mrb[0].mxu0
    %v3742 = vadd.f32 0.0, %v3741
    %v3743 = vpop.f32.mrb[0].mxu0
    %v3744 = vpop.f32.mrb[0].mxu0
    %v3745 = vpop.f32.mrb[0].mxu0
    %3746 = vdwg.mxu0
    %v3748 = vsel %vm1031, %v2861, 0
    %v3751 = vsel %vm1031, %v3165, 0
    %3753 = vmatprep.subr.bf16.mxu0 0
    %3754 = vmatpush1.bf16.xpose.msra.mxu0 %v3751
    %3755 = vmatprep.subr.bf16.mxu0 0
    %3756 = vmatpush1.bf16.xpose.msra.mxu0 0
    %3757 = vmatprep.subr.bf16.mxu0 0
    %3758 = vmatpush1.bf16.xpose.msra.mxu0 0
    %3759 = vmatprep.subr.bf16.mxu0 0
    %3760 = vmatpush1.bf16.xpose.msra.mxu0 0
    %3761 = vmatprep.subr.bf16.mxu0 0
    %3762 = vmatpush1.bf16.xpose.msra.mxu0 0
    %3763 = vmatprep.subr.bf16.mxu0 0
    %3764 = vmatpush1.bf16.xpose.msra.mxu0 0
    %3765 = vmatprep.subr.bf16.mxu0 0
    %3766 = vmatpush1.bf16.xpose.msra.mxu0 0
    %3767 = vmatprep.subr.bf16.mxu0 0
    %3768 = vmatpush1.bf16.xpose.msra.mxu0 0
    %3769 = vmatprep.subr.bf16.mxu0 0
    %3770 = vmatpush1.bf16.xpose.msra.mxu0 0
    %3771 = vmatprep.subr.bf16.mxu0 0
    %3772 = vmatpush1.bf16.xpose.msra.mxu0 0
    %3773 = vmatprep.subr.bf16.mxu0 0
    %3774 = vmatpush1.bf16.xpose.msra.mxu0 0
    %3775 = vmatprep.subr.bf16.mxu0 0
    %3776 = vmatpush1.bf16.xpose.msra.mxu0 0
    %3777 = vmatprep.subr.bf16.mxu0 0
    %3778 = vmatpush1.bf16.xpose.msra.mxu0 0
    %3779 = vmatprep.subr.bf16.mxu0 0
    %3780 = vmatpush1.bf16.xpose.msra.mxu0 0
    %3781 = vmatprep.subr.bf16.mxu0 0
    %3782 = vmatpush1.bf16.xpose.msra.mxu0 0
    %3783 = vmatprep.subr.bf16.mxu0 0
    %3784 = vmatpush1.bf16.xpose.msra.mxu0 0
    %3785 = vmatprep.mubr.bf16.mxu0 0
    %3786 = vmatmul.mubr.bf16.gmra.mrb[0].mxu0 %v3748
    %v3787 = vpop.f32.mrb[0].mxu0
    %v3788 = vadd.f32 0.0, %v3787
    %v3789 = vpop.f32.mrb[0].mxu0
    %v3790 = vpop.f32.mrb[0].mxu0
    %v3791 = vpop.f32.mrb[0].mxu0
    %3792 = vdwg.mxu0
    %v3794 = vsel %vm1031, %v2862, 0
    %v3797 = vsel %vm1031, %v3166, 0
    %3799 = vmatprep.subr.bf16.mxu0 0
    %3800 = vmatpush1.bf16.xpose.msra.mxu0 %v3797
    %3801 = vmatprep.subr.bf16.mxu0 0
    %3802 = vmatpush1.bf16.xpose.msra.mxu0 0
    %3803 = vmatprep.subr.bf16.mxu0 0
    %3804 = vmatpush1.bf16.xpose.msra.mxu0 0
    %3805 = vmatprep.subr.bf16.mxu0 0
    %3806 = vmatpush1.bf16.xpose.msra.mxu0 0
    %3807 = vmatprep.subr.bf16.mxu0 0
    %3808 = vmatpush1.bf16.xpose.msra.mxu0 0
    %3809 = vmatprep.subr.bf16.mxu0 0
    %3810 = vmatpush1.bf16.xpose.msra.mxu0 0
    %3811 = vmatprep.subr.bf16.mxu0 0
    %3812 = vmatpush1.bf16.xpose.msra.mxu0 0
    %3813 = vmatprep.subr.bf16.mxu0 0
    %3814 = vmatpush1.bf16.xpose.msra.mxu0 0
    %3815 = vmatprep.subr.bf16.mxu0 0
    %3816 = vmatpush1.bf16.xpose.msra.mxu0 0
    %3817 = vmatprep.subr.bf16.mxu0 0
    %3818 = vmatpush1.bf16.xpose.msra.mxu0 0
    %3819 = vmatprep.subr.bf16.mxu0 0
    %3820 = vmatpush1.bf16.xpose.msra.mxu0 0
    %3821 = vmatprep.subr.bf16.mxu0 0
    %3822 = vmatpush1.bf16.xpose.msra.mxu0 0
    %3823 = vmatprep.subr.bf16.mxu0 0
    %3824 = vmatpush1.bf16.xpose.msra.mxu0 0
    %3825 = vmatprep.subr.bf16.mxu0 0
    %3826 = vmatpush1.bf16.xpose.msra.mxu0 0
    %3827 = vmatprep.subr.bf16.mxu0 0
    %3828 = vmatpush1.bf16.xpose.msra.mxu0 0
    %3829 = vmatprep.subr.bf16.mxu0 0
    %3830 = vmatpush1.bf16.xpose.msra.mxu0 0
    %3831 = vmatprep.mubr.bf16.mxu0 0
    %3832 = vmatmul.mubr.bf16.gmra.mrb[0].mxu0 %v3794
    %v3833 = vpop.f32.mrb[0].mxu0
    %v3834 = vadd.f32 0.0, %v3833
    %v3835 = vpop.f32.mrb[0].mxu0
    %v3836 = vpop.f32.mrb[0].mxu0
    %v3837 = vpop.f32.mrb[0].mxu0
    %3838 = vdwg.mxu0
    %v3839 = vmul.f32 %v3512, 0.35355338
    %v3840 = vmul.f32 %v3558, 0.35355338
    %v3841 = vmul.f32 %v3604, 0.35355338
    %v3842 = vmul.f32 %v3650, 0.35355338
    %v3843 = vmul.f32 %v3696, 0.35355338
    %v3844 = vmul.f32 %v3742, 0.35355338
    %v3845 = vmul.f32 %v3788, 0.35355338
    %v3846 = vmul.f32 %v3834, 0.35355338
    %v3847 = vsel %vm1031, %v3839, -inf
    %3848 = vmax.xlane.f32.xlu0 %v3847
    %v3849 = vpop.xlane.xlu0 %3848
    %v3850 = vsel %vm1031, %v3840, -inf
    %3851 = vmax.xlane.f32.xlu0 %v3850
    %v3852 = vpop.xlane.xlu0 %3851
    %v3853 = vsel %vm1031, %v3841, -inf
    %3854 = vmax.xlane.f32.xlu0 %v3853
    %v3855 = vpop.xlane.xlu0 %3854
    %v3856 = vsel %vm1031, %v3842, -inf
    %3857 = vmax.xlane.f32.xlu0 %v3856
    %v3858 = vpop.xlane.xlu0 %3857
    %v3859 = vsel %vm1031, %v3843, -inf
    %3860 = vmax.xlane.f32.xlu0 %v3859
    %v3861 = vpop.xlane.xlu0 %3860
    %v3862 = vsel %vm1031, %v3844, -inf
    %3863 = vmax.xlane.f32.xlu0 %v3862
    %v3864 = vpop.xlane.xlu0 %3863
    %v3865 = vsel %vm1031, %v3845, -inf
    %3866 = vmax.xlane.f32.xlu0 %v3865
    %v3867 = vpop.xlane.xlu0 %3866
    %v3868 = vsel %vm1031, %v3846, -inf
    %3869 = vmax.xlane.f32.xlu0 %v3868
    %v3870 = vpop.xlane.xlu0 %3869
    %v3871 = vsub.f32 %v3839, %v3849
    %v3872 = vsub.f32 %v3840, %v3852
    %v3873 = vsub.f32 %v3841, %v3855
    %v3874 = vsub.f32 %v3842, %v3858
    %v3875 = vsub.f32 %v3843, %v3861
    %v3876 = vsub.f32 %v3844, %v3864
    %v3877 = vsub.f32 %v3845, %v3867
    %v3878 = vsub.f32 %v3846, %v3870
    %v3879 = vmul.f32 %v3871, 1.442695
    %v3880 = vpow.pop %v3879
    %v3881 = vmul.f32 %v3872, 1.442695
    %v3882 = vpow.pop %v3881
    %v3883 = vmul.f32 %v3873, 1.442695
    %v3884 = vpow.pop %v3883
    %v3885 = vmul.f32 %v3874, 1.442695
    %v3886 = vpow.pop %v3885
    %v3887 = vmul.f32 %v3875, 1.442695
    %v3888 = vpow.pop %v3887
    %v3889 = vmul.f32 %v3876, 1.442695
    %v3890 = vpow.pop %v3889
    %v3891 = vmul.f32 %v3877, 1.442695
    %v3892 = vpow.pop %v3891
    %v3893 = vmul.f32 %v3878, 1.442695
    %v3894 = vpow.pop %v3893
    %v3895 = vsel %vm1031, %v3880, 0.0
    %3896 = vadd.xlane.f32.xlu0 %v3895
    %v3897 = vpop.xlane.xlu0 %3896
    %v3898 = vsel %vm1031, %v3882, 0.0
    %3899 = vadd.xlane.f32.xlu0 %v3898
    %v3900 = vpop.xlane.xlu0 %3899
    %v3901 = vsel %vm1031, %v3884, 0.0
    %3902 = vadd.xlane.f32.xlu0 %v3901
    %v3903 = vpop.xlane.xlu0 %3902
    %v3904 = vsel %vm1031, %v3886, 0.0
    %3905 = vadd.xlane.f32.xlu0 %v3904
    %v3906 = vpop.xlane.xlu0 %3905
    %v3907 = vsel %vm1031, %v3888, 0.0
    %3908 = vadd.xlane.f32.xlu0 %v3907
    %v3909 = vpop.xlane.xlu0 %3908
    %v3910 = vsel %vm1031, %v3890, 0.0
    %3911 = vadd.xlane.f32.xlu0 %v3910
    %v3912 = vpop.xlane.xlu0 %3911
    %v3913 = vsel %vm1031, %v3892, 0.0
    %3914 = vadd.xlane.f32.xlu0 %v3913
    %v3915 = vpop.xlane.xlu0 %3914
    %v3916 = vsel %vm1031, %v3894, 0.0
    %3917 = vadd.xlane.f32.xlu0 %v3916
    %v3918 = vpop.xlane.xlu0 %3917
    %v3919 = vrcp.pop %v3897
    %v3920 = vrcp.pop %v3900
    %v3921 = vrcp.pop %v3903
    %v3922 = vrcp.pop %v3906
    %v3923 = vrcp.pop %v3909
    %v3924 = vrcp.pop %v3912
    %v3925 = vrcp.pop %v3915
    %v3926 = vrcp.pop %v3918
    %v3927 = vmul.f32 %v3880, %v3919
    %v3928 = vmul.f32 %v3882, %v3920
    %v3929 = vmul.f32 %v3884, %v3921
    %v3930 = vmul.f32 %v3886, %v3922
    %v3931 = vmul.f32 %v3888, %v3923
    %v3932 = vmul.f32 %v3890, %v3924
    %v3933 = vmul.f32 %v3892, %v3925
    %v3934 = vmul.f32 %v3894, %v3926
    %v3935 = vpack.c.bf16 %v3927, %v3927
    %v3936 = vpack.c.bf16 %v3928, %v3928
    %v3937 = vpack.c.bf16 %v3929, %v3929
    %v3938 = vpack.c.bf16 %v3930, %v3930
    %v3939 = vpack.c.bf16 %v3931, %v3931
    %v3940 = vpack.c.bf16 %v3932, %v3932
    %v3941 = vpack.c.bf16 %v3933, %v3933
    %v3942 = vpack.c.bf16 %v3934, %v3934
    %v3944 = vsel %vm1031, %v3935, 0
    %v3947 = vsel %vm1507, %v3463, 0
    %3949 = vmatprep.subr.bf16.mxu0 0
    %3950 = vmatpush1.bf16.msra.mxu0 %v3947
    %3951 = vmatprep.subr.bf16.mxu0 0
    %3952 = vmatpush1.bf16.msra.mxu0 0
    %3953 = vmatprep.subr.bf16.mxu0 0
    %3954 = vmatpush1.bf16.msra.mxu0 0
    %3955 = vmatprep.subr.bf16.mxu0 0
    %3956 = vmatpush1.bf16.msra.mxu0 0
    %3957 = vmatprep.subr.bf16.mxu0 0
    %3958 = vmatpush1.bf16.msra.mxu0 0
    %3959 = vmatprep.subr.bf16.mxu0 0
    %3960 = vmatpush1.bf16.msra.mxu0 0
    %3961 = vmatprep.subr.bf16.mxu0 0
    %3962 = vmatpush1.bf16.msra.mxu0 0
    %3963 = vmatprep.subr.bf16.mxu0 0
    %3964 = vmatpush1.bf16.msra.mxu0 0
    %3965 = vmatprep.subr.bf16.mxu0 0
    %3966 = vmatpush1.bf16.msra.mxu0 0
    %3967 = vmatprep.subr.bf16.mxu0 0
    %3968 = vmatpush1.bf16.msra.mxu0 0
    %3969 = vmatprep.subr.bf16.mxu0 0
    %3970 = vmatpush1.bf16.msra.mxu0 0
    %3971 = vmatprep.subr.bf16.mxu0 0
    %3972 = vmatpush1.bf16.msra.mxu0 0
    %3973 = vmatprep.subr.bf16.mxu0 0
    %3974 = vmatpush1.bf16.msra.mxu0 0
    %3975 = vmatprep.subr.bf16.mxu0 0
    %3976 = vmatpush1.bf16.msra.mxu0 0
    %3977 = vmatprep.subr.bf16.mxu0 0
    %3978 = vmatpush1.bf16.msra.mxu0 0
    %3979 = vmatprep.subr.bf16.mxu0 0
    %3980 = vmatpush1.bf16.msra.mxu0 0
    %3981 = vmatprep.mubr.bf16.mxu0 0
    %3982 = vmatmul.mubr.bf16.gmra.mrb[0].mxu0 %v3944
    %v3983 = vpop.f32.mrb[0].mxu0
    %v3984 = vadd.f32 0.0, %v3983
    %v3985 = vpop.f32.mrb[0].mxu0
    %v3986 = vpop.f32.mrb[0].mxu0
    %v3987 = vpop.f32.mrb[0].mxu0
    %3988 = vdwg.mxu0
    %v3990 = vsel %vm1031, %v3936, 0
    %v3993 = vsel %vm1507, %v3464, 0
    %3995 = vmatprep.subr.bf16.mxu0 0
    %3996 = vmatpush1.bf16.msra.mxu0 %v3993
    %3997 = vmatprep.subr.bf16.mxu0 0
    %3998 = vmatpush1.bf16.msra.mxu0 0
    %3999 = vmatprep.subr.bf16.mxu0 0
    %4000 = vmatpush1.bf16.msra.mxu0 0
    %4001 = vmatprep.subr.bf16.mxu0 0
    %4002 = vmatpush1.bf16.msra.mxu0 0
    %4003 = vmatprep.subr.bf16.mxu0 0
    %4004 = vmatpush1.bf16.msra.mxu0 0
    %4005 = vmatprep.subr.bf16.mxu0 0
    %4006 = vmatpush1.bf16.msra.mxu0 0
    %4007 = vmatprep.subr.bf16.mxu0 0
    %4008 = vmatpush1.bf16.msra.mxu0 0
    %4009 = vmatprep.subr.bf16.mxu0 0
    %4010 = vmatpush1.bf16.msra.mxu0 0
    %4011 = vmatprep.subr.bf16.mxu0 0
    %4012 = vmatpush1.bf16.msra.mxu0 0
    %4013 = vmatprep.subr.bf16.mxu0 0
    %4014 = vmatpush1.bf16.msra.mxu0 0
    %4015 = vmatprep.subr.bf16.mxu0 0
    %4016 = vmatpush1.bf16.msra.mxu0 0
    %4017 = vmatprep.subr.bf16.mxu0 0
    %4018 = vmatpush1.bf16.msra.mxu0 0
    %4019 = vmatprep.subr.bf16.mxu0 0
    %4020 = vmatpush1.bf16.msra.mxu0 0
    %4021 = vmatprep.subr.bf16.mxu0 0
    %4022 = vmatpush1.bf16.msra.mxu0 0
    %4023 = vmatprep.subr.bf16.mxu0 0
    %4024 = vmatpush1.bf16.msra.mxu0 0
    %4025 = vmatprep.subr.bf16.mxu0 0
    %4026 = vmatpush1.bf16.msra.mxu0 0
    %4027 = vmatprep.mubr.bf16.mxu0 0
    %4028 = vmatmul.mubr.bf16.gmra.mrb[0].mxu0 %v3990
    %v4029 = vpop.f32.mrb[0].mxu0
    %v4030 = vadd.f32 0.0, %v4029
    %v4031 = vpop.f32.mrb[0].mxu0
    %v4032 = vpop.f32.mrb[0].mxu0
    %v4033 = vpop.f32.mrb[0].mxu0
    %4034 = vdwg.mxu0
    %v4036 = vsel %vm1031, %v3937, 0
    %v4039 = vsel %vm1507, %v3465, 0
    %4041 = vmatprep.subr.bf16.mxu0 0
    %4042 = vmatpush1.bf16.msra.mxu0 %v4039
    %4043 = vmatprep.subr.bf16.mxu0 0
    %4044 = vmatpush1.bf16.msra.mxu0 0
    %4045 = vmatprep.subr.bf16.mxu0 0
    %4046 = vmatpush1.bf16.msra.mxu0 0
    %4047 = vmatprep.subr.bf16.mxu0 0
    %4048 = vmatpush1.bf16.msra.mxu0 0
    %4049 = vmatprep.subr.bf16.mxu0 0
    %4050 = vmatpush1.bf16.msra.mxu0 0
    %4051 = vmatprep.subr.bf16.mxu0 0
    %4052 = vmatpush1.bf16.msra.mxu0 0
    %4053 = vmatprep.subr.bf16.mxu0 0
    %4054 = vmatpush1.bf16.msra.mxu0 0
    %4055 = vmatprep.subr.bf16.mxu0 0
    %4056 = vmatpush1.bf16.msra.mxu0 0
    %4057 = vmatprep.subr.bf16.mxu0 0
    %4058 = vmatpush1.bf16.msra.mxu0 0
    %4059 = vmatprep.subr.bf16.mxu0 0
    %4060 = vmatpush1.bf16.msra.mxu0 0
    %4061 = vmatprep.subr.bf16.mxu0 0
    %4062 = vmatpush1.bf16.msra.mxu0 0
    %4063 = vmatprep.subr.bf16.mxu0 0
    %4064 = vmatpush1.bf16.msra.mxu0 0
    %4065 = vmatprep.subr.bf16.mxu0 0
    %4066 = vmatpush1.bf16.msra.mxu0 0
    %4067 = vmatprep.subr.bf16.mxu0 0
    %4068 = vmatpush1.bf16.msra.mxu0 0
    %4069 = vmatprep.subr.bf16.mxu0 0
    %4070 = vmatpush1.bf16.msra.mxu0 0
    %4071 = vmatprep.subr.bf16.mxu0 0
    %4072 = vmatpush1.bf16.msra.mxu0 0
    %4073 = vmatprep.mubr.bf16.mxu0 0
    %4074 = vmatmul.mubr.bf16.gmra.mrb[0].mxu0 %v4036
    %v4075 = vpop.f32.mrb[0].mxu0
    %v4076 = vadd.f32 0.0, %v4075
    %v4077 = vpop.f32.mrb[0].mxu0
    %v4078 = vpop.f32.mrb[0].mxu0
    %v4079 = vpop.f32.mrb[0].mxu0
    %4080 = vdwg.mxu0
    %v4082 = vsel %vm1031, %v3938, 0
    %v4085 = vsel %vm1507, %v3466, 0
    %4087 = vmatprep.subr.bf16.mxu0 0
    %4088 = vmatpush1.bf16.msra.mxu0 %v4085
    %4089 = vmatprep.subr.bf16.mxu0 0
    %4090 = vmatpush1.bf16.msra.mxu0 0
    %4091 = vmatprep.subr.bf16.mxu0 0
    %4092 = vmatpush1.bf16.msra.mxu0 0
    %4093 = vmatprep.subr.bf16.mxu0 0
    %4094 = vmatpush1.bf16.msra.mxu0 0
    %4095 = vmatprep.subr.bf16.mxu0 0
    %4096 = vmatpush1.bf16.msra.mxu0 0
    %4097 = vmatprep.subr.bf16.mxu0 0
    %4098 = vmatpush1.bf16.msra.mxu0 0
    %4099 = vmatprep.subr.bf16.mxu0 0
    %4100 = vmatpush1.bf16.msra.mxu0 0
    %4101 = vmatprep.subr.bf16.mxu0 0
    %4102 = vmatpush1.bf16.msra.mxu0 0
    %4103 = vmatprep.subr.bf16.mxu0 0
    %4104 = vmatpush1.bf16.msra.mxu0 0
    %4105 = vmatprep.subr.bf16.mxu0 0
    %4106 = vmatpush1.bf16.msra.mxu0 0
    %4107 = vmatprep.subr.bf16.mxu0 0
    %4108 = vmatpush1.bf16.msra.mxu0 0
    %4109 = vmatprep.subr.bf16.mxu0 0
    %4110 = vmatpush1.bf16.msra.mxu0 0
    %4111 = vmatprep.subr.bf16.mxu0 0
    %4112 = vmatpush1.bf16.msra.mxu0 0
    %4113 = vmatprep.subr.bf16.mxu0 0
    %4114 = vmatpush1.bf16.msra.mxu0 0
    %4115 = vmatprep.subr.bf16.mxu0 0
    %4116 = vmatpush1.bf16.msra.mxu0 0
    %4117 = vmatprep.subr.bf16.mxu0 0
    %4118 = vmatpush1.bf16.msra.mxu0 0
    %4119 = vmatprep.mubr.bf16.mxu0 0
    %4120 = vmatmul.mubr.bf16.gmra.mrb[0].mxu0 %v4082
    %v4121 = vpop.f32.mrb[0].mxu0
    %v4122 = vadd.f32 0.0, %v4121
    %v4123 = vpop.f32.mrb[0].mxu0
    %v4124 = vpop.f32.mrb[0].mxu0
    %v4125 = vpop.f32.mrb[0].mxu0
    %4126 = vdwg.mxu0
    %v4128 = vsel %vm1031, %v3939, 0
    %v4131 = vsel %vm1507, %v3467, 0
    %4133 = vmatprep.subr.bf16.mxu0 0
    %4134 = vmatpush1.bf16.msra.mxu0 %v4131
    %4135 = vmatprep.subr.bf16.mxu0 0
    %4136 = vmatpush1.bf16.msra.mxu0 0
    %4137 = vmatprep.subr.bf16.mxu0 0
    %4138 = vmatpush1.bf16.msra.mxu0 0
    %4139 = vmatprep.subr.bf16.mxu0 0
    %4140 = vmatpush1.bf16.msra.mxu0 0
    %4141 = vmatprep.subr.bf16.mxu0 0
    %4142 = vmatpush1.bf16.msra.mxu0 0
    %4143 = vmatprep.subr.bf16.mxu0 0
    %4144 = vmatpush1.bf16.msra.mxu0 0
    %4145 = vmatprep.subr.bf16.mxu0 0
    %4146 = vmatpush1.bf16.msra.mxu0 0
    %4147 = vmatprep.subr.bf16.mxu0 0
    %4148 = vmatpush1.bf16.msra.mxu0 0
    %4149 = vmatprep.subr.bf16.mxu0 0
    %4150 = vmatpush1.bf16.msra.mxu0 0
    %4151 = vmatprep.subr.bf16.mxu0 0
    %4152 = vmatpush1.bf16.msra.mxu0 0
    %4153 = vmatprep.subr.bf16.mxu0 0
    %4154 = vmatpush1.bf16.msra.mxu0 0
    %4155 = vmatprep.subr.bf16.mxu0 0
    %4156 = vmatpush1.bf16.msra.mxu0 0
    %4157 = vmatprep.subr.bf16.mxu0 0
    %4158 = vmatpush1.bf16.msra.mxu0 0
    %4159 = vmatprep.subr.bf16.mxu0 0
    %4160 = vmatpush1.bf16.msra.mxu0 0
    %4161 = vmatprep.subr.bf16.mxu0 0
    %4162 = vmatpush1.bf16.msra.mxu0 0
    %4163 = vmatprep.subr.bf16.mxu0 0
    %4164 = vmatpush1.bf16.msra.mxu0 0
    %4165 = vmatprep.mubr.bf16.mxu0 0
    %4166 = vmatmul.mubr.bf16.gmra.mrb[0].mxu0 %v4128
    %v4167 = vpop.f32.mrb[0].mxu0
    %v4168 = vadd.f32 0.0, %v4167
    %v4169 = vpop.f32.mrb[0].mxu0
    %v4170 = vpop.f32.mrb[0].mxu0
    %v4171 = vpop.f32.mrb[0].mxu0
    %4172 = vdwg.mxu0
    %v4174 = vsel %vm1031, %v3940, 0
    %v4177 = vsel %vm1507, %v3468, 0
    %4179 = vmatprep.subr.bf16.mxu0 0
    %4180 = vmatpush1.bf16.msra.mxu0 %v4177
    %4181 = vmatprep.subr.bf16.mxu0 0
    %4182 = vmatpush1.bf16.msra.mxu0 0
    %4183 = vmatprep.subr.bf16.mxu0 0
    %4184 = vmatpush1.bf16.msra.mxu0 0
    %4185 = vmatprep.subr.bf16.mxu0 0
    %4186 = vmatpush1.bf16.msra.mxu0 0
    %4187 = vmatprep.subr.bf16.mxu0 0
    %4188 = vmatpush1.bf16.msra.mxu0 0
    %4189 = vmatprep.subr.bf16.mxu0 0
    %4190 = vmatpush1.bf16.msra.mxu0 0
    %4191 = vmatprep.subr.bf16.mxu0 0
    %4192 = vmatpush1.bf16.msra.mxu0 0
    %4193 = vmatprep.subr.bf16.mxu0 0
    %4194 = vmatpush1.bf16.msra.mxu0 0
    %4195 = vmatprep.subr.bf16.mxu0 0
    %4196 = vmatpush1.bf16.msra.mxu0 0
    %4197 = vmatprep.subr.bf16.mxu0 0
    %4198 = vmatpush1.bf16.msra.mxu0 0
    %4199 = vmatprep.subr.bf16.mxu0 0
    %4200 = vmatpush1.bf16.msra.mxu0 0
    %4201 = vmatprep.subr.bf16.mxu0 0
    %4202 = vmatpush1.bf16.msra.mxu0 0
    %4203 = vmatprep.subr.bf16.mxu0 0
    %4204 = vmatpush1.bf16.msra.mxu0 0
    %4205 = vmatprep.subr.bf16.mxu0 0
    %4206 = vmatpush1.bf16.msra.mxu0 0
    %4207 = vmatprep.subr.bf16.mxu0 0
    %4208 = vmatpush1.bf16.msra.mxu0 0
    %4209 = vmatprep.subr.bf16.mxu0 0
    %4210 = vmatpush1.bf16.msra.mxu0 0
    %4211 = vmatprep.mubr.bf16.mxu0 0
    %4212 = vmatmul.mubr.bf16.gmra.mrb[0].mxu0 %v4174
    %v4213 = vpop.f32.mrb[0].mxu0
    %v4214 = vadd.f32 0.0, %v4213
    %v4215 = vpop.f32.mrb[0].mxu0
    %v4216 = vpop.f32.mrb[0].mxu0
    %v4217 = vpop.f32.mrb[0].mxu0
    %4218 = vdwg.mxu0
    %v4220 = vsel %vm1031, %v3941, 0
    %v4223 = vsel %vm1507, %v3469, 0
    %4225 = vmatprep.subr.bf16.mxu0 0
    %4226 = vmatpush1.bf16.msra.mxu0 %v4223
    %4227 = vmatprep.subr.bf16.mxu0 0
    %4228 = vmatpush1.bf16.msra.mxu0 0
    %4229 = vmatprep.subr.bf16.mxu0 0
    %4230 = vmatpush1.bf16.msra.mxu0 0
    %4231 = vmatprep.subr.bf16.mxu0 0
    %4232 = vmatpush1.bf16.msra.mxu0 0
    %4233 = vmatprep.subr.bf16.mxu0 0
    %4234 = vmatpush1.bf16.msra.mxu0 0
    %4235 = vmatprep.subr.bf16.mxu0 0
    %4236 = vmatpush1.bf16.msra.mxu0 0
    %4237 = vmatprep.subr.bf16.mxu0 0
    %4238 = vmatpush1.bf16.msra.mxu0 0
    %4239 = vmatprep.subr.bf16.mxu0 0
    %4240 = vmatpush1.bf16.msra.mxu0 0
    %4241 = vmatprep.subr.bf16.mxu0 0
    %4242 = vmatpush1.bf16.msra.mxu0 0
    %4243 = vmatprep.subr.bf16.mxu0 0
    %4244 = vmatpush1.bf16.msra.mxu0 0
    %4245 = vmatprep.subr.bf16.mxu0 0
    %4246 = vmatpush1.bf16.msra.mxu0 0
    %4247 = vmatprep.subr.bf16.mxu0 0
    %4248 = vmatpush1.bf16.msra.mxu0 0
    %4249 = vmatprep.subr.bf16.mxu0 0
    %4250 = vmatpush1.bf16.msra.mxu0 0
    %4251 = vmatprep.subr.bf16.mxu0 0
    %4252 = vmatpush1.bf16.msra.mxu0 0
    %4253 = vmatprep.subr.bf16.mxu0 0
    %4254 = vmatpush1.bf16.msra.mxu0 0
    %4255 = vmatprep.subr.bf16.mxu0 0
    %4256 = vmatpush1.bf16.msra.mxu0 0
    %4257 = vmatprep.mubr.bf16.mxu0 0
    %4258 = vmatmul.mubr.bf16.gmra.mrb[0].mxu0 %v4220
    %v4259 = vpop.f32.mrb[0].mxu0
    %v4260 = vadd.f32 0.0, %v4259
    %v4261 = vpop.f32.mrb[0].mxu0
    %v4262 = vpop.f32.mrb[0].mxu0
    %v4263 = vpop.f32.mrb[0].mxu0
    %4264 = vdwg.mxu0
    %v4266 = vsel %vm1031, %v3942, 0
    %v4269 = vsel %vm1507, %v3470, 0
    %4271 = vmatprep.subr.bf16.mxu0 0
    %4272 = vmatpush1.bf16.msra.mxu0 %v4269
    %4273 = vmatprep.subr.bf16.mxu0 0
    %4274 = vmatpush1.bf16.msra.mxu0 0
    %4275 = vmatprep.subr.bf16.mxu0 0
    %4276 = vmatpush1.bf16.msra.mxu0 0
    %4277 = vmatprep.subr.bf16.mxu0 0
    %4278 = vmatpush1.bf16.msra.mxu0 0
    %4279 = vmatprep.subr.bf16.mxu0 0
    %4280 = vmatpush1.bf16.msra.mxu0 0
    %4281 = vmatprep.subr.bf16.mxu0 0
    %4282 = vmatpush1.bf16.msra.mxu0 0
    %4283 = vmatprep.subr.bf16.mxu0 0
    %4284 = vmatpush1.bf16.msra.mxu0 0
    %4285 = vmatprep.subr.bf16.mxu0 0
    %4286 = vmatpush1.bf16.msra.mxu0 0
    %4287 = vmatprep.subr.bf16.mxu0 0
    %4288 = vmatpush1.bf16.msra.mxu0 0
    %4289 = vmatprep.subr.bf16.mxu0 0
    %4290 = vmatpush1.bf16.msra.mxu0 0
    %4291 = vmatprep.subr.bf16.mxu0 0
    %4292 = vmatpush1.bf16.msra.mxu0 0
    %4293 = vmatprep.subr.bf16.mxu0 0
    %4294 = vmatpush1.bf16.msra.mxu0 0
    %4295 = vmatprep.subr.bf16.mxu0 0
    %4296 = vmatpush1.bf16.msra.mxu0 0
    %4297 = vmatprep.subr.bf16.mxu0 0
    %4298 = vmatpush1.bf16.msra.mxu0 0
    %4299 = vmatprep.subr.bf16.mxu0 0
    %4300 = vmatpush1.bf16.msra.mxu0 0
    %4301 = vmatprep.subr.bf16.mxu0 0
    %4302 = vmatpush1.bf16.msra.mxu0 0
    %4303 = vmatprep.mubr.bf16.mxu0 0
    %4304 = vmatmul.mubr.bf16.gmra.mrb[0].mxu0 %v4266
    %v4305 = vpop.f32.mrb[0].mxu0
    %v4306 = vadd.f32 0.0, %v4305
    %v4307 = vpop.f32.mrb[0].mxu0
    %v4308 = vpop.f32.mrb[0].mxu0
    %v4309 = vpop.f32.mrb[0].mxu0
    %4310 = vdwg.mxu0
    %v4311 = vcombine.low %v3984, %v4076
    %v4312 = vcombine.high %v3984, %v4076
    %v4314 = vunpack.c.l.s4 1983009808
    %v4315 = vunpack.c.0.s8 %v4314
    %v4316 = vlaneseq
    %v4317 = vshrl.u32 %v4316, 7
    %v4318 = vsub.s32 %v4315, %v4317
    %v4319 = vrot.slane %v4311, %v4318
    %v4321 = vunpack.c.l.s4 1983009808
    %v4322 = vunpack.c.0.s8 %v4321
    %v4323 = vlaneseq
    %v4324 = vshrl.u32 %v4323, 7
    %v4325 = vsub.s32 %v4322, %v4324
    %v4326 = vrot.slane %v4312, %v4325
    %v4327 = vcombine.low %v4030, %v4122
    %v4328 = vcombine.high %v4030, %v4122
    %v4330 = vunpack.c.l.s4 1983009808
    %v4331 = vunpack.c.0.s8 %v4330
    %v4332 = vlaneseq
    %v4333 = vshrl.u32 %v4332, 7
    %v4334 = vsub.s32 %v4331, %v4333
    %v4335 = vrot.slane %v4327, %v4334
    %v4337 = vunpack.c.l.s4 1983009808
    %v4338 = vunpack.c.0.s8 %v4337
    %v4339 = vlaneseq
    %v4340 = vshrl.u32 %v4339, 7
    %v4341 = vsub.s32 %v4338, %v4340
    %v4342 = vrot.slane %v4328, %v4341
    %v4343 = vcombine.low %v4319, %v4335
    %v4344 = vcombine.high %v4319, %v4335
    %v4346 = vunpack.c.l.s4 1934713408
    %v4347 = vunpack.c.0.s8 %v4346
    %v4348 = vlaneseq
    %v4349 = vshrl.u32 %v4348, 7
    %v4350 = vsub.s32 %v4347, %v4349
    %v4351 = vrot.slane %v4343, %v4350
    %v4353 = vunpack.c.l.s4 1934713408
    %v4354 = vunpack.c.0.s8 %v4353
    %v4355 = vlaneseq
    %v4356 = vshrl.u32 %v4355, 7
    %v4357 = vsub.s32 %v4354, %v4356
    %v4358 = vrot.slane %v4344, %v4357
    %v4359 = vcombine.low %v4326, %v4342
    %v4360 = vcombine.high %v4326, %v4342
    %v4362 = vunpack.c.l.s4 1934713408
    %v4363 = vunpack.c.0.s8 %v4362
    %v4364 = vlaneseq
    %v4365 = vshrl.u32 %v4364, 7
    %v4366 = vsub.s32 %v4363, %v4365
    %v4367 = vrot.slane %v4359, %v4366
    %v4369 = vunpack.c.l.s4 1934713408
    %v4370 = vunpack.c.0.s8 %v4369
    %v4371 = vlaneseq
    %v4372 = vshrl.u32 %v4371, 7
    %v4373 = vsub.s32 %v4370, %v4372
    %v4374 = vrot.slane %v4360, %v4373
    %v4375 = vcombine.high %v4351, 0.0
    %v4376 = vcombine.high %v4358, 0.0
    %v4377 = vcombine.high %v4367, 0.0
    %v4378 = vcombine.high %v4374, 0.0
    %v4379 = vcombine.low %v4168, %v4260
    %v4380 = vcombine.high %v4168, %v4260
    %v4382 = vunpack.c.l.s4 1983009808
    %v4383 = vunpack.c.0.s8 %v4382
    %v4384 = vlaneseq
    %v4385 = vshrl.u32 %v4384, 7
    %v4386 = vsub.s32 %v4383, %v4385
    %v4387 = vrot.slane %v4379, %v4386
    %v4389 = vunpack.c.l.s4 1983009808
    %v4390 = vunpack.c.0.s8 %v4389
    %v4391 = vlaneseq
    %v4392 = vshrl.u32 %v4391, 7
    %v4393 = vsub.s32 %v4390, %v4392
    %v4394 = vrot.slane %v4380, %v4393
    %v4395 = vcombine.low %v4214, %v4306
    %v4396 = vcombine.high %v4214, %v4306
    %v4398 = vunpack.c.l.s4 1983009808
    %v4399 = vunpack.c.0.s8 %v4398
    %v4400 = vlaneseq
    %v4401 = vshrl.u32 %v4400, 7
    %v4402 = vsub.s32 %v4399, %v4401
    %v4403 = vrot.slane %v4395, %v4402
    %v4405 = vunpack.c.l.s4 1983009808
    %v4406 = vunpack.c.0.s8 %v4405
    %v4407 = vlaneseq
    %v4408 = vshrl.u32 %v4407, 7
    %v4409 = vsub.s32 %v4406, %v4408
    %v4410 = vrot.slane %v4396, %v4409
    %v4411 = vcombine.low %v4387, %v4403
    %v4412 = vcombine.high %v4387, %v4403
    %v4414 = vunpack.c.l.s4 1934713408
    %v4415 = vunpack.c.0.s8 %v4414
    %v4416 = vlaneseq
    %v4417 = vshrl.u32 %v4416, 7
    %v4418 = vsub.s32 %v4415, %v4417
    %v4419 = vrot.slane %v4411, %v4418
    %v4421 = vunpack.c.l.s4 1934713408
    %v4422 = vunpack.c.0.s8 %v4421
    %v4423 = vlaneseq
    %v4424 = vshrl.u32 %v4423, 7
    %v4425 = vsub.s32 %v4422, %v4424
    %v4426 = vrot.slane %v4412, %v4425
    %v4427 = vcombine.low %v4394, %v4410
    %v4428 = vcombine.high %v4394, %v4410
    %v4430 = vunpack.c.l.s4 1934713408
    %v4431 = vunpack.c.0.s8 %v4430
    %v4432 = vlaneseq
    %v4433 = vshrl.u32 %v4432, 7
    %v4434 = vsub.s32 %v4431, %v4433
    %v4435 = vrot.slane %v4427, %v4434
    %v4437 = vunpack.c.l.s4 1934713408
    %v4438 = vunpack.c.0.s8 %v4437
    %v4439 = vlaneseq
    %v4440 = vshrl.u32 %v4439, 7
    %v4441 = vsub.s32 %v4438, %v4440
    %v4442 = vrot.slane %v4428, %v4441
    %v4443 = vcombine.high %v4419, 0.0
    %v4444 = vcombine.high %v4426, 0.0
    %v4445 = vcombine.high %v4435, 0.0
    %v4446 = vcombine.high %v4442, 0.0
    %v4447 = vcombine.low %v4351, %v4358
    %v4449 = vunpack.c.l.s4 1983009808
    %v4450 = vunpack.c.0.s8 %v4449
    %v4451 = vlaneseq
    %v4452 = vshrl.u32 %v4451, 7
    %v4453 = vsub.s32 %v4450, %v4452
    %v4454 = vrot.slane %v4447, %v4453
    %v4455 = vcombine.low %v4375, %v4376
    %v4457 = vunpack.c.l.s4 1983009808
    %v4458 = vunpack.c.0.s8 %v4457
    %v4459 = vlaneseq
    %v4460 = vshrl.u32 %v4459, 7
    %v4461 = vsub.s32 %v4458, %v4460
    %v4462 = vrot.slane %v4455, %v4461
    %v4463 = vcombine.low %v4367, %v4374
    %v4465 = vunpack.c.l.s4 1983009808
    %v4466 = vunpack.c.0.s8 %v4465
    %v4467 = vlaneseq
    %v4468 = vshrl.u32 %v4467, 7
    %v4469 = vsub.s32 %v4466, %v4468
    %v4470 = vrot.slane %v4463, %v4469
    %v4471 = vcombine.low %v4377, %v4378
    %v4473 = vunpack.c.l.s4 1983009808
    %v4474 = vunpack.c.0.s8 %v4473
    %v4475 = vlaneseq
    %v4476 = vshrl.u32 %v4475, 7
    %v4477 = vsub.s32 %v4474, %v4476
    %v4478 = vrot.slane %v4471, %v4477
    %v4479 = vcombine.low %v4454, %v4462
    %v4480 = vcombine.high %v4454, %v4462
    %v4482 = vunpack.c.l.s4 1934713408
    %v4483 = vunpack.c.0.s8 %v4482
    %v4484 = vlaneseq
    %v4485 = vshrl.u32 %v4484, 7
    %v4486 = vsub.s32 %v4483, %v4485
    %v4487 = vrot.slane %v4479, %v4486
    %v4489 = vunpack.c.l.s4 1934713408
    %v4490 = vunpack.c.0.s8 %v4489
    %v4491 = vlaneseq
    %v4492 = vshrl.u32 %v4491, 7
    %v4493 = vsub.s32 %v4490, %v4492
    %v4494 = vrot.slane %v4480, %v4493
    %v4495 = vcombine.low %v4470, %v4478
    %v4496 = vcombine.high %v4470, %v4478
    %v4498 = vunpack.c.l.s4 1934713408
    %v4499 = vunpack.c.0.s8 %v4498
    %v4500 = vlaneseq
    %v4501 = vshrl.u32 %v4500, 7
    %v4502 = vsub.s32 %v4499, %v4501
    %v4503 = vrot.slane %v4495, %v4502
    %v4505 = vunpack.c.l.s4 1934713408
    %v4506 = vunpack.c.0.s8 %v4505
    %v4507 = vlaneseq
    %v4508 = vshrl.u32 %v4507, 7
    %v4509 = vsub.s32 %v4506, %v4508
    %v4510 = vrot.slane %v4496, %v4509
    %v4511 = vcombine.low %v4487, %v4503
    %v4512 = vcombine.high %v4487, %v4503
    %v4513 = vcombine.low %v4494, %v4510
    %v4514 = vcombine.high %v4494, %v4510
    %v4515 = vcombine.low %v4419, %v4426
    %v4517 = vunpack.c.l.s4 1983009808
    %v4518 = vunpack.c.0.s8 %v4517
    %v4519 = vlaneseq
    %v4520 = vshrl.u32 %v4519, 7
    %v4521 = vsub.s32 %v4518, %v4520
    %v4522 = vrot.slane %v4515, %v4521
    %v4523 = vcombine.low %v4443, %v4444
    %v4525 = vunpack.c.l.s4 1983009808
    %v4526 = vunpack.c.0.s8 %v4525
    %v4527 = vlaneseq
    %v4528 = vshrl.u32 %v4527, 7
    %v4529 = vsub.s32 %v4526, %v4528
    %v4530 = vrot.slane %v4523, %v4529
    %v4531 = vcombine.low %v4435, %v4442
    %v4533 = vunpack.c.l.s4 1983009808
    %v4534 = vunpack.c.0.s8 %v4533
    %v4535 = vlaneseq
    %v4536 = vshrl.u32 %v4535, 7
    %v4537 = vsub.s32 %v4534, %v4536
    %v4538 = vrot.slane %v4531, %v4537
    %v4539 = vcombine.low %v4445, %v4446
    %v4541 = vunpack.c.l.s4 1983009808
    %v4542 = vunpack.c.0.s8 %v4541
    %v4543 = vlaneseq
    %v4544 = vshrl.u32 %v4543, 7
    %v4545 = vsub.s32 %v4542, %v4544
    %v4546 = vrot.slane %v4539, %v4545
    %v4547 = vcombine.low %v4522, %v4530
    %v4548 = vcombine.high %v4522, %v4530
    %v4550 = vunpack.c.l.s4 1934713408
    %v4551 = vunpack.c.0.s8 %v4550
    %v4552 = vlaneseq
    %v4553 = vshrl.u32 %v4552, 7
    %v4554 = vsub.s32 %v4551, %v4553
    %v4555 = vrot.slane %v4547, %v4554
    %v4557 = vunpack.c.l.s4 1934713408
    %v4558 = vunpack.c.0.s8 %v4557
    %v4559 = vlaneseq
    %v4560 = vshrl.u32 %v4559, 7
    %v4561 = vsub.s32 %v4558, %v4560
    %v4562 = vrot.slane %v4548, %v4561
    %v4563 = vcombine.low %v4538, %v4546
    %v4564 = vcombine.high %v4538, %v4546
    %v4566 = vunpack.c.l.s4 1934713408
    %v4567 = vunpack.c.0.s8 %v4566
    %v4568 = vlaneseq
    %v4569 = vshrl.u32 %v4568, 7
    %v4570 = vsub.s32 %v4567, %v4569
    %v4571 = vrot.slane %v4563, %v4570
    %v4573 = vunpack.c.l.s4 1934713408
    %v4574 = vunpack.c.0.s8 %v4573
    %v4575 = vlaneseq
    %v4576 = vshrl.u32 %v4575, 7
    %v4577 = vsub.s32 %v4574, %v4576
    %v4578 = vrot.slane %v4564, %v4577
    %v4579 = vcombine.low %v4555, %v4571
    %v4580 = vcombine.high %v4555, %v4571
    %v4581 = vcombine.low %v4562, %v4578
    %v4582 = vcombine.high %v4562, %v4578
    %4585 = vrot.lane.b32.xlu0 %v4512, 8
    %v4586 = vpop.permute.xlu0 %4585
    %4587 = vrot.lane.b32.xlu0 %v4580, 8
    %v4588 = vpop.permute.xlu0 %4587
    %4593 = vrot.lane.b32.xlu0 %v4513, 16
    %v4594 = vpop.permute.xlu0 %4593
    %4595 = vrot.lane.b32.xlu0 %v4581, 16
    %v4596 = vpop.permute.xlu0 %4595
    %4601 = vrot.lane.b32.xlu0 %v4514, 24
    %v4602 = vpop.permute.xlu0 %4601
    %4603 = vrot.lane.b32.xlu0 %v4582, 24
    %v4604 = vpop.permute.xlu0 %4603
    %v4607 = vsel %vm1031, %v4511, %v4586
    %v4608 = vsel %vm1031, %v4579, %v4588
    %v4609 = vsel %vm2171, %v4607, %v4594
    %v4610 = vsel %vm2171, %v4608, %v4596
    %v4611 = vsel %vm2174, %v4609, %v4602
    %v4612 = vsel %vm2174, %v4610, %v4604
    %v4613 = vpack.c.bf16 %v4612, %v4611
    %s4614 = scalar_lea.vmem %s3, 16
    %v4615 = vld [vmem:[%s4614] sm:$0xf]
    %v4616 = vld [vmem:[%s4614 + $0x4] sm:$0xf]
    %v4617 = vld [vmem:[%s4614 + $0x8] sm:$0xf]
    %v4618 = vld [vmem:[%s4614 + $0xc] sm:$0xf]
    %s4619 = scalar_lea.vmem %s4, 1
    %v4620 = vld [vmem:[%s4619] sm:$0x1]
    %v4622 = vlaneseq
    %v4623 = vshrl.u32 %v4622, 7
    %v4624 = vsub.s32 0, %v4623
    %v4625 = vrot.slane %v4620, %v4624
    %v4631 = vunpack.c.l.b16 %v4615
    %v4632 = vunpack.c.l.b16 %v4616
    %v4633 = vunpack.c.l.b16 %v4617
    %v4634 = vunpack.c.l.b16 %v4618
    %v4635 = vpack.c.b16 %v4632, %v4631
    %v4636 = vpack.c.b16 %v4634, %v4633
    %v4640 = vsel %vm78, %v4613, 0
    %4642 = vmatprep.subr.bf16.mxu0 0
    %4643 = vmatpush1.bf16.msra.mxu0 %v4635
    %4644 = vmatprep.subr.bf16.mxu0 0
    %4645 = vmatpush1.bf16.msra.mxu0 %v4636
    %4646 = vmatprep.subr.bf16.mxu0 0
    %4647 = vmatpush1.bf16.msra.mxu0 0
    %4648 = vmatprep.subr.bf16.mxu0 0
    %4649 = vmatpush1.bf16.msra.mxu0 0
    %4650 = vmatprep.subr.bf16.mxu0 0
    %4651 = vmatpush1.bf16.msra.mxu0 0
    %4652 = vmatprep.subr.bf16.mxu0 0
    %4653 = vmatpush1.bf16.msra.mxu0 0
    %4654 = vmatprep.subr.bf16.mxu0 0
    %4655 = vmatpush1.bf16.msra.mxu0 0
    %4656 = vmatprep.subr.bf16.mxu0 0
    %4657 = vmatpush1.bf16.msra.mxu0 0
    %4658 = vmatprep.subr.bf16.mxu0 0
    %4659 = vmatpush1.bf16.msra.mxu0 0
    %4660 = vmatprep.subr.bf16.mxu0 0
    %4661 = vmatpush1.bf16.msra.mxu0 0
    %4662 = vmatprep.subr.bf16.mxu0 0
    %4663 = vmatpush1.bf16.msra.mxu0 0
    %4664 = vmatprep.subr.bf16.mxu0 0
    %4665 = vmatpush1.bf16.msra.mxu0 0
    %4666 = vmatprep.subr.bf16.mxu0 0
    %4667 = vmatpush1.bf16.msra.mxu0 0
    %4668 = vmatprep.subr.bf16.mxu0 0
    %4669 = vmatpush1.bf16.msra.mxu0 0
    %4670 = vmatprep.subr.bf16.mxu0 0
    %4671 = vmatpush1.bf16.msra.mxu0 0
    %4672 = vmatprep.subr.bf16.mxu0 0
    %4673 = vmatpush1.bf16.msra.mxu0 0
    %4674 = vmatprep.mubr.bf16.mxu0 0
    %4675 = vmatmul.mubr.bf16.gmra.mrb[0].mxu0 %v4640
    %v4676 = vpop.f32.mrb[0].mxu0
    %v4677 = vadd.f32 %v4625, %v4676
    %v4678 = vpop.f32.mrb[0].mxu0
    %v4679 = vpop.f32.mrb[0].mxu0
    %v4680 = vadd.f32 %v4625, %v4679
    %v4681 = vpop.f32.mrb[0].mxu0
    %4682 = vdwg.mxu0
    %v4683 = vadd.f32 %v2491, %v4677
    %v4684 = vadd.f32 %v2492, %v4680
    %s4685 = scalar_lea.vmem %s5, 1
    %v4686 = vld [vmem:[%s4685] sm:$0x1]
    %s4687 = scalar_lea.vmem %s6, 1
    %v4688 = vld [vmem:[%s4687] sm:$0x1]
    %v4689 = vsel %vm78, %v4683, 0.0
    %4690 = vadd.xlane.f32.xlu0 %v4689
    %v4691 = vpop.xlane.xlu0 %4690
    %v4692 = vsel %vm78, %v4684, 0.0
    %4693 = vadd.xlane.f32.xlu0 %v4692
    %v4694 = vpop.xlane.xlu0 %4693
    %v4695 = vmul.f32 %v4691, %v2255
    %v4696 = vmul.f32 %v4694, %v2255
    %v4697 = vsub.f32 %v4683, %v4695
    %v4698 = vsub.f32 %v4684, %v4696
    %v4699 = vmul.f32 %v4697, %v4697
    %v4700 = vmul.f32 %v4698, %v4698
    %v4701 = vsel %vm78, %v4699, 0.0
    %4702 = vadd.xlane.f32.xlu0 %v4701
    %v4703 = vpop.xlane.xlu0 %4702
    %v4704 = vsel %vm78, %v4700, 0.0
    %4705 = vadd.xlane.f32.xlu0 %v4704
    %v4706 = vpop.xlane.xlu0 %4705
    %v4707 = vmul.f32 %v4703, %v2255
    %v4708 = vmul.f32 %v4706, %v2255
    %v4709 = vadd.f32 %v4707, 1e-05
    %v4710 = vadd.f32 %v4708, 1e-05
    %v4711 = vrsqrt.pop %v4709
    %v4712 = vrsqrt.pop %v4710
    %v4713 = vmul.f32 %v4697, %v4711
    %v4714 = vmul.f32 %v4698, %v4712
    %v4716 = vlaneseq
    %v4717 = vshrl.u32 %v4716, 7
    %v4718 = vsub.s32 0, %v4717
    %v4719 = vrot.slane %v4686, %v4718
    %v4721 = vmul.f32 %v4713, %v4719
    %v4722 = vmul.f32 %v4714, %v4719
    %v4724 = vlaneseq
    %v4725 = vshrl.u32 %v4724, 7
    %v4726 = vsub.s32 0, %v4725
    %v4727 = vrot.slane %v4688, %v4726
    %v4729 = vadd.f32 %v4721, %v4727
    %v4730 = vadd.f32 %v4722, %v4727
    %v4731 = vpack.c.bf16 %v4730, %v4729
    %s4732 = scalar_lea.vmem %s9, 16
    %v4733 = vld [vmem:[%s4732] sm:$0xf]
    %v4734 = vld [vmem:[%s4732 + $0x4] sm:$0xf]
    %v4735 = vld [vmem:[%s4732 + $0x8] sm:$0xf]
    %v4736 = vld [vmem:[%s4732 + $0xc] sm:$0xf]
    %s4737 = scalar_lea.vmem %s10, 1
    %v4738 = vld [vmem:[%s4737] sm:$0x1]
    %v4740 = vlaneseq
    %v4741 = vshrl.u32 %v4740, 7
    %v4742 = vsub.s32 0, %v4741
    %v4743 = vrot.slane %v4738, %v4742
    %v4749 = vunpack.c.l.b16 %v4733
    %v4750 = vunpack.c.l.b16 %v4734
    %v4751 = vunpack.c.l.b16 %v4735
    %v4752 = vunpack.c.l.b16 %v4736
    %v4753 = vpack.c.b16 %v4750, %v4749
    %v4754 = vpack.c.b16 %v4752, %v4751
    %v4758 = vsel %vm78, %v4731, 0
    %4760 = vmatprep.subr.bf16.mxu0 0
    %4761 = vmatpush1.bf16.msra.mxu0 %v4753
    %4762 = vmatprep.subr.bf16.mxu0 0
    %4763 = vmatpush1.bf16.msra.mxu0 %v4754
    %4764 = vmatprep.subr.bf16.mxu0 0
    %4765 = vmatpush1.bf16.msra.mxu0 0
    %4766 = vmatprep.subr.bf16.mxu0 0
    %4767 = vmatpush1.bf16.msra.mxu0 0
    %4768 = vmatprep.subr.bf16.mxu0 0
    %4769 = vmatpush1.bf16.msra.mxu0 0
    %4770 = vmatprep.subr.bf16.mxu0 0
    %4771 = vmatpush1.bf16.msra.mxu0 0
    %4772 = vmatprep.subr.bf16.mxu0 0
    %4773 = vmatpush1.bf16.msra.mxu0 0
    %4774 = vmatprep.subr.bf16.mxu0 0
    %4775 = vmatpush1.bf16.msra.mxu0 0
    %4776 = vmatprep.subr.bf16.mxu0 0
    %4777 = vmatpush1.bf16.msra.mxu0 0
    %4778 = vmatprep.subr.bf16.mxu0 0
    %4779 = vmatpush1.bf16.msra.mxu0 0
    %4780 = vmatprep.subr.bf16.mxu0 0
    %4781 = vmatpush1.bf16.msra.mxu0 0
    %4782 = vmatprep.subr.bf16.mxu0 0
    %4783 = vmatpush1.bf16.msra.mxu0 0
    %4784 = vmatprep.subr.bf16.mxu0 0
    %4785 = vmatpush1.bf16.msra.mxu0 0
    %4786 = vmatprep.subr.bf16.mxu0 0
    %4787 = vmatpush1.bf16.msra.mxu0 0
    %4788 = vmatprep.subr.bf16.mxu0 0
    %4789 = vmatpush1.bf16.msra.mxu0 0
    %4790 = vmatprep.subr.bf16.mxu0 0
    %4791 = vmatpush1.bf16.msra.mxu0 0
    %4792 = vmatprep.mubr.bf16.mxu0 0
    %4793 = vmatmul.mubr.bf16.gmra.mrb[0].mxu0 %v4758
    %v4794 = vpop.f32.mrb[0].mxu0
    %v4795 = vadd.f32 %v4743, %v4794
    %v4796 = vpop.f32.mrb[0].mxu0
    %v4797 = vpop.f32.mrb[0].mxu0
    %v4798 = vadd.f32 %v4743, %v4797
    %v4799 = vpop.f32.mrb[0].mxu0
    %4800 = vdwg.mxu0
    %v4801 = vmax.f32 %v4795, 0.0
    %v4802 = vmax.f32 %v4798, 0.0
    %v4803 = vpack.c.bf16 %v4802, %v4801
    %s4804 = scalar_lea.vmem %s11, 32
    %v4805 = vld [vmem:[%s4804] sm:$0xf]
    %v4806 = vld [vmem:[%s4804 + $0x4] sm:$0xf]
    %v4807 = vld [vmem:[%s4804 + $0x8] sm:$0xf]
    %v4808 = vld [vmem:[%s4804 + $0xc] sm:$0xf]
    %v4809 = vld [vmem:[%s4804 + $0x10] sm:$0xf]
    %v4810 = vld [vmem:[%s4804 + $0x14] sm:$0xf]
    %v4811 = vld [vmem:[%s4804 + $0x18] sm:$0xf]
    %v4812 = vld [vmem:[%s4804 + $0x1c] sm:$0xf]
    %s4813 = scalar_lea.vmem %s12, 1
    %v4814 = vld [vmem:[%s4813] sm:$0x1]
    %v4816 = vlaneseq
    %v4817 = vshrl.u32 %v4816, 7
    %v4818 = vsub.s32 0, %v4817
    %v4819 = vrot.slane %v4814, %v4818
    %v4829 = vunpack.c.l.b16 %v4805
    %v4830 = vunpack.c.l.b16 %v4806
    %v4831 = vunpack.c.l.b16 %v4807
    %v4832 = vunpack.c.l.b16 %v4808
    %v4833 = vunpack.c.l.b16 %v4809
    %v4834 = vunpack.c.l.b16 %v4810
    %v4835 = vunpack.c.l.b16 %v4811
    %v4836 = vunpack.c.l.b16 %v4812
    %v4837 = vpack.c.b16 %v4830, %v4829
    %v4838 = vpack.c.b16 %v4832, %v4831
    %v4839 = vpack.c.b16 %v4834, %v4833
    %v4840 = vpack.c.b16 %v4836, %v4835
    %v4846 = vsel %vm2402, %v4803, 0
    %4848 = vmatprep.subr.bf16.mxu0 0
    %4849 = vmatpush1.bf16.msra.mxu0 %v4837
    %4850 = vmatprep.subr.bf16.mxu0 0
    %4851 = vmatpush1.bf16.msra.mxu0 %v4838
    %4852 = vmatprep.subr.bf16.mxu0 0
    %4853 = vmatpush1.bf16.msra.mxu0 %v4839
    %4854 = vmatprep.subr.bf16.mxu0 0
    %4855 = vmatpush1.bf16.msra.mxu0 %v4840
    %4856 = vmatprep.subr.bf16.mxu0 0
    %4857 = vmatpush1.bf16.msra.mxu0 0
    %4858 = vmatprep.subr.bf16.mxu0 0
    %4859 = vmatpush1.bf16.msra.mxu0 0
    %4860 = vmatprep.subr.bf16.mxu0 0
    %4861 = vmatpush1.bf16.msra.mxu0 0
    %4862 = vmatprep.subr.bf16.mxu0 0
    %4863 = vmatpush1.bf16.msra.mxu0 0
    %4864 = vmatprep.subr.bf16.mxu0 0
    %4865 = vmatpush1.bf16.msra.mxu0 0
    %4866 = vmatprep.subr.bf16.mxu0 0
    %4867 = vmatpush1.bf16.msra.mxu0 0
    %4868 = vmatprep.subr.bf16.mxu0 0
    %4869 = vmatpush1.bf16.msra.mxu0 0
    %4870 = vmatprep.subr.bf16.mxu0 0
    %4871 = vmatpush1.bf16.msra.mxu0 0
    %4872 = vmatprep.subr.bf16.mxu0 0
    %4873 = vmatpush1.bf16.msra.mxu0 0
    %4874 = vmatprep.subr.bf16.mxu0 0
    %4875 = vmatpush1.bf16.msra.mxu0 0
    %4876 = vmatprep.subr.bf16.mxu0 0
    %4877 = vmatpush1.bf16.msra.mxu0 0
    %4878 = vmatprep.subr.bf16.mxu0 0
    %4879 = vmatpush1.bf16.msra.mxu0 0
    %4880 = vmatprep.mubr.bf16.mxu0 0
    %4881 = vmatmul.mubr.bf16.gmra.mrb[0].mxu0 %v4846
    %v4882 = vpop.f32.mrb[0].mxu0
    %v4883 = vadd.f32 %v4819, %v4882
    %v4884 = vpop.f32.mrb[0].mxu0
    %v4885 = vpop.f32.mrb[0].mxu0
    %v4886 = vadd.f32 %v4819, %v4885
    %v4887 = vpop.f32.mrb[0].mxu0
    %4888 = vdwg.mxu0
    %v4889 = vadd.f32 %v4729, %v4883
    %v4890 = vadd.f32 %v4730, %v4886
    %s4891 = scalar_lea.vmem %s7, 1
    %v4892 = vld [vmem:[%s4891] sm:$0x1]
    %s4893 = scalar_lea.vmem %s8, 1
    %v4894 = vld [vmem:[%s4893] sm:$0x1]
    %v4895 = vsel %vm78, %v4889, 0.0
    %4896 = vadd.xlane.f32.xlu0 %v4895
    %v4897 = vpop.xlane.xlu0 %4896
    %v4898 = vsel %vm78, %v4890, 0.0
    %4899 = vadd.xlane.f32.xlu0 %v4898
    %v4900 = vpop.xlane.xlu0 %4899
    %v4901 = vmul.f32 %v4897, %v2255
    %v4902 = vmul.f32 %v4900, %v2255
    %v4903 = vsub.f32 %v4889, %v4901
    %v4904 = vsub.f32 %v4890, %v4902
    %v4905 = vmul.f32 %v4903, %v4903
    %v4906 = vmul.f32 %v4904, %v4904
    %v4907 = vsel %vm78, %v4905, 0.0
    %4908 = vadd.xlane.f32.xlu0 %v4907
    %v4909 = vpop.xlane.xlu0 %4908
    %v4910 = vsel %vm78, %v4906, 0.0
    %4911 = vadd.xlane.f32.xlu0 %v4910
    %v4912 = vpop.xlane.xlu0 %4911
    %v4913 = vmul.f32 %v4909, %v2255
    %v4914 = vmul.f32 %v4912, %v2255
    %v4915 = vadd.f32 %v4913, 1e-05
    %v4916 = vadd.f32 %v4914, 1e-05
    %v4917 = vrsqrt.pop %v4915
    %v4918 = vrsqrt.pop %v4916
    %v4919 = vmul.f32 %v4903, %v4917
    %v4920 = vmul.f32 %v4904, %v4918
    %v4922 = vlaneseq
    %v4923 = vshrl.u32 %v4922, 7
    %v4924 = vsub.s32 0, %v4923
    %v4925 = vrot.slane %v4892, %v4924
    %v4927 = vmul.f32 %v4919, %v4925
    %v4928 = vmul.f32 %v4920, %v4925
    %v4930 = vlaneseq
    %v4931 = vshrl.u32 %v4930, 7
    %v4932 = vsub.s32 0, %v4931
    %v4933 = vrot.slane %v4894, %v4932
    %v4935 = vadd.f32 %v4927, %v4933
    %v4936 = vadd.f32 %v4928, %v4933
    %v4937 = vsel %vm78, %v4935, 0.0
    %v4938 = vrot.slane %v4937, 4
    %v4939 = vadd.f32 %v4937, %v4938
    %v4940 = vrot.slane %v4939, 2
    %v4941 = vadd.f32 %v4939, %v4940
    %v4942 = vrot.slane %v4941, 1
    %v4943 = vadd.f32 %v4941, %v4942
    %v4944 = vsel %vm78, %v4936, 0.0
    %v4945 = vrot.slane %v4944, 4
    %v4946 = vadd.f32 %v4944, %v4945
    %v4947 = vrot.slane %v4946, 2
    %v4948 = vadd.f32 %v4946, %v4947
    %v4949 = vrot.slane %v4948, 1
    %v4950 = vadd.f32 %v4948, %v4949
    %v4951 = vrcp.pop 8.0
    %v4952 = vmul.f32 %v4943, %v4951
    %v4953 = vmul.f32 %v4950, %v4951
    %v4954 = vpack.c.bf16 %v4952, %v4952
    %v4955 = vpack.c.bf16 %v4953, %v4953
    %v4956 = vld [vmem:[%s13] sm:$0xf]
    %v4957 = vld [vmem:[%s13 + $0x4] sm:$0xf]
    %v4958 = vld [vmem:[%s13 + $0x8] sm:$0xf]
    %v4959 = vld [vmem:[%s13 + $0xc] sm:$0xf]
    %v4960 = vld [vmem:[%s14] sm:$0x1]
    %v4962 = vlaneseq
    %v4963 = vshrl.u32 %v4962, 7
    %v4964 = vsub.s32 0, %v4963
    %v4965 = vrot.slane %v4960, %v4964
    %v4969 = vunpack.c.l.b16 %v4954
    %v4970 = vunpack.c.l.b16 %v4955
    %vm4971 = vcmask 1041409
    %v4972 = vsel %vm4971, %v4970, %v4969
    %v4973 = vpack.c.b16 %v4972, %v4972
    %v4978 = vunpack.c.l.b16 %v4956
    %v4979 = vunpack.c.l.b16 %v4957
    %v4980 = vunpack.c.l.b16 %v4958
    %v4981 = vunpack.c.l.b16 %v4959
    %v4982 = vpack.c.b16 %v4979, %v4978
    %v4983 = vpack.c.b16 %v4981, %v4980
    %v4987 = vsel %vm78, %v4973, 0
    %4989 = vmatprep.subr.bf16.mxu0 0
    %4990 = vmatpush1.bf16.msra.mxu0 %v4982
    %4991 = vmatprep.subr.bf16.mxu0 0
    %4992 = vmatpush1.bf16.msra.mxu0 %v4983
    %4993 = vmatprep.subr.bf16.mxu0 0
    %4994 = vmatpush1.bf16.msra.mxu0 0
    %4995 = vmatprep.subr.bf16.mxu0 0
    %4996 = vmatpush1.bf16.msra.mxu0 0
    %4997 = vmatprep.subr.bf16.mxu0 0
    %4998 = vmatpush1.bf16.msra.mxu0 0
    %4999 = vmatprep.subr.bf16.mxu0 0
    %5000 = vmatpush1.bf16.msra.mxu0 0
    %5001 = vmatprep.subr.bf16.mxu0 0
    %5002 = vmatpush1.bf16.msra.mxu0 0
    %5003 = vmatprep.subr.bf16.mxu0 0
    %5004 = vmatpush1.bf16.msra.mxu0 0
    %5005 = vmatprep.subr.bf16.mxu0 0
    %5006 = vmatpush1.bf16.msra.mxu0 0
    %5007 = vmatprep.subr.bf16.mxu0 0
    %5008 = vmatpush1.bf16.msra.mxu0 0
    %5009 = vmatprep.subr.bf16.mxu0 0
    %5010 = vmatpush1.bf16.msra.mxu0 0
    %5011 = vmatprep.subr.bf16.mxu0 0
    %5012 = vmatpush1.bf16.msra.mxu0 0
    %5013 = vmatprep.subr.bf16.mxu0 0
    %5014 = vmatpush1.bf16.msra.mxu0 0
    %5015 = vmatprep.subr.bf16.mxu0 0
    %5016 = vmatpush1.bf16.msra.mxu0 0
    %5017 = vmatprep.subr.bf16.mxu0 0
    %5018 = vmatpush1.bf16.msra.mxu0 0
    %5019 = vmatprep.subr.bf16.mxu0 0
    %5020 = vmatpush1.bf16.msra.mxu0 0
    %5021 = vmatprep.mubr.bf16.mxu0 0
    %5022 = vmatmul.mubr.bf16.gmra.mrb[0].mxu0 %v4987
    %v5023 = vpop.f32.mrb[0].mxu0
    %v5024 = vadd.f32 %v4965, %v5023
    %v5025 = vpop.f32.mrb[0].mxu0
    %v5026 = vpop.f32.mrb[0].mxu0
    %v5027 = vpop.f32.mrb[0].mxu0
    %5028 = vdwg.mxu0
    %5029 = vst [vmem:[#allocation2] sm:$0x3] %v5024
    // Predicated region
    $region62: #{forward.1} parent=1 // pred_check
      _
    $region63: #{forward.1} parent=1 // pred_check_branch
      %5031 = sbr.rel (0) target = $region65
    $region64: #{forward.1} parent=1 // pred_region
      %s5033 = ssub.s32 32, 32
      %5034 = vsyncadd [#allocation3], %s5033
      %s5036 = sshll.u32 [#allocation2], 4
      %s5037 = int_to_ptr.vmem [resolvable:$true] %s5036
      %5039 = dma.vmem_to_hbm [thread:$0]  %s5037, 32, %s15, [#allocation3]
    $region65: #{forward.1} parent=1 // pred_fallthru
      _
    // Predicated region
    $region66: #{forward.1} parent=1 // pred_check
      _
    $region67: #{forward.1} parent=1 // pred_check_branch
      %5041 = sbr.rel (0) target = $region69
    $region68: #{forward.1} parent=1 // pred_region
      %5042 = dma.done [#allocation3], 32
    $region69: #{forward.1} parent=1 // pred_fallthru
      _
    %5043 = vsyncpa [#allocation3], 1

</llo_original>
